<compile_context>
chip_gen: v7x
topology: tpu7x:2x2x1
jax: 0.10.0
libtpu: 0.0.40
codegen_flags: <defaults>
</compile_context>

<pallas_src>
import functools

import jax
import jax.numpy as jnp
from jax.experimental import pallas as pl
from jax.experimental.pallas import tpu as pltpu


def _pick_batch_tile(batch, seq, d_model, *, target_rows=256):
    """Largest useful number of batch elements folded into one grid step.

    Targets >= `target_rows` MXU rows per step (256 fills v6e/v7x M; >128 fills v5e),
    while capping the f32 activation tiles (k, v, q, out; double-buffered) to ~8 MiB.
    """
    max_rows = max(seq, (8 * 1024 * 1024) // (8 * 4 * d_model))
    divisors = [d for d in range(1, batch + 1) if batch % d == 0]
    fitting = [d for d in divisors if d * seq <= max_rows] or [1]
    for d in fitting:
        if d * seq >= target_rows:
            return d
    return fitting[-1]


@functools.lru_cache(maxsize=None)
def _vmem_limit_bytes():
    """Generation-aware VMEM budget: ~70% of physical per-core VMEM."""
    try:
        cap = pltpu.get_tpu_info().vmem_capacity_bytes
    except Exception:
        cap = 64 * 1024 * 1024  # conservative fallback (v7x per-core VMEM)
    return int(cap * 0.7)


def _mha_kernel(k_ref, v_ref, q_ref,
                wqkv_ref, bqkv_ref, wo_ref, bo_ref,
                gamma_ref, beta_ref, out_ref, *, num_heads, eps):
    bt, S, D = q_ref.shape
    dh = D // num_heads
    rows = bt * S
    cdt = wqkv_ref.dtype  # bf16 MXU operand dtype; f32 accumulation via preferred_element_type

    # Flatten (bt, S, D) -> (bt*S, D): leading-dim collapse, no relayout. The three
    # projections then run as single matmuls with M = bt*S rows on the MXU.
    k_in = k_ref[...].reshape(rows, D)
    v_in = v_ref[...].reshape(rows, D)
    q_in = q_ref[...].reshape(rows, D)

    K = jnp.dot(k_in.astype(cdt), wqkv_ref[0], preferred_element_type=jnp.float32) + bqkv_ref[0]
    V = jnp.dot(v_in.astype(cdt), wqkv_ref[1], preferred_element_type=jnp.float32) + bqkv_ref[1]
    Q = jnp.dot(q_in.astype(cdt), wqkv_ref[2], preferred_element_type=jnp.float32) + bqkv_ref[2]
    # (1/sqrt(dh) is pre-folded into Wq/bq at prep time -> no per-score/per-Q scaling.)

    Kc = K.astype(cdt)
    Vc = V.astype(cdt)
    Qc = Q.astype(cdt)

    # Per-(batch, head) attention on lane-aligned slices (dh multiple of 128 -> free
    # views; no (S, H, dh) reshape, so no XLU transposes/relayouts). Statically
    # unrolled: bt and num_heads are small compile-time constants.
    ctx_rows = []
    for b in range(bt):
        r0 = b * S
        head_ctx = []
        for h in range(num_heads):
            c0 = h * dh
            Qh = Qc[r0:r0 + S, c0:c0 + dh]
            Kh = Kc[r0:r0 + S, c0:c0 + dh]
            Vh = Vc[r0:r0 + S, c0:c0 + dh]

            # scores (S, S): contract the last dims of Q and K, f32 on the MXU.
            s = jax.lax.dot_general(Qh, Kh, (((1,), (1,)), ((), ())),
                                    preferred_element_type=jnp.float32)
            # TODO(synk): attn_mask masked_fill would go here (guard denom -> 0 case).
            s = s - jnp.max(s, axis=-1, keepdims=True)
            p = jnp.exp(s)
            den = jnp.sum(p, axis=-1, keepdims=True)
            inv = pl.reciprocal(den, approx=True)   # EUP slot
            inv = inv * (2.0 - den * inv)           # one Newton step -> ~f32 accuracy
            p = p * inv

            head_ctx.append(jnp.dot(p.astype(cdt), Vh,
                                    preferred_element_type=jnp.float32))
        # Lane-dim concat of 128-aligned chunks: vreg placement, no relayout.
        ctx_rows.append(jnp.concatenate(head_ctx, axis=-1) if num_heads > 1
                        else head_ctx[0])
    context = jnp.concatenate(ctx_rows, axis=0) if bt > 1 else ctx_rows[0]

    # Output projection as one M = bt*S matmul, then residual + LayerNorm (f32 stats,
    # biased variance, matching nn.LayerNorm).
    proj = jnp.dot(context.astype(cdt), wo_ref[...],
                   preferred_element_type=jnp.float32) + bo_ref[...]
    y = q_in.astype(jnp.float32) + proj
    mean = jnp.mean(y, axis=-1, keepdims=True)
    var = jnp.mean((y - mean) ** 2, axis=-1, keepdims=True)
    y_hat = (y - mean) * jax.lax.rsqrt(var + eps)
    out = y_hat * gamma_ref[...] + beta_ref[...]
    out_ref[...] = out.astype(out_ref.dtype).reshape(bt, S, D)


def prepare_params(params, *, num_heads):
    """One-time packing of module parameters into kernel operand form.

    Call ONCE at init (outside the jitted forward): stacks K/V/Q weights & biases,
    folds the 1/sqrt(dh) attention scale into Wq/bq, and casts the MXU weight
    operands to bf16 (biases / LayerNorm affine stay f32).
    """
    d_model = params["wq"].shape[0]
    scale = (d_model // num_heads) ** -0.5
    wqkv = jnp.stack([params["wk"], params["wv"], params["wq"] * scale])   # (3, D, D)
    bqkv = jnp.stack([params["bk"], params["bv"], params["bq"] * scale])   # (3, 1, D)
    return dict(
        wqkv=wqkv.astype(jnp.bfloat16),
        bqkv=bqkv.astype(jnp.float32),
        wo=params["wo"].astype(jnp.bfloat16),
        bo=params["bo"].astype(jnp.float32),
        gamma=params["gamma"].astype(jnp.float32),
        beta=params["beta"].astype(jnp.float32),
    )


@functools.partial(jax.jit, static_argnames=("num_heads", "eps"))
def multi_head_attention(keys, values, queries, prepped, *, num_heads, eps=1e-5):
    """keys/values/queries: (B, S, D); prepped = prepare_params(...). Returns (B, S, D)."""
    B, S, D = keys.shape
    bt = _pick_batch_tile(B, S, D)
    grid = (B // bt,)

    seq_spec = pl.BlockSpec((bt, S, D), lambda i: (i, 0, 0))
    const2 = lambda i: (0, 0)
    const3 = lambda i: (0, 0, 0)
    kernel = functools.partial(_mha_kernel, num_heads=num_heads, eps=eps)

    return pl.pallas_call(
        kernel,
        out_shape=jax.ShapeDtypeStruct((B, S, D), queries.dtype),
        grid_spec=pltpu.PrefetchScalarGridSpec(
            num_scalar_prefetch=0,
            grid=grid,
            in_specs=[
                seq_spec, seq_spec, seq_spec,          # keys, values, queries
                pl.BlockSpec((3, D, D), const3),       # Wk|Wv|Wq stacked (bf16)
                pl.BlockSpec((3, 1, D), const3),       # bk|bv|bq stacked (f32)
                pl.BlockSpec((D, D), const2),          # Wo (bf16)
                pl.BlockSpec((1, D), const2),          # bo
                pl.BlockSpec((1, D), const2),          # gamma
                pl.BlockSpec((1, D), const2),          # beta
            ],
            out_specs=seq_spec,
        ),
        compiler_params=pltpu.CompilerParams(
            dimension_semantics=("parallel",),
            vmem_limit_bytes=_vmem_limit_bytes(),
        ),
    )(keys, values, queries,
      prepped["wqkv"], prepped["bqkv"], prepped["wo"], prepped["bo"],
      prepped["gamma"], prepped["beta"])


def init_params(key, d_model):
    """Deterministic synthetic parameters. Weights stored as [in, out]."""
    ks = jax.random.split(key, 8)
    scale = 1.0 / jnp.sqrt(d_model)

    def w(k):
        return jax.random.uniform(k, (d_model, d_model), jnp.float32, -scale, scale)

    def b(k):
        return jax.random.uniform(k, (1, d_model), jnp.float32, -scale, scale)

    return dict(
        wk=w(ks[0]), bk=b(ks[1]),
        wv=w(ks[2]), bv=b(ks[3]),
        wq=w(ks[4]), bq=b(ks[5]),
        wo=w(ks[6]), bo=b(ks[7]),
        gamma=jnp.ones((1, d_model), jnp.float32),
        beta=jnp.zeros((1, d_model), jnp.float32),
    )


def _reference(keys, values, queries, p, num_heads, eps=1e-5):
    """Pure-JAX f32 reference mirroring the PyTorch forward (dropout=0, no mask)."""
    B, S, D = keys.shape
    dh = D // num_heads
    residual = queries
    K = keys @ p["wk"] + p["bk"]
    V = values @ p["wv"] + p["bv"]
    Q = queries @ p["wq"] + p["bq"]

    def heads(x):
        return x.reshape(B, S, num_heads, dh).transpose(0, 2, 1, 3)  # (B,H,S,dh)

    Q, K, V = heads(Q), heads(K), heads(V)
    scores = jnp.einsum("bhqd,bhkd->bhqk", Q, K) * (dh ** -0.5)
    probs = jax.nn.softmax(scores, axis=-1)
    ctx = jnp.einsum("bhqk,bhkd->bhqd", probs, V)
    ctx = ctx.transpose(0, 2, 1, 3).reshape(B, S, D)
    y = residual + (ctx @ p["wo"] + p["bo"])
    mean = jnp.mean(y, -1, keepdims=True)
    var = jnp.mean((y - mean) ** 2, -1, keepdims=True)
    return (y - mean) / jnp.sqrt(var + eps) * p["gamma"] + p["beta"]


if __name__ == "__main__":
    # Small, lane-dense shapes: batch=2, seq=16, d_model=512 (module default), 4 heads
    # (dim_per_head=128 -> lane-aligned head slices, power-of-two 1/sqrt(dh) scale).
    B, S, D, H = 2, 16, 512, 4
    key = jax.random.PRNGKey(0)
    k_par, k_k, k_v, k_q = jax.random.split(key, 4)

    params = init_params(k_par, D)
    prepped = prepare_params(params, num_heads=H)   # one-time packing, outside the jit'd call

    keys_x = jax.random.normal(k_k, (B, S, D), jnp.float32)
    values_x = jax.random.normal(k_v, (B, S, D), jnp.float32)
    queries_x = jax.random.normal(k_q, (B, S, D), jnp.float32)

    out = multi_head_attention(keys_x, values_x, queries_x, prepped, num_heads=H)
    out = jax.block_until_ready(out)

    ref = _reference(keys_x, values_x, queries_x, params, H)
    assert out.shape == (B, S, D)
    # bf16 MXU operands (f32 accumulation / statistics): tolerance loosened vs the
    # pure-f32 reference; LN output is ~unit-scale so atol dominates.
    assert jnp.allclose(out, ref, atol=4e-2, rtol=1e-2), "mismatch vs reference"

    print("KERNEL_OK")
</pallas_src>

<mosaic_0001>
module attributes {stable_mosaic.version = 11 : i64} {
  func.func @_mha_kernel(%arg0: i32, %arg1: memref<2x16x512xf32, #tpu.memory_space<vmem>>, %arg2: memref<2x16x512xf32, #tpu.memory_space<vmem>>, %arg3: memref<2x16x512xf32, #tpu.memory_space<vmem>>, %arg4: memref<3x512x512xbf16, #tpu.memory_space<vmem>>, %arg5: memref<3x1x512xf32, #tpu.memory_space<vmem>>, %arg6: memref<512x512xbf16, #tpu.memory_space<vmem>>, %arg7: memref<1x512xf32, #tpu.memory_space<vmem>>, %arg8: memref<1x512xf32, #tpu.memory_space<vmem>>, %arg9: memref<1x512xf32, #tpu.memory_space<vmem>>, %arg10: memref<2x16x512xf32, #tpu.memory_space<vmem>>) attributes {dimension_semantics = [#tpu.dimension_semantics<parallel>], iteration_bounds = array<i64: 1>, scalar_prefetch = 0 : i64, scratch_operands = 0 : i64, tpu.core_type = #tpu.core_type<tc>, window_params = [{transform_indices = @transform_0, window_bounds = array<i64: 2, 16, 512>}, {transform_indices = @transform_1, window_bounds = array<i64: 2, 16, 512>}, {transform_indices = @transform_2, window_bounds = array<i64: 2, 16, 512>}, {pipeline_mode = #tpu.pipeline_mode<synchronous>, transform_indices = @transform_3, window_bounds = array<i64: 3, 512, 512>}, {pipeline_mode = #tpu.pipeline_mode<synchronous>, transform_indices = @transform_4, window_bounds = array<i64: 3, 1, 512>}, {pipeline_mode = #tpu.pipeline_mode<synchronous>, transform_indices = @transform_5, window_bounds = array<i64: 512, 512>}, {pipeline_mode = #tpu.pipeline_mode<synchronous>, transform_indices = @transform_6, window_bounds = array<i64: 1, 512>}, {pipeline_mode = #tpu.pipeline_mode<synchronous>, transform_indices = @transform_7, window_bounds = array<i64: 1, 512>}, {pipeline_mode = #tpu.pipeline_mode<synchronous>, transform_indices = @transform_8, window_bounds = array<i64: 1, 512>}, {transform_indices = @transform_9, window_bounds = array<i64: 2, 16, 512>}]} {
    %c0 = arith.constant 0 : index
    %c0_0 = arith.constant 0 : index
    %c0_1 = arith.constant 0 : index
    %0 = vector.load %arg1[%c0, %c0_0, %c0_1] : memref<2x16x512xf32, #tpu.memory_space<vmem>>, vector<2x16x512xf32>
    %1 = vector.shape_cast %0 : vector<2x16x512xf32> to vector<32x512xf32>
    %c0_2 = arith.constant 0 : index
    %c0_3 = arith.constant 0 : index
    %c0_4 = arith.constant 0 : index
    %2 = vector.load %arg2[%c0_2, %c0_3, %c0_4] : memref<2x16x512xf32, #tpu.memory_space<vmem>>, vector<2x16x512xf32>
    %3 = vector.shape_cast %2 : vector<2x16x512xf32> to vector<32x512xf32>
    %c0_5 = arith.constant 0 : index
    %c0_6 = arith.constant 0 : index
    %c0_7 = arith.constant 0 : index
    %4 = vector.load %arg3[%c0_5, %c0_6, %c0_7] : memref<2x16x512xf32, #tpu.memory_space<vmem>>, vector<2x16x512xf32>
    %5 = vector.shape_cast %4 : vector<2x16x512xf32> to vector<32x512xf32>
    %6 = arith.truncf %1 : vector<32x512xf32> to vector<32x512xbf16>
    %c0_8 = arith.constant 0 : index
    %c0_9 = arith.constant 0 : index
    %c0_10 = arith.constant 0 : index
    %7 = vector.load %arg4[%c0_8, %c0_9, %c0_10] : memref<3x512x512xbf16, #tpu.memory_space<vmem>>, vector<1x512x512xbf16>
    %8 = vector.shape_cast %7 : vector<1x512x512xbf16> to vector<512x512xbf16>
    %cst = arith.constant dense<0.000000e+00> : vector<32x512xf32>
    %9 = tpu.matmul %6, %8, %cst {dimension_numbers = #tpu.dot_dimension_numbers<[1], [0], [0], [1], [0, 0, 1, 1], [], []>} : vector<32x512xbf16>, vector<512x512xbf16>, vector<32x512xf32> -> vector<32x512xf32>
    %c0_11 = arith.constant 0 : index
    %c0_12 = arith.constant 0 : index
    %c0_13 = arith.constant 0 : index
    %10 = vector.load %arg5[%c0_11, %c0_12, %c0_13] : memref<3x1x512xf32, #tpu.memory_space<vmem>>, vector<1x1x512xf32>
    %11 = vector.shape_cast %10 : vector<1x1x512xf32> to vector<1x512xf32>
    %12 = vector.broadcast %11 : vector<1x512xf32> to vector<32x512xf32>
    %13 = arith.addf %9, %12 : vector<32x512xf32>
    %14 = arith.truncf %3 : vector<32x512xf32> to vector<32x512xbf16>
    %c1 = arith.constant 1 : index
    %c0_14 = arith.constant 0 : index
    %c0_15 = arith.constant 0 : index
    %15 = vector.load %arg4[%c1, %c0_14, %c0_15] : memref<3x512x512xbf16, #tpu.memory_space<vmem>>, vector<1x512x512xbf16>
    %16 = vector.shape_cast %15 : vector<1x512x512xbf16> to vector<512x512xbf16>
    %cst_16 = arith.constant dense<0.000000e+00> : vector<32x512xf32>
    %17 = tpu.matmul %14, %16, %cst_16 {dimension_numbers = #tpu.dot_dimension_numbers<[1], [0], [0], [1], [0, 0, 1, 1], [], []>} : vector<32x512xbf16>, vector<512x512xbf16>, vector<32x512xf32> -> vector<32x512xf32>
    %c1_17 = arith.constant 1 : index
    %c0_18 = arith.constant 0 : index
    %c0_19 = arith.constant 0 : index
    %18 = vector.load %arg5[%c1_17, %c0_18, %c0_19] : memref<3x1x512xf32, #tpu.memory_space<vmem>>, vector<1x1x512xf32>
    %19 = vector.shape_cast %18 : vector<1x1x512xf32> to vector<1x512xf32>
    %20 = vector.broadcast %19 : vector<1x512xf32> to vector<32x512xf32>
    %21 = arith.addf %17, %20 : vector<32x512xf32>
    %22 = arith.truncf %5 : vector<32x512xf32> to vector<32x512xbf16>
    %c2 = arith.constant 2 : index
    %c0_20 = arith.constant 0 : index
    %c0_21 = arith.constant 0 : index
    %23 = vector.load %arg4[%c2, %c0_20, %c0_21] : memref<3x512x512xbf16, #tpu.memory_space<vmem>>, vector<1x512x512xbf16>
    %24 = vector.shape_cast %23 : vector<1x512x512xbf16> to vector<512x512xbf16>
    %cst_22 = arith.constant dense<0.000000e+00> : vector<32x512xf32>
    %25 = tpu.matmul %22, %24, %cst_22 {dimension_numbers = #tpu.dot_dimension_numbers<[1], [0], [0], [1], [0, 0, 1, 1], [], []>} : vector<32x512xbf16>, vector<512x512xbf16>, vector<32x512xf32> -> vector<32x512xf32>
    %c2_23 = arith.constant 2 : index
    %c0_24 = arith.constant 0 : index
    %c0_25 = arith.constant 0 : index
    %26 = vector.load %arg5[%c2_23, %c0_24, %c0_25] : memref<3x1x512xf32, #tpu.memory_space<vmem>>, vector<1x1x512xf32>
    %27 = vector.shape_cast %26 : vector<1x1x512xf32> to vector<1x512xf32>
    %28 = vector.broadcast %27 : vector<1x512xf32> to vector<32x512xf32>
    %29 = arith.addf %25, %28 : vector<32x512xf32>
    %30 = arith.truncf %13 : vector<32x512xf32> to vector<32x512xbf16>
    %31 = arith.truncf %21 : vector<32x512xf32> to vector<32x512xbf16>
    %32 = arith.truncf %29 : vector<32x512xf32> to vector<32x512xbf16>
    %33 = vector.extract_strided_slice %32 {offsets = [0, 0], sizes = [16, 128], strides = [1, 1]} : vector<32x512xbf16> to vector<16x128xbf16>
    %34 = vector.extract_strided_slice %30 {offsets = [0, 0], sizes = [16, 128], strides = [1, 1]} : vector<32x512xbf16> to vector<16x128xbf16>
    %35 = vector.extract_strided_slice %31 {offsets = [0, 0], sizes = [16, 128], strides = [1, 1]} : vector<32x512xbf16> to vector<16x128xbf16>
    %cst_26 = arith.constant dense<0.000000e+00> : vector<16x16xf32>
    %36 = tpu.matmul %33, %34, %cst_26 {dimension_numbers = #tpu.dot_dimension_numbers<[1], [1], [0], [0], [0, 0, 1, 0], [], []>} : vector<16x128xbf16>, vector<16x128xbf16>, vector<16x16xf32> -> vector<16x16xf32>
    %cst_27 = arith.constant dense<0xFF800000> : vector<16xf32>
    %37 = vector.multi_reduction <maximumf>, %36, %cst_27 [1] : vector<16x16xf32> to vector<16xf32>
    %38 = vector.shape_cast %37 : vector<16xf32> to vector<16x1xf32>
    %39 = vector.broadcast %38 : vector<16x1xf32> to vector<16x16xf32>
    %40 = arith.subf %36, %39 : vector<16x16xf32>
    %41 = math.exp %40 : vector<16x16xf32>
    %cst_28 = arith.constant dense<0.000000e+00> : vector<16xf32>
    %42 = vector.multi_reduction <add>, %41, %cst_28 [1] : vector<16x16xf32> to vector<16xf32>
    %43 = vector.shape_cast %42 : vector<16xf32> to vector<16x1xf32>
    %44 = tpu.reciprocal %43 {approx = true} : vector<16x1xf32> -> vector<16x1xf32>
    %45 = arith.mulf %43, %44 : vector<16x1xf32>
    %cst_29 = arith.constant 2.000000e+00 : f32
    %46 = vector.broadcast %cst_29 : f32 to vector<16x1xf32>
    %47 = arith.subf %46, %45 : vector<16x1xf32>
    %48 = arith.mulf %44, %47 : vector<16x1xf32>
    %49 = vector.broadcast %48 : vector<16x1xf32> to vector<16x16xf32>
    %50 = arith.mulf %41, %49 : vector<16x16xf32>
    %51 = arith.truncf %50 : vector<16x16xf32> to vector<16x16xbf16>
    %cst_30 = arith.constant dense<0.000000e+00> : vector<16x128xf32>
    %52 = tpu.matmul %51, %35, %cst_30 {dimension_numbers = #tpu.dot_dimension_numbers<[1], [0], [0], [1], [0, 0, 1, 1], [], []>} : vector<16x16xbf16>, vector<16x128xbf16>, vector<16x128xf32> -> vector<16x128xf32>
    %53 = vector.extract_strided_slice %32 {offsets = [0, 128], sizes = [16, 128], strides = [1, 1]} : vector<32x512xbf16> to vector<16x128xbf16>
    %54 = vector.extract_strided_slice %30 {offsets = [0, 128], sizes = [16, 128], strides = [1, 1]} : vector<32x512xbf16> to vector<16x128xbf16>
    %55 = vector.extract_strided_slice %31 {offsets = [0, 128], sizes = [16, 128], strides = [1, 1]} : vector<32x512xbf16> to vector<16x128xbf16>
    %cst_31 = arith.constant dense<0.000000e+00> : vector<16x16xf32>
    %56 = tpu.matmul %53, %54, %cst_31 {dimension_numbers = #tpu.dot_dimension_numbers<[1], [1], [0], [0], [0, 0, 1, 0], [], []>} : vector<16x128xbf16>, vector<16x128xbf16>, vector<16x16xf32> -> vector<16x16xf32>
    %cst_32 = arith.constant dense<0xFF800000> : vector<16xf32>
    %57 = vector.multi_reduction <maximumf>, %56, %cst_32 [1] : vector<16x16xf32> to vector<16xf32>
    %58 = vector.shape_cast %57 : vector<16xf32> to vector<16x1xf32>
    %59 = vector.broadcast %58 : vector<16x1xf32> to vector<16x16xf32>
    %60 = arith.subf %56, %59 : vector<16x16xf32>
    %61 = math.exp %60 : vector<16x16xf32>
    %cst_33 = arith.constant dense<0.000000e+00> : vector<16xf32>
    %62 = vector.multi_reduction <add>, %61, %cst_33 [1] : vector<16x16xf32> to vector<16xf32>
    %63 = vector.shape_cast %62 : vector<16xf32> to vector<16x1xf32>
    %64 = tpu.reciprocal %63 {approx = true} : vector<16x1xf32> -> vector<16x1xf32>
    %65 = arith.mulf %63, %64 : vector<16x1xf32>
    %cst_34 = arith.constant 2.000000e+00 : f32
    %66 = vector.broadcast %cst_34 : f32 to vector<16x1xf32>
    %67 = arith.subf %66, %65 : vector<16x1xf32>
    %68 = arith.mulf %64, %67 : vector<16x1xf32>
    %69 = vector.broadcast %68 : vector<16x1xf32> to vector<16x16xf32>
    %70 = arith.mulf %61, %69 : vector<16x16xf32>
    %71 = arith.truncf %70 : vector<16x16xf32> to vector<16x16xbf16>
    %cst_35 = arith.constant dense<0.000000e+00> : vector<16x128xf32>
    %72 = tpu.matmul %71, %55, %cst_35 {dimension_numbers = #tpu.dot_dimension_numbers<[1], [0], [0], [1], [0, 0, 1, 1], [], []>} : vector<16x16xbf16>, vector<16x128xbf16>, vector<16x128xf32> -> vector<16x128xf32>
    %73 = vector.extract_strided_slice %32 {offsets = [0, 256], sizes = [16, 128], strides = [1, 1]} : vector<32x512xbf16> to vector<16x128xbf16>
    %74 = vector.extract_strided_slice %30 {offsets = [0, 256], sizes = [16, 128], strides = [1, 1]} : vector<32x512xbf16> to vector<16x128xbf16>
    %75 = vector.extract_strided_slice %31 {offsets = [0, 256], sizes = [16, 128], strides = [1, 1]} : vector<32x512xbf16> to vector<16x128xbf16>
    %cst_36 = arith.constant dense<0.000000e+00> : vector<16x16xf32>
    %76 = tpu.matmul %73, %74, %cst_36 {dimension_numbers = #tpu.dot_dimension_numbers<[1], [1], [0], [0], [0, 0, 1, 0], [], []>} : vector<16x128xbf16>, vector<16x128xbf16>, vector<16x16xf32> -> vector<16x16xf32>
    %cst_37 = arith.constant dense<0xFF800000> : vector<16xf32>
    %77 = vector.multi_reduction <maximumf>, %76, %cst_37 [1] : vector<16x16xf32> to vector<16xf32>
    %78 = vector.shape_cast %77 : vector<16xf32> to vector<16x1xf32>
    %79 = vector.broadcast %78 : vector<16x1xf32> to vector<16x16xf32>
    %80 = arith.subf %76, %79 : vector<16x16xf32>
    %81 = math.exp %80 : vector<16x16xf32>
    %cst_38 = arith.constant dense<0.000000e+00> : vector<16xf32>
    %82 = vector.multi_reduction <add>, %81, %cst_38 [1] : vector<16x16xf32> to vector<16xf32>
    %83 = vector.shape_cast %82 : vector<16xf32> to vector<16x1xf32>
    %84 = tpu.reciprocal %83 {approx = true} : vector<16x1xf32> -> vector<16x1xf32>
    %85 = arith.mulf %83, %84 : vector<16x1xf32>
    %cst_39 = arith.constant 2.000000e+00 : f32
    %86 = vector.broadcast %cst_39 : f32 to vector<16x1xf32>
    %87 = arith.subf %86, %85 : vector<16x1xf32>
    %88 = arith.mulf %84, %87 : vector<16x1xf32>
    %89 = vector.broadcast %88 : vector<16x1xf32> to vector<16x16xf32>
    %90 = arith.mulf %81, %89 : vector<16x16xf32>
    %91 = arith.truncf %90 : vector<16x16xf32> to vector<16x16xbf16>
    %cst_40 = arith.constant dense<0.000000e+00> : vector<16x128xf32>
    %92 = tpu.matmul %91, %75, %cst_40 {dimension_numbers = #tpu.dot_dimension_numbers<[1], [0], [0], [1], [0, 0, 1, 1], [], []>} : vector<16x16xbf16>, vector<16x128xbf16>, vector<16x128xf32> -> vector<16x128xf32>
    %93 = vector.extract_strided_slice %32 {offsets = [0, 384], sizes = [16, 128], strides = [1, 1]} : vector<32x512xbf16> to vector<16x128xbf16>
    %94 = vector.extract_strided_slice %30 {offsets = [0, 384], sizes = [16, 128], strides = [1, 1]} : vector<32x512xbf16> to vector<16x128xbf16>
    %95 = vector.extract_strided_slice %31 {offsets = [0, 384], sizes = [16, 128], strides = [1, 1]} : vector<32x512xbf16> to vector<16x128xbf16>
    %cst_41 = arith.constant dense<0.000000e+00> : vector<16x16xf32>
    %96 = tpu.matmul %93, %94, %cst_41 {dimension_numbers = #tpu.dot_dimension_numbers<[1], [1], [0], [0], [0, 0, 1, 0], [], []>} : vector<16x128xbf16>, vector<16x128xbf16>, vector<16x16xf32> -> vector<16x16xf32>
    %cst_42 = arith.constant dense<0xFF800000> : vector<16xf32>
    %97 = vector.multi_reduction <maximumf>, %96, %cst_42 [1] : vector<16x16xf32> to vector<16xf32>
    %98 = vector.shape_cast %97 : vector<16xf32> to vector<16x1xf32>
    %99 = vector.broadcast %98 : vector<16x1xf32> to vector<16x16xf32>
    %100 = arith.subf %96, %99 : vector<16x16xf32>
    %101 = math.exp %100 : vector<16x16xf32>
    %cst_43 = arith.constant dense<0.000000e+00> : vector<16xf32>
    %102 = vector.multi_reduction <add>, %101, %cst_43 [1] : vector<16x16xf32> to vector<16xf32>
    %103 = vector.shape_cast %102 : vector<16xf32> to vector<16x1xf32>
    %104 = tpu.reciprocal %103 {approx = true} : vector<16x1xf32> -> vector<16x1xf32>
    %105 = arith.mulf %103, %104 : vector<16x1xf32>
    %cst_44 = arith.constant 2.000000e+00 : f32
    %106 = vector.broadcast %cst_44 : f32 to vector<16x1xf32>
    %107 = arith.subf %106, %105 : vector<16x1xf32>
    %108 = arith.mulf %104, %107 : vector<16x1xf32>
    %109 = vector.broadcast %108 : vector<16x1xf32> to vector<16x16xf32>
    %110 = arith.mulf %101, %109 : vector<16x16xf32>
    %111 = arith.truncf %110 : vector<16x16xf32> to vector<16x16xbf16>
    %cst_45 = arith.constant dense<0.000000e+00> : vector<16x128xf32>
    %112 = tpu.matmul %111, %95, %cst_45 {dimension_numbers = #tpu.dot_dimension_numbers<[1], [0], [0], [1], [0, 0, 1, 1], [], []>} : vector<16x16xbf16>, vector<16x128xbf16>, vector<16x128xf32> -> vector<16x128xf32>
    %113 = tpu.concatenate %52, %72, %92, %112 in 1 : vector<16x128xf32>, vector<16x128xf32>, vector<16x128xf32>, vector<16x128xf32> -> vector<16x512xf32>
    %114 = vector.extract_strided_slice %32 {offsets = [16, 0], sizes = [16, 128], strides = [1, 1]} : vector<32x512xbf16> to vector<16x128xbf16>
    %115 = vector.extract_strided_slice %30 {offsets = [16, 0], sizes = [16, 128], strides = [1, 1]} : vector<32x512xbf16> to vector<16x128xbf16>
    %116 = vector.extract_strided_slice %31 {offsets = [16, 0], sizes = [16, 128], strides = [1, 1]} : vector<32x512xbf16> to vector<16x128xbf16>
    %cst_46 = arith.constant dense<0.000000e+00> : vector<16x16xf32>
    %117 = tpu.matmul %114, %115, %cst_46 {dimension_numbers = #tpu.dot_dimension_numbers<[1], [1], [0], [0], [0, 0, 1, 0], [], []>} : vector<16x128xbf16>, vector<16x128xbf16>, vector<16x16xf32> -> vector<16x16xf32>
    %cst_47 = arith.constant dense<0xFF800000> : vector<16xf32>
    %118 = vector.multi_reduction <maximumf>, %117, %cst_47 [1] : vector<16x16xf32> to vector<16xf32>
    %119 = vector.shape_cast %118 : vector<16xf32> to vector<16x1xf32>
    %120 = vector.broadcast %119 : vector<16x1xf32> to vector<16x16xf32>
    %121 = arith.subf %117, %120 : vector<16x16xf32>
    %122 = math.exp %121 : vector<16x16xf32>
    %cst_48 = arith.constant dense<0.000000e+00> : vector<16xf32>
    %123 = vector.multi_reduction <add>, %122, %cst_48 [1] : vector<16x16xf32> to vector<16xf32>
    %124 = vector.shape_cast %123 : vector<16xf32> to vector<16x1xf32>
    %125 = tpu.reciprocal %124 {approx = true} : vector<16x1xf32> -> vector<16x1xf32>
    %126 = arith.mulf %124, %125 : vector<16x1xf32>
    %cst_49 = arith.constant 2.000000e+00 : f32
    %127 = vector.broadcast %cst_49 : f32 to vector<16x1xf32>
    %128 = arith.subf %127, %126 : vector<16x1xf32>
    %129 = arith.mulf %125, %128 : vector<16x1xf32>
    %130 = vector.broadcast %129 : vector<16x1xf32> to vector<16x16xf32>
    %131 = arith.mulf %122, %130 : vector<16x16xf32>
    %132 = arith.truncf %131 : vector<16x16xf32> to vector<16x16xbf16>
    %cst_50 = arith.constant dense<0.000000e+00> : vector<16x128xf32>
    %133 = tpu.matmul %132, %116, %cst_50 {dimension_numbers = #tpu.dot_dimension_numbers<[1], [0], [0], [1], [0, 0, 1, 1], [], []>} : vector<16x16xbf16>, vector<16x128xbf16>, vector<16x128xf32> -> vector<16x128xf32>
    %134 = vector.extract_strided_slice %32 {offsets = [16, 128], sizes = [16, 128], strides = [1, 1]} : vector<32x512xbf16> to vector<16x128xbf16>
    %135 = vector.extract_strided_slice %30 {offsets = [16, 128], sizes = [16, 128], strides = [1, 1]} : vector<32x512xbf16> to vector<16x128xbf16>
    %136 = vector.extract_strided_slice %31 {offsets = [16, 128], sizes = [16, 128], strides = [1, 1]} : vector<32x512xbf16> to vector<16x128xbf16>
    %cst_51 = arith.constant dense<0.000000e+00> : vector<16x16xf32>
    %137 = tpu.matmul %134, %135, %cst_51 {dimension_numbers = #tpu.dot_dimension_numbers<[1], [1], [0], [0], [0, 0, 1, 0], [], []>} : vector<16x128xbf16>, vector<16x128xbf16>, vector<16x16xf32> -> vector<16x16xf32>
    %cst_52 = arith.constant dense<0xFF800000> : vector<16xf32>
    %138 = vector.multi_reduction <maximumf>, %137, %cst_52 [1] : vector<16x16xf32> to vector<16xf32>
    %139 = vector.shape_cast %138 : vector<16xf32> to vector<16x1xf32>
    %140 = vector.broadcast %139 : vector<16x1xf32> to vector<16x16xf32>
    %141 = arith.subf %137, %140 : vector<16x16xf32>
    %142 = math.exp %141 : vector<16x16xf32>
    %cst_53 = arith.constant dense<0.000000e+00> : vector<16xf32>
    %143 = vector.multi_reduction <add>, %142, %cst_53 [1] : vector<16x16xf32> to vector<16xf32>
    %144 = vector.shape_cast %143 : vector<16xf32> to vector<16x1xf32>
    %145 = tpu.reciprocal %144 {approx = true} : vector<16x1xf32> -> vector<16x1xf32>
    %146 = arith.mulf %144, %145 : vector<16x1xf32>
    %cst_54 = arith.constant 2.000000e+00 : f32
    %147 = vector.broadcast %cst_54 : f32 to vector<16x1xf32>
    %148 = arith.subf %147, %146 : vector<16x1xf32>
    %149 = arith.mulf %145, %148 : vector<16x1xf32>
    %150 = vector.broadcast %149 : vector<16x1xf32> to vector<16x16xf32>
    %151 = arith.mulf %142, %150 : vector<16x16xf32>
    %152 = arith.truncf %151 : vector<16x16xf32> to vector<16x16xbf16>
    %cst_55 = arith.constant dense<0.000000e+00> : vector<16x128xf32>
    %153 = tpu.matmul %152, %136, %cst_55 {dimension_numbers = #tpu.dot_dimension_numbers<[1], [0], [0], [1], [0, 0, 1, 1], [], []>} : vector<16x16xbf16>, vector<16x128xbf16>, vector<16x128xf32> -> vector<16x128xf32>
    %154 = vector.extract_strided_slice %32 {offsets = [16, 256], sizes = [16, 128], strides = [1, 1]} : vector<32x512xbf16> to vector<16x128xbf16>
    %155 = vector.extract_strided_slice %30 {offsets = [16, 256], sizes = [16, 128], strides = [1, 1]} : vector<32x512xbf16> to vector<16x128xbf16>
    %156 = vector.extract_strided_slice %31 {offsets = [16, 256], sizes = [16, 128], strides = [1, 1]} : vector<32x512xbf16> to vector<16x128xbf16>
    %cst_56 = arith.constant dense<0.000000e+00> : vector<16x16xf32>
    %157 = tpu.matmul %154, %155, %cst_56 {dimension_numbers = #tpu.dot_dimension_numbers<[1], [1], [0], [0], [0, 0, 1, 0], [], []>} : vector<16x128xbf16>, vector<16x128xbf16>, vector<16x16xf32> -> vector<16x16xf32>
    %cst_57 = arith.constant dense<0xFF800000> : vector<16xf32>
    %158 = vector.multi_reduction <maximumf>, %157, %cst_57 [1] : vector<16x16xf32> to vector<16xf32>
    %159 = vector.shape_cast %158 : vector<16xf32> to vector<16x1xf32>
    %160 = vector.broadcast %159 : vector<16x1xf32> to vector<16x16xf32>
    %161 = arith.subf %157, %160 : vector<16x16xf32>
    %162 = math.exp %161 : vector<16x16xf32>
    %cst_58 = arith.constant dense<0.000000e+00> : vector<16xf32>
    %163 = vector.multi_reduction <add>, %162, %cst_58 [1] : vector<16x16xf32> to vector<16xf32>
    %164 = vector.shape_cast %163 : vector<16xf32> to vector<16x1xf32>
    %165 = tpu.reciprocal %164 {approx = true} : vector<16x1xf32> -> vector<16x1xf32>
    %166 = arith.mulf %164, %165 : vector<16x1xf32>
    %cst_59 = arith.constant 2.000000e+00 : f32
    %167 = vector.broadcast %cst_59 : f32 to vector<16x1xf32>
    %168 = arith.subf %167, %166 : vector<16x1xf32>
    %169 = arith.mulf %165, %168 : vector<16x1xf32>
    %170 = vector.broadcast %169 : vector<16x1xf32> to vector<16x16xf32>
    %171 = arith.mulf %162, %170 : vector<16x16xf32>
    %172 = arith.truncf %171 : vector<16x16xf32> to vector<16x16xbf16>
    %cst_60 = arith.constant dense<0.000000e+00> : vector<16x128xf32>
    %173 = tpu.matmul %172, %156, %cst_60 {dimension_numbers = #tpu.dot_dimension_numbers<[1], [0], [0], [1], [0, 0, 1, 1], [], []>} : vector<16x16xbf16>, vector<16x128xbf16>, vector<16x128xf32> -> vector<16x128xf32>
    %174 = vector.extract_strided_slice %32 {offsets = [16, 384], sizes = [16, 128], strides = [1, 1]} : vector<32x512xbf16> to vector<16x128xbf16>
    %175 = vector.extract_strided_slice %30 {offsets = [16, 384], sizes = [16, 128], strides = [1, 1]} : vector<32x512xbf16> to vector<16x128xbf16>
    %176 = vector.extract_strided_slice %31 {offsets = [16, 384], sizes = [16, 128], strides = [1, 1]} : vector<32x512xbf16> to vector<16x128xbf16>
    %cst_61 = arith.constant dense<0.000000e+00> : vector<16x16xf32>
    %177 = tpu.matmul %174, %175, %cst_61 {dimension_numbers = #tpu.dot_dimension_numbers<[1], [1], [0], [0], [0, 0, 1, 0], [], []>} : vector<16x128xbf16>, vector<16x128xbf16>, vector<16x16xf32> -> vector<16x16xf32>
    %cst_62 = arith.constant dense<0xFF800000> : vector<16xf32>
    %178 = vector.multi_reduction <maximumf>, %177, %cst_62 [1] : vector<16x16xf32> to vector<16xf32>
    %179 = vector.shape_cast %178 : vector<16xf32> to vector<16x1xf32>
    %180 = vector.broadcast %179 : vector<16x1xf32> to vector<16x16xf32>
    %181 = arith.subf %177, %180 : vector<16x16xf32>
    %182 = math.exp %181 : vector<16x16xf32>
    %cst_63 = arith.constant dense<0.000000e+00> : vector<16xf32>
    %183 = vector.multi_reduction <add>, %182, %cst_63 [1] : vector<16x16xf32> to vector<16xf32>
    %184 = vector.shape_cast %183 : vector<16xf32> to vector<16x1xf32>
    %185 = tpu.reciprocal %184 {approx = true} : vector<16x1xf32> -> vector<16x1xf32>
    %186 = arith.mulf %184, %185 : vector<16x1xf32>
    %cst_64 = arith.constant 2.000000e+00 : f32
    %187 = vector.broadcast %cst_64 : f32 to vector<16x1xf32>
    %188 = arith.subf %187, %186 : vector<16x1xf32>
    %189 = arith.mulf %185, %188 : vector<16x1xf32>
    %190 = vector.broadcast %189 : vector<16x1xf32> to vector<16x16xf32>
    %191 = arith.mulf %182, %190 : vector<16x16xf32>
    %192 = arith.truncf %191 : vector<16x16xf32> to vector<16x16xbf16>
    %cst_65 = arith.constant dense<0.000000e+00> : vector<16x128xf32>
    %193 = tpu.matmul %192, %176, %cst_65 {dimension_numbers = #tpu.dot_dimension_numbers<[1], [0], [0], [1], [0, 0, 1, 1], [], []>} : vector<16x16xbf16>, vector<16x128xbf16>, vector<16x128xf32> -> vector<16x128xf32>
    %194 = tpu.concatenate %133, %153, %173, %193 in 1 : vector<16x128xf32>, vector<16x128xf32>, vector<16x128xf32>, vector<16x128xf32> -> vector<16x512xf32>
    %195 = tpu.concatenate %113, %194 in 0 : vector<16x512xf32>, vector<16x512xf32> -> vector<32x512xf32>
    %196 = arith.truncf %195 : vector<32x512xf32> to vector<32x512xbf16>
    %c0_66 = arith.constant 0 : index
    %c0_67 = arith.constant 0 : index
    %197 = vector.load %arg6[%c0_66, %c0_67] : memref<512x512xbf16, #tpu.memory_space<vmem>>, vector<512x512xbf16>
    %cst_68 = arith.constant dense<0.000000e+00> : vector<32x512xf32>
    %198 = tpu.matmul %196, %197, %cst_68 {dimension_numbers = #tpu.dot_dimension_numbers<[1], [0], [0], [1], [0, 0, 1, 1], [], []>} : vector<32x512xbf16>, vector<512x512xbf16>, vector<32x512xf32> -> vector<32x512xf32>
    %c0_69 = arith.constant 0 : index
    %c0_70 = arith.constant 0 : index
    %199 = vector.load %arg7[%c0_69, %c0_70] : memref<1x512xf32, #tpu.memory_space<vmem>>, vector<1x512xf32>
    %200 = vector.broadcast %199 : vector<1x512xf32> to vector<32x512xf32>
    %201 = arith.addf %198, %200 : vector<32x512xf32>
    %202 = arith.addf %5, %201 : vector<32x512xf32>
    %cst_71 = arith.constant dense<0.000000e+00> : vector<32xf32>
    %203 = vector.multi_reduction <add>, %202, %cst_71 [1] : vector<32x512xf32> to vector<32xf32>
    %204 = vector.shape_cast %203 : vector<32xf32> to vector<32x1xf32>
    %cst_72 = arith.constant 5.120000e+02 : f32
    %205 = vector.broadcast %cst_72 : f32 to vector<32x1xf32>
    %206 = arith.divf %204, %205 : vector<32x1xf32>
    %207 = vector.broadcast %206 : vector<32x1xf32> to vector<32x512xf32>
    %208 = arith.subf %202, %207 : vector<32x512xf32>
    %209 = arith.mulf %208, %208 : vector<32x512xf32>
    %cst_73 = arith.constant dense<0.000000e+00> : vector<32xf32>
    %210 = vector.multi_reduction <add>, %209, %cst_73 [1] : vector<32x512xf32> to vector<32xf32>
    %211 = vector.shape_cast %210 : vector<32xf32> to vector<32x1xf32>
    %cst_74 = arith.constant 5.120000e+02 : f32
    %212 = vector.broadcast %cst_74 : f32 to vector<32x1xf32>
    %213 = arith.divf %211, %212 : vector<32x1xf32>
    %214 = vector.broadcast %206 : vector<32x1xf32> to vector<32x512xf32>
    %215 = arith.subf %202, %214 : vector<32x512xf32>
    %cst_75 = arith.constant 9.99999974E-6 : f32
    %216 = vector.broadcast %cst_75 : f32 to vector<32x1xf32>
    %217 = arith.addf %213, %216 : vector<32x1xf32>
    %218 = math.rsqrt %217 : vector<32x1xf32>
    %219 = vector.broadcast %218 : vector<32x1xf32> to vector<32x512xf32>
    %220 = arith.mulf %215, %219 : vector<32x512xf32>
    %c0_76 = arith.constant 0 : index
    %c0_77 = arith.constant 0 : index
    %221 = vector.load %arg8[%c0_76, %c0_77] : memref<1x512xf32, #tpu.memory_space<vmem>>, vector<1x512xf32>
    %222 = vector.broadcast %221 : vector<1x512xf32> to vector<32x512xf32>
    %223 = arith.mulf %220, %222 : vector<32x512xf32>
    %c0_78 = arith.constant 0 : index
    %c0_79 = arith.constant 0 : index
    %224 = vector.load %arg9[%c0_78, %c0_79] : memref<1x512xf32, #tpu.memory_space<vmem>>, vector<1x512xf32>
    %225 = vector.broadcast %224 : vector<1x512xf32> to vector<32x512xf32>
    %226 = arith.addf %223, %225 : vector<32x512xf32>
    %227 = vector.shape_cast %226 : vector<32x512xf32> to vector<2x16x512xf32>
    %c0_80 = arith.constant 0 : index
    %c0_81 = arith.constant 0 : index
    %c0_82 = arith.constant 0 : index
    %228 = vector.load %arg10[%c0_80, %c0_81, %c0_82] : memref<2x16x512xf32, #tpu.memory_space<vmem>>, vector<2x16x512xf32>
    tpu.vector_store %arg10[%c0_80, %c0_81, %c0_82], %227 {strides = array<i32>} : memref<2x16x512xf32, #tpu.memory_space<vmem>>, vector<2x16x512xf32>,
    return
  }
  func.func @transform_0(%arg0: i32) -> (i32, i32, i32) {
    %c0_i32 = arith.constant 0 : i32
    %c0_i32_0 = arith.constant 0 : i32
    %c0_i32_1 = arith.constant 0 : i32
    return %arg0, %c0_i32, %c0_i32_0 : i32, i32, i32
  }
  func.func @transform_1(%arg0: i32) -> (i32, i32, i32) {
    %c0_i32 = arith.constant 0 : i32
    %c0_i32_0 = arith.constant 0 : i32
    %c0_i32_1 = arith.constant 0 : i32
    return %arg0, %c0_i32, %c0_i32_0 : i32, i32, i32
  }
  func.func @transform_2(%arg0: i32) -> (i32, i32, i32) {
    %c0_i32 = arith.constant 0 : i32
    %c0_i32_0 = arith.constant 0 : i32
    %c0_i32_1 = arith.constant 0 : i32
    return %arg0, %c0_i32, %c0_i32_0 : i32, i32, i32
  }
  func.func @transform_3(%arg0: i32) -> (i32, i32, i32) {
    %c0_i32 = arith.constant 0 : i32
    %c0_i32_0 = arith.constant 0 : i32
    %c0_i32_1 = arith.constant 0 : i32
    %c0_i32_2 = arith.constant 0 : i32
    return %c0_i32, %c0_i32_0, %c0_i32_1 : i32, i32, i32
  }
  func.func @transform_4(%arg0: i32) -> (i32, i32, i32) {
    %c0_i32 = arith.constant 0 : i32
    %c0_i32_0 = arith.constant 0 : i32
    %c0_i32_1 = arith.constant 0 : i32
    %c0_i32_2 = arith.constant 0 : i32
    return %c0_i32, %c0_i32_0, %c0_i32_1 : i32, i32, i32
  }
  func.func @transform_5(%arg0: i32) -> (i32, i32) {
    %c0_i32 = arith.constant 0 : i32
    %c0_i32_0 = arith.constant 0 : i32
    %c0_i32_1 = arith.constant 0 : i32
    return %c0_i32, %c0_i32_0 : i32, i32
  }
  func.func @transform_6(%arg0: i32) -> (i32, i32) {
    %c0_i32 = arith.constant 0 : i32
    %c0_i32_0 = arith.constant 0 : i32
    %c0_i32_1 = arith.constant 0 : i32
    return %c0_i32, %c0_i32_0 : i32, i32
  }
  func.func @transform_7(%arg0: i32) -> (i32, i32) {
    %c0_i32 = arith.constant 0 : i32
    %c0_i32_0 = arith.constant 0 : i32
    %c0_i32_1 = arith.constant 0 : i32
    return %c0_i32, %c0_i32_0 : i32, i32
  }
  func.func @transform_8(%arg0: i32) -> (i32, i32) {
    %c0_i32 = arith.constant 0 : i32
    %c0_i32_0 = arith.constant 0 : i32
    %c0_i32_1 = arith.constant 0 : i32
    return %c0_i32, %c0_i32_0 : i32, i32
  }
  func.func @transform_9(%arg0: i32) -> (i32, i32, i32) {
    %c0_i32 = arith.constant 0 : i32
    %c0_i32_0 = arith.constant 0 : i32
    %c0_i32_1 = arith.constant 0 : i32
    return %arg0, %c0_i32, %c0_i32_0 : i32, i32, i32
  }
}

</mosaic_0001>

<llo_original>
// kernel: multi_head_attention.1
$region0: #{multi_head_attention.1}
  #allocation0 [shape = 'u32[]', space=smem, size = 0x4, offset = 0x4, fixed_abs, tag = 'smem constant byte address 0x4 - core index']
  #allocation1 [shape = 'u32[144,128]{1,0:T(1,128)}', space=vmem, size = 0x12000, scoped, tag = 'internal scratch']
  %s0 = inlined_call_operand.hbm [shape: f32[2,16,512], index: 0, kind: input, shape index: {}]
  %s1 = inlined_call_operand.hbm [shape: f32[2,16,512], index: 1, kind: input, shape index: {}]
  %s2 = inlined_call_operand.hbm [shape: f32[2,16,512], index: 2, kind: input, shape index: {}]
  %s3 = inlined_call_operand.hbm [shape: bf16[3,512,512], index: 3, kind: input, shape index: {}]
  %s4 = inlined_call_operand.hbm [shape: f32[3,1,512], index: 4, kind: input, shape index: {}]
  %s5 = inlined_call_operand.hbm [shape: bf16[512,512], index: 5, kind: input, shape index: {}]
  %s6 = inlined_call_operand.hbm [shape: f32[1,512], index: 6, kind: input, shape index: {}]
  %s7 = inlined_call_operand.hbm [shape: f32[1,512], index: 7, kind: input, shape index: {}]
  %s8 = inlined_call_operand.hbm [shape: f32[1,512], index: 8, kind: input, shape index: {}]
  %s9 = inlined_call_operand.hbm [shape: f32[2,16,512], index: 9, kind: output, shape index: {}]
  %s10 = sld [smem:[#allocation0]]
  $region82: #{multi_head_attention.1} parent=0
    _
  %s12 = ssub.s32 1, %s10
  %s13 = scalar_select 0, %s12, %s10
  $region1: #{multi_head_attention.1} parent=0
    #allocation2 [shape = 'u8[65536]{0}', space=vmem, size = 0x10000, scoped, tag = 'input window, operand 0, single buffered']
    #allocation3 [shape = 's32[1]{0}', space=sflag, size = 0x4, scoped, tag = 'scoped memory for multi_head_attention.1']
    #allocation4 [shape = 's32[1]{0}', space=sflag, size = 0x4, scoped, tag = 'scoped memory for multi_head_attention.1']
    #allocation5 [shape = 'u8[65536]{0}', space=vmem, size = 0x10000, scoped, tag = 'input window, operand 1, single buffered']
    #allocation6 [shape = 's32[1]{0}', space=sflag, size = 0x4, scoped, tag = 'scoped memory for multi_head_attention.1']
    #allocation7 [shape = 'u8[65536]{0}', space=vmem, size = 0x10000, scoped, tag = 'input window, operand 2, single buffered']
    #allocation8 [shape = 'u8[1572864]{0}', space=vmem, size = 0x180000, scoped, tag = 'input window, operand 3, single buffered']
    #allocation9 [shape = 's32[1]{0}', space=sflag, size = 0x4, scoped, tag = 'scoped memory for multi_head_attention.1']
    #allocation10 [shape = 'u8[6144]{0}', space=vmem, size = 0x1800, scoped, tag = 'input window, operand 4, single buffered']
    #allocation11 [shape = 'u8[524288]{0}', space=vmem, size = 0x80000, scoped, tag = 'input window, operand 5, single buffered']
    #allocation12 [shape = 's32[1]{0}', space=sflag, size = 0x4, scoped, tag = 'scoped memory for multi_head_attention.1']
    #allocation13 [shape = 'u8[2048]{0}', space=vmem, size = 0x800, scoped, tag = 'input window, operand 6, single buffered']
    #allocation14 [shape = 'u8[2048]{0}', space=vmem, size = 0x800, scoped, tag = 'input window, operand 7, single buffered']
    #allocation15 [shape = 's32[1]{0}', space=sflag, size = 0x4, scoped, tag = 'scoped memory for multi_head_attention.1']
    #allocation16 [shape = 'u8[2048]{0}', space=vmem, size = 0x800, scoped, tag = 'input window, operand 8, single buffered']
    #allocation17 [shape = 'u8[65536]{0}', space=vmem, size = 0x10000, scoped, tag = 'output window, operand 0, single buffered']
    %14 = vsyncpa [#allocation3], 0
    %15 = vsyncpa [#allocation6], 0
    %16 = vsyncpa [#allocation9], 0
    %17 = vsyncpa [#allocation12], 0
    %18 = vsyncpa [#allocation15], 0
    %19 = vsyncpa [#allocation4], 0
    // Predicated region
    $region2: #{multi_head_attention.1} parent=1 // pred_check
      _
    $region3: #{multi_head_attention.1} parent=1 // pred_check_branch
      %21 = sbr.rel (0) target = $region5
    $region4: #{multi_head_attention.1} parent=1 // pred_region
      %s23 = ssub.s32 2048, 2048
      %24 = vsyncadd [#allocation3], %s23
      %s25 = sshll.u32 [#allocation2], 4
      %s26 = int_to_ptr.vmem [resolvable:$true] %s25
      %31 = dma.hbm_to_vmem [thread:$0]  %s0, 2048, %s26, [#allocation3], 512, 512, 32
    $region5: #{multi_head_attention.1} parent=1 // pred_fallthru
      _
    // Predicated region
    $region6: #{multi_head_attention.1} parent=1 // pred_check
      _
    $region7: #{multi_head_attention.1} parent=1 // pred_check_branch
      %33 = sbr.rel (0) target = $region9
    $region8: #{multi_head_attention.1} parent=1 // pred_region
      %s35 = ssub.s32 2048, 2048
      %36 = vsyncadd [#allocation6], %s35
      %s37 = sshll.u32 [#allocation5], 4
      %s38 = int_to_ptr.vmem [resolvable:$true] %s37
      %43 = dma.hbm_to_vmem [thread:$0]  %s1, 2048, %s38, [#allocation6], 512, 512, 32
    $region9: #{multi_head_attention.1} parent=1 // pred_fallthru
      _
    // Predicated region
    $region10: #{multi_head_attention.1} parent=1 // pred_check
      _
    $region11: #{multi_head_attention.1} parent=1 // pred_check_branch
      %45 = sbr.rel (0) target = $region13
    $region12: #{multi_head_attention.1} parent=1 // pred_region
      %s47 = ssub.s32 2048, 2048
      %48 = vsyncadd [#allocation6], %s47
      %s49 = sshll.u32 [#allocation7], 4
      %s50 = int_to_ptr.vmem [resolvable:$true] %s49
      %55 = dma.hbm_to_vmem [thread:$0]  %s2, 2048, %s50, [#allocation6], 512, 512, 32
    $region13: #{multi_head_attention.1} parent=1 // pred_fallthru
      _
    // Predicated region
    $region14: #{multi_head_attention.1} parent=1 // pred_check
      _
    $region15: #{multi_head_attention.1} parent=1 // pred_check_branch
      %57 = sbr.rel (0) target = $region17
    $region16: #{multi_head_attention.1} parent=1 // pred_region
      %s59 = ssub.s32 49152, 49152
      %60 = vsyncadd [#allocation9], %s59
      %s61 = sshll.u32 [#allocation8], 4
      %s62 = int_to_ptr.vmem [resolvable:$true] %s61
      %67 = dma.hbm_to_vmem [thread:$0]  %s3, 49152, %s62, [#allocation9], 256, 256, 16
    $region17: #{multi_head_attention.1} parent=1 // pred_fallthru
      _
    // Predicated region
    $region18: #{multi_head_attention.1} parent=1 // pred_check
      _
    $region19: #{multi_head_attention.1} parent=1 // pred_check_branch
      %69 = sbr.rel (0) target = $region21
    $region20: #{multi_head_attention.1} parent=1 // pred_region
      %s71 = ssub.s32 192, 192
      %72 = vsyncadd [#allocation9], %s71
      %s73 = sshll.u32 [#allocation10], 4
      %s74 = int_to_ptr.vmem [resolvable:$true] %s73
      %79 = dma.hbm_to_vmem [thread:$0]  %s4, 192, %s74, [#allocation9], 64, 64, 4
    $region21: #{multi_head_attention.1} parent=1 // pred_fallthru
      _
    // Predicated region
    $region22: #{multi_head_attention.1} parent=1 // pred_check
      _
    $region23: #{multi_head_attention.1} parent=1 // pred_check_branch
      %81 = sbr.rel (0) target = $region25
    $region24: #{multi_head_attention.1} parent=1 // pred_region
      %s83 = ssub.s32 16384, 16384
      %84 = vsyncadd [#allocation12], %s83
      %s85 = sshll.u32 [#allocation11], 4
      %s86 = int_to_ptr.vmem [resolvable:$true] %s85
      %91 = dma.hbm_to_vmem [thread:$0]  %s5, 16384, %s86, [#allocation12], 256, 256, 16
    $region25: #{multi_head_attention.1} parent=1 // pred_fallthru
      _
    // Predicated region
    $region26: #{multi_head_attention.1} parent=1 // pred_check
      _
    $region27: #{multi_head_attention.1} parent=1 // pred_check_branch
      %93 = sbr.rel (0) target = $region29
    $region28: #{multi_head_attention.1} parent=1 // pred_region
      %s95 = ssub.s32 64, 64
      %96 = vsyncadd [#allocation12], %s95
      %s98 = sshll.u32 [#allocation13], 4
      %s99 = int_to_ptr.vmem [resolvable:$true] %s98
      %101 = dma.hbm_to_vmem [thread:$0]  %s6, 64, %s99, [#allocation12]
    $region29: #{multi_head_attention.1} parent=1 // pred_fallthru
      _
    // Predicated region
    $region30: #{multi_head_attention.1} parent=1 // pred_check
      _
    $region31: #{multi_head_attention.1} parent=1 // pred_check_branch
      %103 = sbr.rel (0) target = $region33
    $region32: #{multi_head_attention.1} parent=1 // pred_region
      %s105 = ssub.s32 64, 64
      %106 = vsyncadd [#allocation15], %s105
      %s108 = sshll.u32 [#allocation14], 4
      %s109 = int_to_ptr.vmem [resolvable:$true] %s108
      %111 = dma.hbm_to_vmem [thread:$0]  %s7, 64, %s109, [#allocation15]
    $region33: #{multi_head_attention.1} parent=1 // pred_fallthru
      _
    // Predicated region
    $region34: #{multi_head_attention.1} parent=1 // pred_check
      _
    $region35: #{multi_head_attention.1} parent=1 // pred_check_branch
      %113 = sbr.rel (0) target = $region37
    $region36: #{multi_head_attention.1} parent=1 // pred_region
      %s115 = ssub.s32 64, 64
      %116 = vsyncadd [#allocation15], %s115
      %s118 = sshll.u32 [#allocation16], 4
      %s119 = int_to_ptr.vmem [resolvable:$true] %s118
      %121 = dma.hbm_to_vmem [thread:$0]  %s8, 64, %s119, [#allocation15]
    $region37: #{multi_head_attention.1} parent=1 // pred_fallthru
      _
    // Predicated region
    $region38: #{multi_head_attention.1} parent=1 // pred_check
      _
    $region39: #{multi_head_attention.1} parent=1 // pred_check_branch
      %123 = sbr.rel (0) target = $region41
    $region40: #{multi_head_attention.1} parent=1 // pred_region
      %124 = dma.done [#allocation3], 2048
    $region41: #{multi_head_attention.1} parent=1 // pred_fallthru
      _
    // Predicated region
    $region42: #{multi_head_attention.1} parent=1 // pred_check
      _
    $region43: #{multi_head_attention.1} parent=1 // pred_check_branch
      %126 = sbr.rel (0) target = $region45
    $region44: #{multi_head_attention.1} parent=1 // pred_region
      %127 = dma.done [#allocation6], 2048
    $region45: #{multi_head_attention.1} parent=1 // pred_fallthru
      _
    // Predicated region
    $region46: #{multi_head_attention.1} parent=1 // pred_check
      _
    $region47: #{multi_head_attention.1} parent=1 // pred_check_branch
      %129 = sbr.rel (0) target = $region49
    $region48: #{multi_head_attention.1} parent=1 // pred_region
      %130 = dma.done [#allocation6], 2048
    $region49: #{multi_head_attention.1} parent=1 // pred_fallthru
      _
    // Predicated region
    $region50: #{multi_head_attention.1} parent=1 // pred_check
      _
    $region51: #{multi_head_attention.1} parent=1 // pred_check_branch
      %132 = sbr.rel (0) target = $region53
    $region52: #{multi_head_attention.1} parent=1 // pred_region
      %133 = dma.done [#allocation9], 49152
    $region53: #{multi_head_attention.1} parent=1 // pred_fallthru
      _
    // Predicated region
    $region54: #{multi_head_attention.1} parent=1 // pred_check
      _
    $region55: #{multi_head_attention.1} parent=1 // pred_check_branch
      %135 = sbr.rel (0) target = $region57
    $region56: #{multi_head_attention.1} parent=1 // pred_region
      %136 = dma.done [#allocation9], 192
    $region57: #{multi_head_attention.1} parent=1 // pred_fallthru
      _
    // Predicated region
    $region58: #{multi_head_attention.1} parent=1 // pred_check
      _
    $region59: #{multi_head_attention.1} parent=1 // pred_check_branch
      %138 = sbr.rel (0) target = $region61
    $region60: #{multi_head_attention.1} parent=1 // pred_region
      %139 = dma.done [#allocation12], 16384
    $region61: #{multi_head_attention.1} parent=1 // pred_fallthru
      _
    // Predicated region
    $region62: #{multi_head_attention.1} parent=1 // pred_check
      _
    $region63: #{multi_head_attention.1} parent=1 // pred_check_branch
      %141 = sbr.rel (0) target = $region65
    $region64: #{multi_head_attention.1} parent=1 // pred_region
      %142 = dma.done [#allocation12], 64
    $region65: #{multi_head_attention.1} parent=1 // pred_fallthru
      _
    // Predicated region
    $region66: #{multi_head_attention.1} parent=1 // pred_check
      _
    $region67: #{multi_head_attention.1} parent=1 // pred_check_branch
      %144 = sbr.rel (0) target = $region69
    $region68: #{multi_head_attention.1} parent=1 // pred_region
      %145 = dma.done [#allocation15], 64
    $region69: #{multi_head_attention.1} parent=1 // pred_fallthru
      _
    // Predicated region
    $region70: #{multi_head_attention.1} parent=1 // pred_check
      _
    $region71: #{multi_head_attention.1} parent=1 // pred_check_branch
      %147 = sbr.rel (0) target = $region73
    $region72: #{multi_head_attention.1} parent=1 // pred_region
      %148 = dma.done [#allocation15], 64
    $region73: #{multi_head_attention.1} parent=1 // pred_fallthru
      _
    %v150 = vld [vmem:[#allocation2] sm:$0xff]
    %v151 = vld [vmem:[#allocation2 + $0x8] sm:$0xff]
    %v152 = vld [vmem:[#allocation2 + $0x10] sm:$0xff]
    %v153 = vld [vmem:[#allocation2 + $0x18] sm:$0xff]
    %v154 = vld [vmem:[#allocation2 + $0x20] sm:$0xff]
    %v155 = vld [vmem:[#allocation2 + $0x28] sm:$0xff]
    %v156 = vld [vmem:[#allocation2 + $0x30] sm:$0xff]
    %v157 = vld [vmem:[#allocation2 + $0x38] sm:$0xff]
    %v158 = vld [vmem:[#allocation2 + $0x40] sm:$0xff]
    %v159 = vld [vmem:[#allocation2 + $0x48] sm:$0xff]
    %v160 = vld [vmem:[#allocation2 + $0x50] sm:$0xff]
    %v161 = vld [vmem:[#allocation2 + $0x58] sm:$0xff]
    %v162 = vld [vmem:[#allocation2 + $0x60] sm:$0xff]
    %v163 = vld [vmem:[#allocation2 + $0x68] sm:$0xff]
    %v164 = vld [vmem:[#allocation2 + $0x70] sm:$0xff]
    %v165 = vld [vmem:[#allocation2 + $0x78] sm:$0xff]
    %v166 = vld [vmem:[#allocation5] sm:$0xff]
    %v167 = vld [vmem:[#allocation5 + $0x8] sm:$0xff]
    %v168 = vld [vmem:[#allocation5 + $0x10] sm:$0xff]
    %v169 = vld [vmem:[#allocation5 + $0x18] sm:$0xff]
    %v170 = vld [vmem:[#allocation5 + $0x20] sm:$0xff]
    %v171 = vld [vmem:[#allocation5 + $0x28] sm:$0xff]
    %v172 = vld [vmem:[#allocation5 + $0x30] sm:$0xff]
    %v173 = vld [vmem:[#allocation5 + $0x38] sm:$0xff]
    %v174 = vld [vmem:[#allocation5 + $0x40] sm:$0xff]
    %v175 = vld [vmem:[#allocation5 + $0x48] sm:$0xff]
    %v176 = vld [vmem:[#allocation5 + $0x50] sm:$0xff]
    %v177 = vld [vmem:[#allocation5 + $0x58] sm:$0xff]
    %v178 = vld [vmem:[#allocation5 + $0x60] sm:$0xff]
    %v179 = vld [vmem:[#allocation5 + $0x68] sm:$0xff]
    %v180 = vld [vmem:[#allocation5 + $0x70] sm:$0xff]
    %v181 = vld [vmem:[#allocation5 + $0x78] sm:$0xff]
    %v182 = vld [vmem:[#allocation7] sm:$0xff]
    %v183 = vld [vmem:[#allocation7 + $0x8] sm:$0xff]
    %v184 = vld [vmem:[#allocation7 + $0x10] sm:$0xff]
    %v185 = vld [vmem:[#allocation7 + $0x18] sm:$0xff]
    %v186 = vld [vmem:[#allocation7 + $0x20] sm:$0xff]
    %v187 = vld [vmem:[#allocation7 + $0x28] sm:$0xff]
    %v188 = vld [vmem:[#allocation7 + $0x30] sm:$0xff]
    %v189 = vld [vmem:[#allocation7 + $0x38] sm:$0xff]
    %v190 = vld [vmem:[#allocation7 + $0x40] sm:$0xff]
    %v191 = vld [vmem:[#allocation7 + $0x48] sm:$0xff]
    %v192 = vld [vmem:[#allocation7 + $0x50] sm:$0xff]
    %v193 = vld [vmem:[#allocation7 + $0x58] sm:$0xff]
    %v194 = vld [vmem:[#allocation7 + $0x60] sm:$0xff]
    %v195 = vld [vmem:[#allocation7 + $0x68] sm:$0xff]
    %v196 = vld [vmem:[#allocation7 + $0x70] sm:$0xff]
    %v197 = vld [vmem:[#allocation7 + $0x78] sm:$0xff]
    %v198 = vpack.c.bf16 %v154, %v150
    %v199 = vpack.c.bf16 %v155, %v151
    %v200 = vpack.c.bf16 %v156, %v152
    %v201 = vpack.c.bf16 %v157, %v153
    %v202 = vpack.c.bf16 %v162, %v158
    %v203 = vpack.c.bf16 %v163, %v159
    %v204 = vpack.c.bf16 %v164, %v160
    %v205 = vpack.c.bf16 %v165, %v161
    %v206 = vld [vmem:[#allocation8] sm:$0xff]
    %v207 = vld [vmem:[#allocation8 + $0x8] sm:$0xff]
    %v208 = vld [vmem:[#allocation8 + $0x10] sm:$0xff]
    %v209 = vld [vmem:[#allocation8 + $0x18] sm:$0xff]
    %v210 = vld [vmem:[#allocation8 + $0x20] sm:$0xff]
    %v211 = vld [vmem:[#allocation8 + $0x28] sm:$0xff]
    %v212 = vld [vmem:[#allocation8 + $0x30] sm:$0xff]
    %v213 = vld [vmem:[#allocation8 + $0x38] sm:$0xff]
    %v214 = vld [vmem:[#allocation8 + $0x40] sm:$0xff]
    %v215 = vld [vmem:[#allocation8 + $0x48] sm:$0xff]
    %v216 = vld [vmem:[#allocation8 + $0x50] sm:$0xff]
    %v217 = vld [vmem:[#allocation8 + $0x58] sm:$0xff]
    %v218 = vld [vmem:[#allocation8 + $0x60] sm:$0xff]
    %v219 = vld [vmem:[#allocation8 + $0x68] sm:$0xff]
    %v220 = vld [vmem:[#allocation8 + $0x70] sm:$0xff]
    %v221 = vld [vmem:[#allocation8 + $0x78] sm:$0xff]
    %v222 = vld [vmem:[#allocation8 + $0x80] sm:$0xff]
    %v223 = vld [vmem:[#allocation8 + $0x88] sm:$0xff]
    %v224 = vld [vmem:[#allocation8 + $0x90] sm:$0xff]
    %v225 = vld [vmem:[#allocation8 + $0x98] sm:$0xff]
    %v226 = vld [vmem:[#allocation8 + $0xa0] sm:$0xff]
    %v227 = vld [vmem:[#allocation8 + $0xa8] sm:$0xff]
    %v228 = vld [vmem:[#allocation8 + $0xb0] sm:$0xff]
    %v229 = vld [vmem:[#allocation8 + $0xb8] sm:$0xff]
    %v230 = vld [vmem:[#allocation8 + $0xc0] sm:$0xff]
    %v231 = vld [vmem:[#allocation8 + $0xc8] sm:$0xff]
    %v232 = vld [vmem:[#allocation8 + $0xd0] sm:$0xff]
    %v233 = vld [vmem:[#allocation8 + $0xd8] sm:$0xff]
    %v234 = vld [vmem:[#allocation8 + $0xe0] sm:$0xff]
    %v235 = vld [vmem:[#allocation8 + $0xe8] sm:$0xff]
    %v236 = vld [vmem:[#allocation8 + $0xf0] sm:$0xff]
    %v237 = vld [vmem:[#allocation8 + $0xf8] sm:$0xff]
    %v238 = vld [vmem:[#allocation8 + $0x100] sm:$0xff]
    %v239 = vld [vmem:[#allocation8 + $0x108] sm:$0xff]
    %v240 = vld [vmem:[#allocation8 + $0x110] sm:$0xff]
    %v241 = vld [vmem:[#allocation8 + $0x118] sm:$0xff]
    %v242 = vld [vmem:[#allocation8 + $0x120] sm:$0xff]
    %v243 = vld [vmem:[#allocation8 + $0x128] sm:$0xff]
    %v244 = vld [vmem:[#allocation8 + $0x130] sm:$0xff]
    %v245 = vld [vmem:[#allocation8 + $0x138] sm:$0xff]
    %v246 = vld [vmem:[#allocation8 + $0x140] sm:$0xff]
    %v247 = vld [vmem:[#allocation8 + $0x148] sm:$0xff]
    %v248 = vld [vmem:[#allocation8 + $0x150] sm:$0xff]
    %v249 = vld [vmem:[#allocation8 + $0x158] sm:$0xff]
    %v250 = vld [vmem:[#allocation8 + $0x160] sm:$0xff]
    %v251 = vld [vmem:[#allocation8 + $0x168] sm:$0xff]
    %v252 = vld [vmem:[#allocation8 + $0x170] sm:$0xff]
    %v253 = vld [vmem:[#allocation8 + $0x178] sm:$0xff]
    %v254 = vld [vmem:[#allocation8 + $0x180] sm:$0xff]
    %v255 = vld [vmem:[#allocation8 + $0x188] sm:$0xff]
    %v256 = vld [vmem:[#allocation8 + $0x190] sm:$0xff]
    %v257 = vld [vmem:[#allocation8 + $0x198] sm:$0xff]
    %v258 = vld [vmem:[#allocation8 + $0x1a0] sm:$0xff]
    %v259 = vld [vmem:[#allocation8 + $0x1a8] sm:$0xff]
    %v260 = vld [vmem:[#allocation8 + $0x1b0] sm:$0xff]
    %v261 = vld [vmem:[#allocation8 + $0x1b8] sm:$0xff]
    %v262 = vld [vmem:[#allocation8 + $0x1c0] sm:$0xff]
    %v263 = vld [vmem:[#allocation8 + $0x1c8] sm:$0xff]
    %v264 = vld [vmem:[#allocation8 + $0x1d0] sm:$0xff]
    %v265 = vld [vmem:[#allocation8 + $0x1d8] sm:$0xff]
    %v266 = vld [vmem:[#allocation8 + $0x1e0] sm:$0xff]
    %v267 = vld [vmem:[#allocation8 + $0x1e8] sm:$0xff]
    %v268 = vld [vmem:[#allocation8 + $0x1f0] sm:$0xff]
    %v269 = vld [vmem:[#allocation8 + $0x1f8] sm:$0xff]
    %v270 = vld [vmem:[#allocation8 + $0x200] sm:$0xff]
    %v271 = vld [vmem:[#allocation8 + $0x208] sm:$0xff]
    %v272 = vld [vmem:[#allocation8 + $0x210] sm:$0xff]
    %v273 = vld [vmem:[#allocation8 + $0x218] sm:$0xff]
    %v274 = vld [vmem:[#allocation8 + $0x220] sm:$0xff]
    %v275 = vld [vmem:[#allocation8 + $0x228] sm:$0xff]
    %v276 = vld [vmem:[#allocation8 + $0x230] sm:$0xff]
    %v277 = vld [vmem:[#allocation8 + $0x238] sm:$0xff]
    %v278 = vld [vmem:[#allocation8 + $0x240] sm:$0xff]
    %v279 = vld [vmem:[#allocation8 + $0x248] sm:$0xff]
    %v280 = vld [vmem:[#allocation8 + $0x250] sm:$0xff]
    %v281 = vld [vmem:[#allocation8 + $0x258] sm:$0xff]
    %v282 = vld [vmem:[#allocation8 + $0x260] sm:$0xff]
    %v283 = vld [vmem:[#allocation8 + $0x268] sm:$0xff]
    %v284 = vld [vmem:[#allocation8 + $0x270] sm:$0xff]
    %v285 = vld [vmem:[#allocation8 + $0x278] sm:$0xff]
    %v286 = vld [vmem:[#allocation8 + $0x280] sm:$0xff]
    %v287 = vld [vmem:[#allocation8 + $0x288] sm:$0xff]
    %v288 = vld [vmem:[#allocation8 + $0x290] sm:$0xff]
    %v289 = vld [vmem:[#allocation8 + $0x298] sm:$0xff]
    %v290 = vld [vmem:[#allocation8 + $0x2a0] sm:$0xff]
    %v291 = vld [vmem:[#allocation8 + $0x2a8] sm:$0xff]
    %v292 = vld [vmem:[#allocation8 + $0x2b0] sm:$0xff]
    %v293 = vld [vmem:[#allocation8 + $0x2b8] sm:$0xff]
    %v294 = vld [vmem:[#allocation8 + $0x2c0] sm:$0xff]
    %v295 = vld [vmem:[#allocation8 + $0x2c8] sm:$0xff]
    %v296 = vld [vmem:[#allocation8 + $0x2d0] sm:$0xff]
    %v297 = vld [vmem:[#allocation8 + $0x2d8] sm:$0xff]
    %v298 = vld [vmem:[#allocation8 + $0x2e0] sm:$0xff]
    %v299 = vld [vmem:[#allocation8 + $0x2e8] sm:$0xff]
    %v300 = vld [vmem:[#allocation8 + $0x2f0] sm:$0xff]
    %v301 = vld [vmem:[#allocation8 + $0x2f8] sm:$0xff]
    %v302 = vld [vmem:[#allocation8 + $0x300] sm:$0xff]
    %v303 = vld [vmem:[#allocation8 + $0x308] sm:$0xff]
    %v304 = vld [vmem:[#allocation8 + $0x310] sm:$0xff]
    %v305 = vld [vmem:[#allocation8 + $0x318] sm:$0xff]
    %v306 = vld [vmem:[#allocation8 + $0x320] sm:$0xff]
    %v307 = vld [vmem:[#allocation8 + $0x328] sm:$0xff]
    %v308 = vld [vmem:[#allocation8 + $0x330] sm:$0xff]
    %v309 = vld [vmem:[#allocation8 + $0x338] sm:$0xff]
    %v310 = vld [vmem:[#allocation8 + $0x340] sm:$0xff]
    %v311 = vld [vmem:[#allocation8 + $0x348] sm:$0xff]
    %v312 = vld [vmem:[#allocation8 + $0x350] sm:$0xff]
    %v313 = vld [vmem:[#allocation8 + $0x358] sm:$0xff]
    %v314 = vld [vmem:[#allocation8 + $0x360] sm:$0xff]
    %v315 = vld [vmem:[#allocation8 + $0x368] sm:$0xff]
    %v316 = vld [vmem:[#allocation8 + $0x370] sm:$0xff]
    %v317 = vld [vmem:[#allocation8 + $0x378] sm:$0xff]
    %v318 = vld [vmem:[#allocation8 + $0x380] sm:$0xff]
    %v319 = vld [vmem:[#allocation8 + $0x388] sm:$0xff]
    %v320 = vld [vmem:[#allocation8 + $0x390] sm:$0xff]
    %v321 = vld [vmem:[#allocation8 + $0x398] sm:$0xff]
    %v322 = vld [vmem:[#allocation8 + $0x3a0] sm:$0xff]
    %v323 = vld [vmem:[#allocation8 + $0x3a8] sm:$0xff]
    %v324 = vld [vmem:[#allocation8 + $0x3b0] sm:$0xff]
    %v325 = vld [vmem:[#allocation8 + $0x3b8] sm:$0xff]
    %v326 = vld [vmem:[#allocation8 + $0x3c0] sm:$0xff]
    %v327 = vld [vmem:[#allocation8 + $0x3c8] sm:$0xff]
    %v328 = vld [vmem:[#allocation8 + $0x3d0] sm:$0xff]
    %v329 = vld [vmem:[#allocation8 + $0x3d8] sm:$0xff]
    %v330 = vld [vmem:[#allocation8 + $0x3e0] sm:$0xff]
    %v331 = vld [vmem:[#allocation8 + $0x3e8] sm:$0xff]
    %v332 = vld [vmem:[#allocation8 + $0x3f0] sm:$0xff]
    %v333 = vld [vmem:[#allocation8 + $0x3f8] sm:$0xff]
    %v334 = vld [vmem:[#allocation10] sm:$0xf]
    %v336 = vlaneseq
    %v337 = vshrl.u32 %v336, 7
    %v338 = vsub.s32 0, %v337
    %v339 = vrot.slane %v334, %v338
    %v340 = vlaneseq
    %v341 = vshrl.u32 %v340, 7
    %v342 = vsub.s32 1, %v341
    %v343 = vrot.slane %v334, %v342
    %v344 = vlaneseq
    %v345 = vshrl.u32 %v344, 7
    %v346 = vsub.s32 2, %v345
    %v347 = vrot.slane %v334, %v346
    %v348 = vlaneseq
    %v349 = vshrl.u32 %v348, 7
    %v350 = vsub.s32 3, %v349
    %v351 = vrot.slane %v334, %v350
    %v484 = vunpack.c.l.b16 %v206
    %v485 = vunpack.c.h.b16 %v206
    %v486 = vunpack.c.l.b16 %v207
    %v487 = vunpack.c.h.b16 %v207
    %v488 = vunpack.c.l.b16 %v208
    %v489 = vunpack.c.h.b16 %v208
    %v490 = vunpack.c.l.b16 %v209
    %v491 = vunpack.c.h.b16 %v209
    %v492 = vunpack.c.l.b16 %v210
    %v493 = vunpack.c.h.b16 %v210
    %v494 = vunpack.c.l.b16 %v211
    %v495 = vunpack.c.h.b16 %v211
    %v496 = vunpack.c.l.b16 %v212
    %v497 = vunpack.c.h.b16 %v212
    %v498 = vunpack.c.l.b16 %v213
    %v499 = vunpack.c.h.b16 %v213
    %v500 = vunpack.c.l.b16 %v214
    %v501 = vunpack.c.h.b16 %v214
    %v502 = vunpack.c.l.b16 %v215
    %v503 = vunpack.c.h.b16 %v215
    %v504 = vunpack.c.l.b16 %v216
    %v505 = vunpack.c.h.b16 %v216
    %v506 = vunpack.c.l.b16 %v217
    %v507 = vunpack.c.h.b16 %v217
    %v508 = vunpack.c.l.b16 %v218
    %v509 = vunpack.c.h.b16 %v218
    %v510 = vunpack.c.l.b16 %v219
    %v511 = vunpack.c.h.b16 %v219
    %v512 = vunpack.c.l.b16 %v220
    %v513 = vunpack.c.h.b16 %v220
    %v514 = vunpack.c.l.b16 %v221
    %v515 = vunpack.c.h.b16 %v221
    %v516 = vunpack.c.l.b16 %v222
    %v517 = vunpack.c.h.b16 %v222
    %v518 = vunpack.c.l.b16 %v223
    %v519 = vunpack.c.h.b16 %v223
    %v520 = vunpack.c.l.b16 %v224
    %v521 = vunpack.c.h.b16 %v224
    %v522 = vunpack.c.l.b16 %v225
    %v523 = vunpack.c.h.b16 %v225
    %v524 = vunpack.c.l.b16 %v226
    %v525 = vunpack.c.h.b16 %v226
    %v526 = vunpack.c.l.b16 %v227
    %v527 = vunpack.c.h.b16 %v227
    %v528 = vunpack.c.l.b16 %v228
    %v529 = vunpack.c.h.b16 %v228
    %v530 = vunpack.c.l.b16 %v229
    %v531 = vunpack.c.h.b16 %v229
    %v532 = vunpack.c.l.b16 %v230
    %v533 = vunpack.c.h.b16 %v230
    %v534 = vunpack.c.l.b16 %v231
    %v535 = vunpack.c.h.b16 %v231
    %v536 = vunpack.c.l.b16 %v232
    %v537 = vunpack.c.h.b16 %v232
    %v538 = vunpack.c.l.b16 %v233
    %v539 = vunpack.c.h.b16 %v233
    %v540 = vunpack.c.l.b16 %v234
    %v541 = vunpack.c.h.b16 %v234
    %v542 = vunpack.c.l.b16 %v235
    %v543 = vunpack.c.h.b16 %v235
    %v544 = vunpack.c.l.b16 %v236
    %v545 = vunpack.c.h.b16 %v236
    %v546 = vunpack.c.l.b16 %v237
    %v547 = vunpack.c.h.b16 %v237
    %v548 = vunpack.c.l.b16 %v238
    %v549 = vunpack.c.h.b16 %v238
    %v550 = vunpack.c.l.b16 %v239
    %v551 = vunpack.c.h.b16 %v239
    %v552 = vunpack.c.l.b16 %v240
    %v553 = vunpack.c.h.b16 %v240
    %v554 = vunpack.c.l.b16 %v241
    %v555 = vunpack.c.h.b16 %v241
    %v556 = vunpack.c.l.b16 %v242
    %v557 = vunpack.c.h.b16 %v242
    %v558 = vunpack.c.l.b16 %v243
    %v559 = vunpack.c.h.b16 %v243
    %v560 = vunpack.c.l.b16 %v244
    %v561 = vunpack.c.h.b16 %v244
    %v562 = vunpack.c.l.b16 %v245
    %v563 = vunpack.c.h.b16 %v245
    %v564 = vunpack.c.l.b16 %v246
    %v565 = vunpack.c.h.b16 %v246
    %v566 = vunpack.c.l.b16 %v247
    %v567 = vunpack.c.h.b16 %v247
    %v568 = vunpack.c.l.b16 %v248
    %v569 = vunpack.c.h.b16 %v248
    %v570 = vunpack.c.l.b16 %v249
    %v571 = vunpack.c.h.b16 %v249
    %v572 = vunpack.c.l.b16 %v250
    %v573 = vunpack.c.h.b16 %v250
    %v574 = vunpack.c.l.b16 %v251
    %v575 = vunpack.c.h.b16 %v251
    %v576 = vunpack.c.l.b16 %v252
    %v577 = vunpack.c.h.b16 %v252
    %v578 = vunpack.c.l.b16 %v253
    %v579 = vunpack.c.h.b16 %v253
    %v580 = vunpack.c.l.b16 %v254
    %v581 = vunpack.c.h.b16 %v254
    %v582 = vunpack.c.l.b16 %v255
    %v583 = vunpack.c.h.b16 %v255
    %v584 = vunpack.c.l.b16 %v256
    %v585 = vunpack.c.h.b16 %v256
    %v586 = vunpack.c.l.b16 %v257
    %v587 = vunpack.c.h.b16 %v257
    %v588 = vunpack.c.l.b16 %v258
    %v589 = vunpack.c.h.b16 %v258
    %v590 = vunpack.c.l.b16 %v259
    %v591 = vunpack.c.h.b16 %v259
    %v592 = vunpack.c.l.b16 %v260
    %v593 = vunpack.c.h.b16 %v260
    %v594 = vunpack.c.l.b16 %v261
    %v595 = vunpack.c.h.b16 %v261
    %v596 = vunpack.c.l.b16 %v262
    %v597 = vunpack.c.h.b16 %v262
    %v598 = vunpack.c.l.b16 %v263
    %v599 = vunpack.c.h.b16 %v263
    %v600 = vunpack.c.l.b16 %v264
    %v601 = vunpack.c.h.b16 %v264
    %v602 = vunpack.c.l.b16 %v265
    %v603 = vunpack.c.h.b16 %v265
    %v604 = vunpack.c.l.b16 %v266
    %v605 = vunpack.c.h.b16 %v266
    %v606 = vunpack.c.l.b16 %v267
    %v607 = vunpack.c.h.b16 %v267
    %v608 = vunpack.c.l.b16 %v268
    %v609 = vunpack.c.h.b16 %v268
    %v610 = vunpack.c.l.b16 %v269
    %v611 = vunpack.c.h.b16 %v269
    %v612 = vunpack.c.l.b16 %v270
    %v613 = vunpack.c.h.b16 %v270
    %v614 = vunpack.c.l.b16 %v271
    %v615 = vunpack.c.h.b16 %v271
    %v616 = vunpack.c.l.b16 %v272
    %v617 = vunpack.c.h.b16 %v272
    %v618 = vunpack.c.l.b16 %v273
    %v619 = vunpack.c.h.b16 %v273
    %v620 = vunpack.c.l.b16 %v274
    %v621 = vunpack.c.h.b16 %v274
    %v622 = vunpack.c.l.b16 %v275
    %v623 = vunpack.c.h.b16 %v275
    %v624 = vunpack.c.l.b16 %v276
    %v625 = vunpack.c.h.b16 %v276
    %v626 = vunpack.c.l.b16 %v277
    %v627 = vunpack.c.h.b16 %v277
    %v628 = vunpack.c.l.b16 %v278
    %v629 = vunpack.c.h.b16 %v278
    %v630 = vunpack.c.l.b16 %v279
    %v631 = vunpack.c.h.b16 %v279
    %v632 = vunpack.c.l.b16 %v280
    %v633 = vunpack.c.h.b16 %v280
    %v634 = vunpack.c.l.b16 %v281
    %v635 = vunpack.c.h.b16 %v281
    %v636 = vunpack.c.l.b16 %v282
    %v637 = vunpack.c.h.b16 %v282
    %v638 = vunpack.c.l.b16 %v283
    %v639 = vunpack.c.h.b16 %v283
    %v640 = vunpack.c.l.b16 %v284
    %v641 = vunpack.c.h.b16 %v284
    %v642 = vunpack.c.l.b16 %v285
    %v643 = vunpack.c.h.b16 %v285
    %v644 = vunpack.c.l.b16 %v286
    %v645 = vunpack.c.h.b16 %v286
    %v646 = vunpack.c.l.b16 %v287
    %v647 = vunpack.c.h.b16 %v287
    %v648 = vunpack.c.l.b16 %v288
    %v649 = vunpack.c.h.b16 %v288
    %v650 = vunpack.c.l.b16 %v289
    %v651 = vunpack.c.h.b16 %v289
    %v652 = vunpack.c.l.b16 %v290
    %v653 = vunpack.c.h.b16 %v290
    %v654 = vunpack.c.l.b16 %v291
    %v655 = vunpack.c.h.b16 %v291
    %v656 = vunpack.c.l.b16 %v292
    %v657 = vunpack.c.h.b16 %v292
    %v658 = vunpack.c.l.b16 %v293
    %v659 = vunpack.c.h.b16 %v293
    %v660 = vunpack.c.l.b16 %v294
    %v661 = vunpack.c.h.b16 %v294
    %v662 = vunpack.c.l.b16 %v295
    %v663 = vunpack.c.h.b16 %v295
    %v664 = vunpack.c.l.b16 %v296
    %v665 = vunpack.c.h.b16 %v296
    %v666 = vunpack.c.l.b16 %v297
    %v667 = vunpack.c.h.b16 %v297
    %v668 = vunpack.c.l.b16 %v298
    %v669 = vunpack.c.h.b16 %v298
    %v670 = vunpack.c.l.b16 %v299
    %v671 = vunpack.c.h.b16 %v299
    %v672 = vunpack.c.l.b16 %v300
    %v673 = vunpack.c.h.b16 %v300
    %v674 = vunpack.c.l.b16 %v301
    %v675 = vunpack.c.h.b16 %v301
    %v676 = vunpack.c.l.b16 %v302
    %v677 = vunpack.c.h.b16 %v302
    %v678 = vunpack.c.l.b16 %v303
    %v679 = vunpack.c.h.b16 %v303
    %v680 = vunpack.c.l.b16 %v304
    %v681 = vunpack.c.h.b16 %v304
    %v682 = vunpack.c.l.b16 %v305
    %v683 = vunpack.c.h.b16 %v305
    %v684 = vunpack.c.l.b16 %v306
    %v685 = vunpack.c.h.b16 %v306
    %v686 = vunpack.c.l.b16 %v307
    %v687 = vunpack.c.h.b16 %v307
    %v688 = vunpack.c.l.b16 %v308
    %v689 = vunpack.c.h.b16 %v308
    %v690 = vunpack.c.l.b16 %v309
    %v691 = vunpack.c.h.b16 %v309
    %v692 = vunpack.c.l.b16 %v310
    %v693 = vunpack.c.h.b16 %v310
    %v694 = vunpack.c.l.b16 %v311
    %v695 = vunpack.c.h.b16 %v311
    %v696 = vunpack.c.l.b16 %v312
    %v697 = vunpack.c.h.b16 %v312
    %v698 = vunpack.c.l.b16 %v313
    %v699 = vunpack.c.h.b16 %v313
    %v700 = vunpack.c.l.b16 %v314
    %v701 = vunpack.c.h.b16 %v314
    %v702 = vunpack.c.l.b16 %v315
    %v703 = vunpack.c.h.b16 %v315
    %v704 = vunpack.c.l.b16 %v316
    %v705 = vunpack.c.h.b16 %v316
    %v706 = vunpack.c.l.b16 %v317
    %v707 = vunpack.c.h.b16 %v317
    %v708 = vunpack.c.l.b16 %v318
    %v709 = vunpack.c.h.b16 %v318
    %v710 = vunpack.c.l.b16 %v319
    %v711 = vunpack.c.h.b16 %v319
    %v712 = vunpack.c.l.b16 %v320
    %v713 = vunpack.c.h.b16 %v320
    %v714 = vunpack.c.l.b16 %v321
    %v715 = vunpack.c.h.b16 %v321
    %v716 = vunpack.c.l.b16 %v322
    %v717 = vunpack.c.h.b16 %v322
    %v718 = vunpack.c.l.b16 %v323
    %v719 = vunpack.c.h.b16 %v323
    %v720 = vunpack.c.l.b16 %v324
    %v721 = vunpack.c.h.b16 %v324
    %v722 = vunpack.c.l.b16 %v325
    %v723 = vunpack.c.h.b16 %v325
    %v724 = vunpack.c.l.b16 %v326
    %v725 = vunpack.c.h.b16 %v326
    %v726 = vunpack.c.l.b16 %v327
    %v727 = vunpack.c.h.b16 %v327
    %v728 = vunpack.c.l.b16 %v328
    %v729 = vunpack.c.h.b16 %v328
    %v730 = vunpack.c.l.b16 %v329
    %v731 = vunpack.c.h.b16 %v329
    %v732 = vunpack.c.l.b16 %v330
    %v733 = vunpack.c.h.b16 %v330
    %v734 = vunpack.c.l.b16 %v331
    %v735 = vunpack.c.h.b16 %v331
    %v736 = vunpack.c.l.b16 %v332
    %v737 = vunpack.c.h.b16 %v332
    %v738 = vunpack.c.l.b16 %v333
    %v739 = vunpack.c.h.b16 %v333
    %v740 = vpack.c.b16 %v488, %v484
    %v741 = vpack.c.b16 %v489, %v485
    %v742 = vpack.c.b16 %v490, %v486
    %v743 = vpack.c.b16 %v491, %v487
    %v744 = vpack.c.b16 %v496, %v492
    %v745 = vpack.c.b16 %v497, %v493
    %v746 = vpack.c.b16 %v498, %v494
    %v747 = vpack.c.b16 %v499, %v495
    %v748 = vpack.c.b16 %v504, %v500
    %v749 = vpack.c.b16 %v505, %v501
    %v750 = vpack.c.b16 %v506, %v502
    %v751 = vpack.c.b16 %v507, %v503
    %v752 = vpack.c.b16 %v512, %v508
    %v753 = vpack.c.b16 %v513, %v509
    %v754 = vpack.c.b16 %v514, %v510
    %v755 = vpack.c.b16 %v515, %v511
    %v756 = vpack.c.b16 %v520, %v516
    %v757 = vpack.c.b16 %v521, %v517
    %v758 = vpack.c.b16 %v522, %v518
    %v759 = vpack.c.b16 %v523, %v519
    %v760 = vpack.c.b16 %v528, %v524
    %v761 = vpack.c.b16 %v529, %v525
    %v762 = vpack.c.b16 %v530, %v526
    %v763 = vpack.c.b16 %v531, %v527
    %v764 = vpack.c.b16 %v536, %v532
    %v765 = vpack.c.b16 %v537, %v533
    %v766 = vpack.c.b16 %v538, %v534
    %v767 = vpack.c.b16 %v539, %v535
    %v768 = vpack.c.b16 %v544, %v540
    %v769 = vpack.c.b16 %v545, %v541
    %v770 = vpack.c.b16 %v546, %v542
    %v771 = vpack.c.b16 %v547, %v543
    %v772 = vpack.c.b16 %v552, %v548
    %v773 = vpack.c.b16 %v553, %v549
    %v774 = vpack.c.b16 %v554, %v550
    %v775 = vpack.c.b16 %v555, %v551
    %v776 = vpack.c.b16 %v560, %v556
    %v777 = vpack.c.b16 %v561, %v557
    %v778 = vpack.c.b16 %v562, %v558
    %v779 = vpack.c.b16 %v563, %v559
    %v780 = vpack.c.b16 %v568, %v564
    %v781 = vpack.c.b16 %v569, %v565
    %v782 = vpack.c.b16 %v570, %v566
    %v783 = vpack.c.b16 %v571, %v567
    %v784 = vpack.c.b16 %v576, %v572
    %v785 = vpack.c.b16 %v577, %v573
    %v786 = vpack.c.b16 %v578, %v574
    %v787 = vpack.c.b16 %v579, %v575
    %v788 = vpack.c.b16 %v584, %v580
    %v789 = vpack.c.b16 %v585, %v581
    %v790 = vpack.c.b16 %v586, %v582
    %v791 = vpack.c.b16 %v587, %v583
    %v792 = vpack.c.b16 %v592, %v588
    %v793 = vpack.c.b16 %v593, %v589
    %v794 = vpack.c.b16 %v594, %v590
    %v795 = vpack.c.b16 %v595, %v591
    %v796 = vpack.c.b16 %v600, %v596
    %v797 = vpack.c.b16 %v601, %v597
    %v798 = vpack.c.b16 %v602, %v598
    %v799 = vpack.c.b16 %v603, %v599
    %v800 = vpack.c.b16 %v608, %v604
    %v801 = vpack.c.b16 %v609, %v605
    %v802 = vpack.c.b16 %v610, %v606
    %v803 = vpack.c.b16 %v611, %v607
    %v804 = vpack.c.b16 %v616, %v612
    %v805 = vpack.c.b16 %v617, %v613
    %v806 = vpack.c.b16 %v618, %v614
    %v807 = vpack.c.b16 %v619, %v615
    %v808 = vpack.c.b16 %v624, %v620
    %v809 = vpack.c.b16 %v625, %v621
    %v810 = vpack.c.b16 %v626, %v622
    %v811 = vpack.c.b16 %v627, %v623
    %v812 = vpack.c.b16 %v632, %v628
    %v813 = vpack.c.b16 %v633, %v629
    %v814 = vpack.c.b16 %v634, %v630
    %v815 = vpack.c.b16 %v635, %v631
    %v816 = vpack.c.b16 %v640, %v636
    %v817 = vpack.c.b16 %v641, %v637
    %v818 = vpack.c.b16 %v642, %v638
    %v819 = vpack.c.b16 %v643, %v639
    %v820 = vpack.c.b16 %v648, %v644
    %v821 = vpack.c.b16 %v649, %v645
    %v822 = vpack.c.b16 %v650, %v646
    %v823 = vpack.c.b16 %v651, %v647
    %v824 = vpack.c.b16 %v656, %v652
    %v825 = vpack.c.b16 %v657, %v653
    %v826 = vpack.c.b16 %v658, %v654
    %v827 = vpack.c.b16 %v659, %v655
    %v828 = vpack.c.b16 %v664, %v660
    %v829 = vpack.c.b16 %v665, %v661
    %v830 = vpack.c.b16 %v666, %v662
    %v831 = vpack.c.b16 %v667, %v663
    %v832 = vpack.c.b16 %v672, %v668
    %v833 = vpack.c.b16 %v673, %v669
    %v834 = vpack.c.b16 %v674, %v670
    %v835 = vpack.c.b16 %v675, %v671
    %v836 = vpack.c.b16 %v680, %v676
    %v837 = vpack.c.b16 %v681, %v677
    %v838 = vpack.c.b16 %v682, %v678
    %v839 = vpack.c.b16 %v683, %v679
    %v840 = vpack.c.b16 %v688, %v684
    %v841 = vpack.c.b16 %v689, %v685
    %v842 = vpack.c.b16 %v690, %v686
    %v843 = vpack.c.b16 %v691, %v687
    %v844 = vpack.c.b16 %v696, %v692
    %v845 = vpack.c.b16 %v697, %v693
    %v846 = vpack.c.b16 %v698, %v694
    %v847 = vpack.c.b16 %v699, %v695
    %v848 = vpack.c.b16 %v704, %v700
    %v849 = vpack.c.b16 %v705, %v701
    %v850 = vpack.c.b16 %v706, %v702
    %v851 = vpack.c.b16 %v707, %v703
    %v852 = vpack.c.b16 %v712, %v708
    %v853 = vpack.c.b16 %v713, %v709
    %v854 = vpack.c.b16 %v714, %v710
    %v855 = vpack.c.b16 %v715, %v711
    %v856 = vpack.c.b16 %v720, %v716
    %v857 = vpack.c.b16 %v721, %v717
    %v858 = vpack.c.b16 %v722, %v718
    %v859 = vpack.c.b16 %v723, %v719
    %v860 = vpack.c.b16 %v728, %v724
    %v861 = vpack.c.b16 %v729, %v725
    %v862 = vpack.c.b16 %v730, %v726
    %v863 = vpack.c.b16 %v731, %v727
    %v864 = vpack.c.b16 %v736, %v732
    %v865 = vpack.c.b16 %v737, %v733
    %v866 = vpack.c.b16 %v738, %v734
    %v867 = vpack.c.b16 %v739, %v735
    %996 = vmatprep.subr.bf16.mxu0 %v741
    %997 = vmatpush1.bf16.msra.mxu0 %v740
    %998 = vmatprep.subr.bf16.mxu0 %v745
    %999 = vmatpush1.bf16.msra.mxu0 %v744
    %1000 = vmatprep.subr.bf16.mxu0 %v749
    %1001 = vmatpush1.bf16.msra.mxu0 %v748
    %1002 = vmatprep.subr.bf16.mxu0 %v753
    %1003 = vmatpush1.bf16.msra.mxu0 %v752
    %1004 = vmatprep.subr.bf16.mxu0 %v757
    %1005 = vmatpush1.bf16.msra.mxu0 %v756
    %1006 = vmatprep.subr.bf16.mxu0 %v761
    %1007 = vmatpush1.bf16.msra.mxu0 %v760
    %1008 = vmatprep.subr.bf16.mxu0 %v765
    %1009 = vmatpush1.bf16.msra.mxu0 %v764
    %1010 = vmatprep.subr.bf16.mxu0 %v769
    %1011 = vmatpush1.bf16.msra.mxu0 %v768
    %1012 = vmatprep.subr.bf16.mxu0 %v773
    %1013 = vmatpush1.bf16.msra.mxu0 %v772
    %1014 = vmatprep.subr.bf16.mxu0 %v777
    %1015 = vmatpush1.bf16.msra.mxu0 %v776
    %1016 = vmatprep.subr.bf16.mxu0 %v781
    %1017 = vmatpush1.bf16.msra.mxu0 %v780
    %1018 = vmatprep.subr.bf16.mxu0 %v785
    %1019 = vmatpush1.bf16.msra.mxu0 %v784
    %1020 = vmatprep.subr.bf16.mxu0 %v789
    %1021 = vmatpush1.bf16.msra.mxu0 %v788
    %1022 = vmatprep.subr.bf16.mxu0 %v793
    %1023 = vmatpush1.bf16.msra.mxu0 %v792
    %1024 = vmatprep.subr.bf16.mxu0 %v797
    %1025 = vmatpush1.bf16.msra.mxu0 %v796
    %1026 = vmatprep.subr.bf16.mxu0 %v801
    %1027 = vmatpush1.bf16.msra.mxu0 %v800
    %1028 = vmatprep.mubr.bf16.mxu0 %v199
    %1029 = vmatmul.mubr.bf16.gmra.mrb[0].mxu0 %v198
    %v1030 = vpop.f32.mrb[0].mxu0
    %v1031 = vadd.f32 %v339, %v1030
    %v1032 = vpop.f32.mrb[0].mxu0
    %v1033 = vadd.f32 %v343, %v1032
    %v1034 = vpop.f32.mrb[0].mxu0
    %v1035 = vadd.f32 %v339, %v1034
    %v1036 = vpop.f32.mrb[0].mxu0
    %v1037 = vadd.f32 %v343, %v1036
    %1038 = vmatprep.mubr.bf16.mxu0 %v203
    %1039 = vmatmul.mubr.bf16.gmra.mrb[0].mxu0 %v202
    %v1040 = vpop.f32.mrb[0].mxu0
    %v1041 = vadd.f32 %v339, %v1040
    %v1042 = vpop.f32.mrb[0].mxu0
    %v1043 = vadd.f32 %v343, %v1042
    %v1044 = vpop.f32.mrb[0].mxu0
    %v1045 = vadd.f32 %v339, %v1044
    %v1046 = vpop.f32.mrb[0].mxu0
    %v1047 = vadd.f32 %v343, %v1046
    %1048 = vdwg.mxu0
    %1049 = vmatprep.subr.bf16.mxu0 %v805
    %1050 = vmatpush1.bf16.msra.mxu0 %v804
    %1051 = vmatprep.subr.bf16.mxu0 %v809
    %1052 = vmatpush1.bf16.msra.mxu0 %v808
    %1053 = vmatprep.subr.bf16.mxu0 %v813
    %1054 = vmatpush1.bf16.msra.mxu0 %v812
    %1055 = vmatprep.subr.bf16.mxu0 %v817
    %1056 = vmatpush1.bf16.msra.mxu0 %v816
    %1057 = vmatprep.subr.bf16.mxu0 %v821
    %1058 = vmatpush1.bf16.msra.mxu0 %v820
    %1059 = vmatprep.subr.bf16.mxu0 %v825
    %1060 = vmatpush1.bf16.msra.mxu0 %v824
    %1061 = vmatprep.subr.bf16.mxu0 %v829
    %1062 = vmatpush1.bf16.msra.mxu0 %v828
    %1063 = vmatprep.subr.bf16.mxu0 %v833
    %1064 = vmatpush1.bf16.msra.mxu0 %v832
    %1065 = vmatprep.subr.bf16.mxu0 %v837
    %1066 = vmatpush1.bf16.msra.mxu0 %v836
    %1067 = vmatprep.subr.bf16.mxu0 %v841
    %1068 = vmatpush1.bf16.msra.mxu0 %v840
    %1069 = vmatprep.subr.bf16.mxu0 %v845
    %1070 = vmatpush1.bf16.msra.mxu0 %v844
    %1071 = vmatprep.subr.bf16.mxu0 %v849
    %1072 = vmatpush1.bf16.msra.mxu0 %v848
    %1073 = vmatprep.subr.bf16.mxu0 %v853
    %1074 = vmatpush1.bf16.msra.mxu0 %v852
    %1075 = vmatprep.subr.bf16.mxu0 %v857
    %1076 = vmatpush1.bf16.msra.mxu0 %v856
    %1077 = vmatprep.subr.bf16.mxu0 %v861
    %1078 = vmatpush1.bf16.msra.mxu0 %v860
    %1079 = vmatprep.subr.bf16.mxu0 %v865
    %1080 = vmatpush1.bf16.msra.mxu0 %v864
    %1081 = vmatprep.mubr.bf16.mxu0 %v201
    %1082 = vmatmul.mubr.bf16.gmra.mrb[0].mxu0 %v200
    %v1083 = vpop.f32.mrb[0].mxu0
    %v1084 = vadd.f32 %v1031, %v1083
    %v1085 = vpop.f32.mrb[0].mxu0
    %v1086 = vadd.f32 %v1033, %v1085
    %v1087 = vpop.f32.mrb[0].mxu0
    %v1088 = vadd.f32 %v1035, %v1087
    %v1089 = vpop.f32.mrb[0].mxu0
    %v1090 = vadd.f32 %v1037, %v1089
    %1091 = vmatprep.mubr.bf16.mxu0 %v205
    %1092 = vmatmul.mubr.bf16.gmra.mrb[0].mxu0 %v204
    %v1093 = vpop.f32.mrb[0].mxu0
    %v1094 = vadd.f32 %v1041, %v1093
    %v1095 = vpop.f32.mrb[0].mxu0
    %v1096 = vadd.f32 %v1043, %v1095
    %v1097 = vpop.f32.mrb[0].mxu0
    %v1098 = vadd.f32 %v1045, %v1097
    %v1099 = vpop.f32.mrb[0].mxu0
    %v1100 = vadd.f32 %v1047, %v1099
    %1101 = vdwg.mxu0
    %1102 = vmatprep.subr.bf16.mxu0 %v743
    %1103 = vmatpush1.bf16.msra.mxu0 %v742
    %1104 = vmatprep.subr.bf16.mxu0 %v747
    %1105 = vmatpush1.bf16.msra.mxu0 %v746
    %1106 = vmatprep.subr.bf16.mxu0 %v751
    %1107 = vmatpush1.bf16.msra.mxu0 %v750
    %1108 = vmatprep.subr.bf16.mxu0 %v755
    %1109 = vmatpush1.bf16.msra.mxu0 %v754
    %1110 = vmatprep.subr.bf16.mxu0 %v759
    %1111 = vmatpush1.bf16.msra.mxu0 %v758
    %1112 = vmatprep.subr.bf16.mxu0 %v763
    %1113 = vmatpush1.bf16.msra.mxu0 %v762
    %1114 = vmatprep.subr.bf16.mxu0 %v767
    %1115 = vmatpush1.bf16.msra.mxu0 %v766
    %1116 = vmatprep.subr.bf16.mxu0 %v771
    %1117 = vmatpush1.bf16.msra.mxu0 %v770
    %1118 = vmatprep.subr.bf16.mxu0 %v775
    %1119 = vmatpush1.bf16.msra.mxu0 %v774
    %1120 = vmatprep.subr.bf16.mxu0 %v779
    %1121 = vmatpush1.bf16.msra.mxu0 %v778
    %1122 = vmatprep.subr.bf16.mxu0 %v783
    %1123 = vmatpush1.bf16.msra.mxu0 %v782
    %1124 = vmatprep.subr.bf16.mxu0 %v787
    %1125 = vmatpush1.bf16.msra.mxu0 %v786
    %1126 = vmatprep.subr.bf16.mxu0 %v791
    %1127 = vmatpush1.bf16.msra.mxu0 %v790
    %1128 = vmatprep.subr.bf16.mxu0 %v795
    %1129 = vmatpush1.bf16.msra.mxu0 %v794
    %1130 = vmatprep.subr.bf16.mxu0 %v799
    %1131 = vmatpush1.bf16.msra.mxu0 %v798
    %1132 = vmatprep.subr.bf16.mxu0 %v803
    %1133 = vmatpush1.bf16.msra.mxu0 %v802
    %1134 = vmatprep.mubr.bf16.mxu0 %v199
    %1135 = vmatmul.mubr.bf16.gmra.mrb[0].mxu0 %v198
    %v1136 = vpop.f32.mrb[0].mxu0
    %v1137 = vadd.f32 %v347, %v1136
    %v1138 = vpop.f32.mrb[0].mxu0
    %v1139 = vadd.f32 %v351, %v1138
    %v1140 = vpop.f32.mrb[0].mxu0
    %v1141 = vadd.f32 %v347, %v1140
    %v1142 = vpop.f32.mrb[0].mxu0
    %v1143 = vadd.f32 %v351, %v1142
    %1144 = vmatprep.mubr.bf16.mxu0 %v203
    %1145 = vmatmul.mubr.bf16.gmra.mrb[0].mxu0 %v202
    %v1146 = vpop.f32.mrb[0].mxu0
    %v1147 = vadd.f32 %v347, %v1146
    %v1148 = vpop.f32.mrb[0].mxu0
    %v1149 = vadd.f32 %v351, %v1148
    %v1150 = vpop.f32.mrb[0].mxu0
    %v1151 = vadd.f32 %v347, %v1150
    %v1152 = vpop.f32.mrb[0].mxu0
    %v1153 = vadd.f32 %v351, %v1152
    %1154 = vdwg.mxu0
    %1155 = vmatprep.subr.bf16.mxu0 %v807
    %1156 = vmatpush1.bf16.msra.mxu0 %v806
    %1157 = vmatprep.subr.bf16.mxu0 %v811
    %1158 = vmatpush1.bf16.msra.mxu0 %v810
    %1159 = vmatprep.subr.bf16.mxu0 %v815
    %1160 = vmatpush1.bf16.msra.mxu0 %v814
    %1161 = vmatprep.subr.bf16.mxu0 %v819
    %1162 = vmatpush1.bf16.msra.mxu0 %v818
    %1163 = vmatprep.subr.bf16.mxu0 %v823
    %1164 = vmatpush1.bf16.msra.mxu0 %v822
    %1165 = vmatprep.subr.bf16.mxu0 %v827
    %1166 = vmatpush1.bf16.msra.mxu0 %v826
    %1167 = vmatprep.subr.bf16.mxu0 %v831
    %1168 = vmatpush1.bf16.msra.mxu0 %v830
    %1169 = vmatprep.subr.bf16.mxu0 %v835
    %1170 = vmatpush1.bf16.msra.mxu0 %v834
    %1171 = vmatprep.subr.bf16.mxu0 %v839
    %1172 = vmatpush1.bf16.msra.mxu0 %v838
    %1173 = vmatprep.subr.bf16.mxu0 %v843
    %1174 = vmatpush1.bf16.msra.mxu0 %v842
    %1175 = vmatprep.subr.bf16.mxu0 %v847
    %1176 = vmatpush1.bf16.msra.mxu0 %v846
    %1177 = vmatprep.subr.bf16.mxu0 %v851
    %1178 = vmatpush1.bf16.msra.mxu0 %v850
    %1179 = vmatprep.subr.bf16.mxu0 %v855
    %1180 = vmatpush1.bf16.msra.mxu0 %v854
    %1181 = vmatprep.subr.bf16.mxu0 %v859
    %1182 = vmatpush1.bf16.msra.mxu0 %v858
    %1183 = vmatprep.subr.bf16.mxu0 %v863
    %1184 = vmatpush1.bf16.msra.mxu0 %v862
    %1185 = vmatprep.subr.bf16.mxu0 %v867
    %1186 = vmatpush1.bf16.msra.mxu0 %v866
    %1187 = vmatprep.mubr.bf16.mxu0 %v201
    %1188 = vmatmul.mubr.bf16.gmra.mrb[0].mxu0 %v200
    %v1189 = vpop.f32.mrb[0].mxu0
    %v1190 = vadd.f32 %v1137, %v1189
    %v1191 = vpop.f32.mrb[0].mxu0
    %v1192 = vadd.f32 %v1139, %v1191
    %v1193 = vpop.f32.mrb[0].mxu0
    %v1194 = vadd.f32 %v1141, %v1193
    %v1195 = vpop.f32.mrb[0].mxu0
    %v1196 = vadd.f32 %v1143, %v1195
    %1197 = vmatprep.mubr.bf16.mxu0 %v205
    %1198 = vmatmul.mubr.bf16.gmra.mrb[0].mxu0 %v204
    %v1199 = vpop.f32.mrb[0].mxu0
    %v1200 = vadd.f32 %v1147, %v1199
    %v1201 = vpop.f32.mrb[0].mxu0
    %v1202 = vadd.f32 %v1149, %v1201
    %v1203 = vpop.f32.mrb[0].mxu0
    %v1204 = vadd.f32 %v1151, %v1203
    %v1205 = vpop.f32.mrb[0].mxu0
    %v1206 = vadd.f32 %v1153, %v1205
    %1207 = vdwg.mxu0
    %v1208 = vpack.c.bf16 %v170, %v166
    %v1209 = vpack.c.bf16 %v171, %v167
    %v1210 = vpack.c.bf16 %v172, %v168
    %v1211 = vpack.c.bf16 %v173, %v169
    %v1212 = vpack.c.bf16 %v178, %v174
    %v1213 = vpack.c.bf16 %v179, %v175
    %v1214 = vpack.c.bf16 %v180, %v176
    %v1215 = vpack.c.bf16 %v181, %v177
    %s1216 = scalar_lea.vmem [#allocation8], 1024
    %v1217 = vld [vmem:[%s1216] sm:$0xff]
    %v1218 = vld [vmem:[%s1216 + $0x8] sm:$0xff]
    %v1219 = vld [vmem:[%s1216 + $0x10] sm:$0xff]
    %v1220 = vld [vmem:[%s1216 + $0x18] sm:$0xff]
    %v1221 = vld [vmem:[%s1216 + $0x20] sm:$0xff]
    %v1222 = vld [vmem:[%s1216 + $0x28] sm:$0xff]
    %v1223 = vld [vmem:[%s1216 + $0x30] sm:$0xff]
    %v1224 = vld [vmem:[%s1216 + $0x38] sm:$0xff]
    %v1225 = vld [vmem:[%s1216 + $0x40] sm:$0xff]
    %v1226 = vld [vmem:[%s1216 + $0x48] sm:$0xff]
    %v1227 = vld [vmem:[%s1216 + $0x50] sm:$0xff]
    %v1228 = vld [vmem:[%s1216 + $0x58] sm:$0xff]
    %v1229 = vld [vmem:[%s1216 + $0x60] sm:$0xff]
    %v1230 = vld [vmem:[%s1216 + $0x68] sm:$0xff]
    %v1231 = vld [vmem:[%s1216 + $0x70] sm:$0xff]
    %v1232 = vld [vmem:[%s1216 + $0x78] sm:$0xff]
    %v1233 = vld [vmem:[%s1216 + $0x80] sm:$0xff]
    %v1234 = vld [vmem:[%s1216 + $0x88] sm:$0xff]
    %v1235 = vld [vmem:[%s1216 + $0x90] sm:$0xff]
    %v1236 = vld [vmem:[%s1216 + $0x98] sm:$0xff]
    %v1237 = vld [vmem:[%s1216 + $0xa0] sm:$0xff]
    %v1238 = vld [vmem:[%s1216 + $0xa8] sm:$0xff]
    %v1239 = vld [vmem:[%s1216 + $0xb0] sm:$0xff]
    %v1240 = vld [vmem:[%s1216 + $0xb8] sm:$0xff]
    %v1241 = vld [vmem:[%s1216 + $0xc0] sm:$0xff]
    %v1242 = vld [vmem:[%s1216 + $0xc8] sm:$0xff]
    %v1243 = vld [vmem:[%s1216 + $0xd0] sm:$0xff]
    %v1244 = vld [vmem:[%s1216 + $0xd8] sm:$0xff]
    %v1245 = vld [vmem:[%s1216 + $0xe0] sm:$0xff]
    %v1246 = vld [vmem:[%s1216 + $0xe8] sm:$0xff]
    %v1247 = vld [vmem:[%s1216 + $0xf0] sm:$0xff]
    %v1248 = vld [vmem:[%s1216 + $0xf8] sm:$0xff]
    %v1249 = vld [vmem:[%s1216 + $0x100] sm:$0xff]
    %v1250 = vld [vmem:[%s1216 + $0x108] sm:$0xff]
    %v1251 = vld [vmem:[%s1216 + $0x110] sm:$0xff]
    %v1252 = vld [vmem:[%s1216 + $0x118] sm:$0xff]
    %v1253 = vld [vmem:[%s1216 + $0x120] sm:$0xff]
    %v1254 = vld [vmem:[%s1216 + $0x128] sm:$0xff]
    %v1255 = vld [vmem:[%s1216 + $0x130] sm:$0xff]
    %v1256 = vld [vmem:[%s1216 + $0x138] sm:$0xff]
    %v1257 = vld [vmem:[%s1216 + $0x140] sm:$0xff]
    %v1258 = vld [vmem:[%s1216 + $0x148] sm:$0xff]
    %v1259 = vld [vmem:[%s1216 + $0x150] sm:$0xff]
    %v1260 = vld [vmem:[%s1216 + $0x158] sm:$0xff]
    %v1261 = vld [vmem:[%s1216 + $0x160] sm:$0xff]
    %v1262 = vld [vmem:[%s1216 + $0x168] sm:$0xff]
    %v1263 = vld [vmem:[%s1216 + $0x170] sm:$0xff]
    %v1264 = vld [vmem:[%s1216 + $0x178] sm:$0xff]
    %v1265 = vld [vmem:[%s1216 + $0x180] sm:$0xff]
    %v1266 = vld [vmem:[%s1216 + $0x188] sm:$0xff]
    %v1267 = vld [vmem:[%s1216 + $0x190] sm:$0xff]
    %v1268 = vld [vmem:[%s1216 + $0x198] sm:$0xff]
    %v1269 = vld [vmem:[%s1216 + $0x1a0] sm:$0xff]
    %v1270 = vld [vmem:[%s1216 + $0x1a8] sm:$0xff]
    %v1271 = vld [vmem:[%s1216 + $0x1b0] sm:$0xff]
    %v1272 = vld [vmem:[%s1216 + $0x1b8] sm:$0xff]
    %v1273 = vld [vmem:[%s1216 + $0x1c0] sm:$0xff]
    %v1274 = vld [vmem:[%s1216 + $0x1c8] sm:$0xff]
    %v1275 = vld [vmem:[%s1216 + $0x1d0] sm:$0xff]
    %v1276 = vld [vmem:[%s1216 + $0x1d8] sm:$0xff]
    %v1277 = vld [vmem:[%s1216 + $0x1e0] sm:$0xff]
    %v1278 = vld [vmem:[%s1216 + $0x1e8] sm:$0xff]
    %v1279 = vld [vmem:[%s1216 + $0x1f0] sm:$0xff]
    %v1280 = vld [vmem:[%s1216 + $0x1f8] sm:$0xff]
    %v1281 = vld [vmem:[%s1216 + $0x200] sm:$0xff]
    %v1282 = vld [vmem:[%s1216 + $0x208] sm:$0xff]
    %v1283 = vld [vmem:[%s1216 + $0x210] sm:$0xff]
    %v1284 = vld [vmem:[%s1216 + $0x218] sm:$0xff]
    %v1285 = vld [vmem:[%s1216 + $0x220] sm:$0xff]
    %v1286 = vld [vmem:[%s1216 + $0x228] sm:$0xff]
    %v1287 = vld [vmem:[%s1216 + $0x230] sm:$0xff]
    %v1288 = vld [vmem:[%s1216 + $0x238] sm:$0xff]
    %v1289 = vld [vmem:[%s1216 + $0x240] sm:$0xff]
    %v1290 = vld [vmem:[%s1216 + $0x248] sm:$0xff]
    %v1291 = vld [vmem:[%s1216 + $0x250] sm:$0xff]
    %v1292 = vld [vmem:[%s1216 + $0x258] sm:$0xff]
    %v1293 = vld [vmem:[%s1216 + $0x260] sm:$0xff]
    %v1294 = vld [vmem:[%s1216 + $0x268] sm:$0xff]
    %v1295 = vld [vmem:[%s1216 + $0x270] sm:$0xff]
    %v1296 = vld [vmem:[%s1216 + $0x278] sm:$0xff]
    %v1297 = vld [vmem:[%s1216 + $0x280] sm:$0xff]
    %v1298 = vld [vmem:[%s1216 + $0x288] sm:$0xff]
    %v1299 = vld [vmem:[%s1216 + $0x290] sm:$0xff]
    %v1300 = vld [vmem:[%s1216 + $0x298] sm:$0xff]
    %v1301 = vld [vmem:[%s1216 + $0x2a0] sm:$0xff]
    %v1302 = vld [vmem:[%s1216 + $0x2a8] sm:$0xff]
    %v1303 = vld [vmem:[%s1216 + $0x2b0] sm:$0xff]
    %v1304 = vld [vmem:[%s1216 + $0x2b8] sm:$0xff]
    %v1305 = vld [vmem:[%s1216 + $0x2c0] sm:$0xff]
    %v1306 = vld [vmem:[%s1216 + $0x2c8] sm:$0xff]
    %v1307 = vld [vmem:[%s1216 + $0x2d0] sm:$0xff]
    %v1308 = vld [vmem:[%s1216 + $0x2d8] sm:$0xff]
    %v1309 = vld [vmem:[%s1216 + $0x2e0] sm:$0xff]
    %v1310 = vld [vmem:[%s1216 + $0x2e8] sm:$0xff]
    %v1311 = vld [vmem:[%s1216 + $0x2f0] sm:$0xff]
    %v1312 = vld [vmem:[%s1216 + $0x2f8] sm:$0xff]
    %v1313 = vld [vmem:[%s1216 + $0x300] sm:$0xff]
    %v1314 = vld [vmem:[%s1216 + $0x308] sm:$0xff]
    %v1315 = vld [vmem:[%s1216 + $0x310] sm:$0xff]
    %v1316 = vld [vmem:[%s1216 + $0x318] sm:$0xff]
    %v1317 = vld [vmem:[%s1216 + $0x320] sm:$0xff]
    %v1318 = vld [vmem:[%s1216 + $0x328] sm:$0xff]
    %v1319 = vld [vmem:[%s1216 + $0x330] sm:$0xff]
    %v1320 = vld [vmem:[%s1216 + $0x338] sm:$0xff]
    %v1321 = vld [vmem:[%s1216 + $0x340] sm:$0xff]
    %v1322 = vld [vmem:[%s1216 + $0x348] sm:$0xff]
    %v1323 = vld [vmem:[%s1216 + $0x350] sm:$0xff]
    %v1324 = vld [vmem:[%s1216 + $0x358] sm:$0xff]
    %v1325 = vld [vmem:[%s1216 + $0x360] sm:$0xff]
    %v1326 = vld [vmem:[%s1216 + $0x368] sm:$0xff]
    %v1327 = vld [vmem:[%s1216 + $0x370] sm:$0xff]
    %v1328 = vld [vmem:[%s1216 + $0x378] sm:$0xff]
    %v1329 = vld [vmem:[%s1216 + $0x380] sm:$0xff]
    %v1330 = vld [vmem:[%s1216 + $0x388] sm:$0xff]
    %v1331 = vld [vmem:[%s1216 + $0x390] sm:$0xff]
    %v1332 = vld [vmem:[%s1216 + $0x398] sm:$0xff]
    %v1333 = vld [vmem:[%s1216 + $0x3a0] sm:$0xff]
    %v1334 = vld [vmem:[%s1216 + $0x3a8] sm:$0xff]
    %v1335 = vld [vmem:[%s1216 + $0x3b0] sm:$0xff]
    %v1336 = vld [vmem:[%s1216 + $0x3b8] sm:$0xff]
    %v1337 = vld [vmem:[%s1216 + $0x3c0] sm:$0xff]
    %v1338 = vld [vmem:[%s1216 + $0x3c8] sm:$0xff]
    %v1339 = vld [vmem:[%s1216 + $0x3d0] sm:$0xff]
    %v1340 = vld [vmem:[%s1216 + $0x3d8] sm:$0xff]
    %v1341 = vld [vmem:[%s1216 + $0x3e0] sm:$0xff]
    %v1342 = vld [vmem:[%s1216 + $0x3e8] sm:$0xff]
    %v1343 = vld [vmem:[%s1216 + $0x3f0] sm:$0xff]
    %v1344 = vld [vmem:[%s1216 + $0x3f8] sm:$0xff]
    %s1345 = scalar_lea.vmem [#allocation10], 4
    %v1346 = vld [vmem:[%s1345] sm:$0xf]
    %v1348 = vlaneseq
    %v1349 = vshrl.u32 %v1348, 7
    %v1350 = vsub.s32 0, %v1349
    %v1351 = vrot.slane %v1346, %v1350
    %v1352 = vlaneseq
    %v1353 = vshrl.u32 %v1352, 7
    %v1354 = vsub.s32 1, %v1353
    %v1355 = vrot.slane %v1346, %v1354
    %v1356 = vlaneseq
    %v1357 = vshrl.u32 %v1356, 7
    %v1358 = vsub.s32 2, %v1357
    %v1359 = vrot.slane %v1346, %v1358
    %v1360 = vlaneseq
    %v1361 = vshrl.u32 %v1360, 7
    %v1362 = vsub.s32 3, %v1361
    %v1363 = vrot.slane %v1346, %v1362
    %v1496 = vunpack.c.l.b16 %v1217
    %v1497 = vunpack.c.h.b16 %v1217
    %v1498 = vunpack.c.l.b16 %v1218
    %v1499 = vunpack.c.h.b16 %v1218
    %v1500 = vunpack.c.l.b16 %v1219
    %v1501 = vunpack.c.h.b16 %v1219
    %v1502 = vunpack.c.l.b16 %v1220
    %v1503 = vunpack.c.h.b16 %v1220
    %v1504 = vunpack.c.l.b16 %v1221
    %v1505 = vunpack.c.h.b16 %v1221
    %v1506 = vunpack.c.l.b16 %v1222
    %v1507 = vunpack.c.h.b16 %v1222
    %v1508 = vunpack.c.l.b16 %v1223
    %v1509 = vunpack.c.h.b16 %v1223
    %v1510 = vunpack.c.l.b16 %v1224
    %v1511 = vunpack.c.h.b16 %v1224
    %v1512 = vunpack.c.l.b16 %v1225
    %v1513 = vunpack.c.h.b16 %v1225
    %v1514 = vunpack.c.l.b16 %v1226
    %v1515 = vunpack.c.h.b16 %v1226
    %v1516 = vunpack.c.l.b16 %v1227
    %v1517 = vunpack.c.h.b16 %v1227
    %v1518 = vunpack.c.l.b16 %v1228
    %v1519 = vunpack.c.h.b16 %v1228
    %v1520 = vunpack.c.l.b16 %v1229
    %v1521 = vunpack.c.h.b16 %v1229
    %v1522 = vunpack.c.l.b16 %v1230
    %v1523 = vunpack.c.h.b16 %v1230
    %v1524 = vunpack.c.l.b16 %v1231
    %v1525 = vunpack.c.h.b16 %v1231
    %v1526 = vunpack.c.l.b16 %v1232
    %v1527 = vunpack.c.h.b16 %v1232
    %v1528 = vunpack.c.l.b16 %v1233
    %v1529 = vunpack.c.h.b16 %v1233
    %v1530 = vunpack.c.l.b16 %v1234
    %v1531 = vunpack.c.h.b16 %v1234
    %v1532 = vunpack.c.l.b16 %v1235
    %v1533 = vunpack.c.h.b16 %v1235
    %v1534 = vunpack.c.l.b16 %v1236
    %v1535 = vunpack.c.h.b16 %v1236
    %v1536 = vunpack.c.l.b16 %v1237
    %v1537 = vunpack.c.h.b16 %v1237
    %v1538 = vunpack.c.l.b16 %v1238
    %v1539 = vunpack.c.h.b16 %v1238
    %v1540 = vunpack.c.l.b16 %v1239
    %v1541 = vunpack.c.h.b16 %v1239
    %v1542 = vunpack.c.l.b16 %v1240
    %v1543 = vunpack.c.h.b16 %v1240
    %v1544 = vunpack.c.l.b16 %v1241
    %v1545 = vunpack.c.h.b16 %v1241
    %v1546 = vunpack.c.l.b16 %v1242
    %v1547 = vunpack.c.h.b16 %v1242
    %v1548 = vunpack.c.l.b16 %v1243
    %v1549 = vunpack.c.h.b16 %v1243
    %v1550 = vunpack.c.l.b16 %v1244
    %v1551 = vunpack.c.h.b16 %v1244
    %v1552 = vunpack.c.l.b16 %v1245
    %v1553 = vunpack.c.h.b16 %v1245
    %v1554 = vunpack.c.l.b16 %v1246
    %v1555 = vunpack.c.h.b16 %v1246
    %v1556 = vunpack.c.l.b16 %v1247
    %v1557 = vunpack.c.h.b16 %v1247
    %v1558 = vunpack.c.l.b16 %v1248
    %v1559 = vunpack.c.h.b16 %v1248
    %v1560 = vunpack.c.l.b16 %v1249
    %v1561 = vunpack.c.h.b16 %v1249
    %v1562 = vunpack.c.l.b16 %v1250
    %v1563 = vunpack.c.h.b16 %v1250
    %v1564 = vunpack.c.l.b16 %v1251
    %v1565 = vunpack.c.h.b16 %v1251
    %v1566 = vunpack.c.l.b16 %v1252
    %v1567 = vunpack.c.h.b16 %v1252
    %v1568 = vunpack.c.l.b16 %v1253
    %v1569 = vunpack.c.h.b16 %v1253
    %v1570 = vunpack.c.l.b16 %v1254
    %v1571 = vunpack.c.h.b16 %v1254
    %v1572 = vunpack.c.l.b16 %v1255
    %v1573 = vunpack.c.h.b16 %v1255
    %v1574 = vunpack.c.l.b16 %v1256
    %v1575 = vunpack.c.h.b16 %v1256
    %v1576 = vunpack.c.l.b16 %v1257
    %v1577 = vunpack.c.h.b16 %v1257
    %v1578 = vunpack.c.l.b16 %v1258
    %v1579 = vunpack.c.h.b16 %v1258
    %v1580 = vunpack.c.l.b16 %v1259
    %v1581 = vunpack.c.h.b16 %v1259
    %v1582 = vunpack.c.l.b16 %v1260
    %v1583 = vunpack.c.h.b16 %v1260
    %v1584 = vunpack.c.l.b16 %v1261
    %v1585 = vunpack.c.h.b16 %v1261
    %v1586 = vunpack.c.l.b16 %v1262
    %v1587 = vunpack.c.h.b16 %v1262
    %v1588 = vunpack.c.l.b16 %v1263
    %v1589 = vunpack.c.h.b16 %v1263
    %v1590 = vunpack.c.l.b16 %v1264
    %v1591 = vunpack.c.h.b16 %v1264
    %v1592 = vunpack.c.l.b16 %v1265
    %v1593 = vunpack.c.h.b16 %v1265
    %v1594 = vunpack.c.l.b16 %v1266
    %v1595 = vunpack.c.h.b16 %v1266
    %v1596 = vunpack.c.l.b16 %v1267
    %v1597 = vunpack.c.h.b16 %v1267
    %v1598 = vunpack.c.l.b16 %v1268
    %v1599 = vunpack.c.h.b16 %v1268
    %v1600 = vunpack.c.l.b16 %v1269
    %v1601 = vunpack.c.h.b16 %v1269
    %v1602 = vunpack.c.l.b16 %v1270
    %v1603 = vunpack.c.h.b16 %v1270
    %v1604 = vunpack.c.l.b16 %v1271
    %v1605 = vunpack.c.h.b16 %v1271
    %v1606 = vunpack.c.l.b16 %v1272
    %v1607 = vunpack.c.h.b16 %v1272
    %v1608 = vunpack.c.l.b16 %v1273
    %v1609 = vunpack.c.h.b16 %v1273
    %v1610 = vunpack.c.l.b16 %v1274
    %v1611 = vunpack.c.h.b16 %v1274
    %v1612 = vunpack.c.l.b16 %v1275
    %v1613 = vunpack.c.h.b16 %v1275
    %v1614 = vunpack.c.l.b16 %v1276
    %v1615 = vunpack.c.h.b16 %v1276
    %v1616 = vunpack.c.l.b16 %v1277
    %v1617 = vunpack.c.h.b16 %v1277
    %v1618 = vunpack.c.l.b16 %v1278
    %v1619 = vunpack.c.h.b16 %v1278
    %v1620 = vunpack.c.l.b16 %v1279
    %v1621 = vunpack.c.h.b16 %v1279
    %v1622 = vunpack.c.l.b16 %v1280
    %v1623 = vunpack.c.h.b16 %v1280
    %v1624 = vunpack.c.l.b16 %v1281
    %v1625 = vunpack.c.h.b16 %v1281
    %v1626 = vunpack.c.l.b16 %v1282
    %v1627 = vunpack.c.h.b16 %v1282
    %v1628 = vunpack.c.l.b16 %v1283
    %v1629 = vunpack.c.h.b16 %v1283
    %v1630 = vunpack.c.l.b16 %v1284
    %v1631 = vunpack.c.h.b16 %v1284
    %v1632 = vunpack.c.l.b16 %v1285
    %v1633 = vunpack.c.h.b16 %v1285
    %v1634 = vunpack.c.l.b16 %v1286
    %v1635 = vunpack.c.h.b16 %v1286
    %v1636 = vunpack.c.l.b16 %v1287
    %v1637 = vunpack.c.h.b16 %v1287
    %v1638 = vunpack.c.l.b16 %v1288
    %v1639 = vunpack.c.h.b16 %v1288
    %v1640 = vunpack.c.l.b16 %v1289
    %v1641 = vunpack.c.h.b16 %v1289
    %v1642 = vunpack.c.l.b16 %v1290
    %v1643 = vunpack.c.h.b16 %v1290
    %v1644 = vunpack.c.l.b16 %v1291
    %v1645 = vunpack.c.h.b16 %v1291
    %v1646 = vunpack.c.l.b16 %v1292
    %v1647 = vunpack.c.h.b16 %v1292
    %v1648 = vunpack.c.l.b16 %v1293
    %v1649 = vunpack.c.h.b16 %v1293
    %v1650 = vunpack.c.l.b16 %v1294
    %v1651 = vunpack.c.h.b16 %v1294
    %v1652 = vunpack.c.l.b16 %v1295
    %v1653 = vunpack.c.h.b16 %v1295
    %v1654 = vunpack.c.l.b16 %v1296
    %v1655 = vunpack.c.h.b16 %v1296
    %v1656 = vunpack.c.l.b16 %v1297
    %v1657 = vunpack.c.h.b16 %v1297
    %v1658 = vunpack.c.l.b16 %v1298
    %v1659 = vunpack.c.h.b16 %v1298
    %v1660 = vunpack.c.l.b16 %v1299
    %v1661 = vunpack.c.h.b16 %v1299
    %v1662 = vunpack.c.l.b16 %v1300
    %v1663 = vunpack.c.h.b16 %v1300
    %v1664 = vunpack.c.l.b16 %v1301
    %v1665 = vunpack.c.h.b16 %v1301
    %v1666 = vunpack.c.l.b16 %v1302
    %v1667 = vunpack.c.h.b16 %v1302
    %v1668 = vunpack.c.l.b16 %v1303
    %v1669 = vunpack.c.h.b16 %v1303
    %v1670 = vunpack.c.l.b16 %v1304
    %v1671 = vunpack.c.h.b16 %v1304
    %v1672 = vunpack.c.l.b16 %v1305
    %v1673 = vunpack.c.h.b16 %v1305
    %v1674 = vunpack.c.l.b16 %v1306
    %v1675 = vunpack.c.h.b16 %v1306
    %v1676 = vunpack.c.l.b16 %v1307
    %v1677 = vunpack.c.h.b16 %v1307
    %v1678 = vunpack.c.l.b16 %v1308
    %v1679 = vunpack.c.h.b16 %v1308
    %v1680 = vunpack.c.l.b16 %v1309
    %v1681 = vunpack.c.h.b16 %v1309
    %v1682 = vunpack.c.l.b16 %v1310
    %v1683 = vunpack.c.h.b16 %v1310
    %v1684 = vunpack.c.l.b16 %v1311
    %v1685 = vunpack.c.h.b16 %v1311
    %v1686 = vunpack.c.l.b16 %v1312
    %v1687 = vunpack.c.h.b16 %v1312
    %v1688 = vunpack.c.l.b16 %v1313
    %v1689 = vunpack.c.h.b16 %v1313
    %v1690 = vunpack.c.l.b16 %v1314
    %v1691 = vunpack.c.h.b16 %v1314
    %v1692 = vunpack.c.l.b16 %v1315
    %v1693 = vunpack.c.h.b16 %v1315
    %v1694 = vunpack.c.l.b16 %v1316
    %v1695 = vunpack.c.h.b16 %v1316
    %v1696 = vunpack.c.l.b16 %v1317
    %v1697 = vunpack.c.h.b16 %v1317
    %v1698 = vunpack.c.l.b16 %v1318
    %v1699 = vunpack.c.h.b16 %v1318
    %v1700 = vunpack.c.l.b16 %v1319
    %v1701 = vunpack.c.h.b16 %v1319
    %v1702 = vunpack.c.l.b16 %v1320
    %v1703 = vunpack.c.h.b16 %v1320
    %v1704 = vunpack.c.l.b16 %v1321
    %v1705 = vunpack.c.h.b16 %v1321
    %v1706 = vunpack.c.l.b16 %v1322
    %v1707 = vunpack.c.h.b16 %v1322
    %v1708 = vunpack.c.l.b16 %v1323
    %v1709 = vunpack.c.h.b16 %v1323
    %v1710 = vunpack.c.l.b16 %v1324
    %v1711 = vunpack.c.h.b16 %v1324
    %v1712 = vunpack.c.l.b16 %v1325
    %v1713 = vunpack.c.h.b16 %v1325
    %v1714 = vunpack.c.l.b16 %v1326
    %v1715 = vunpack.c.h.b16 %v1326
    %v1716 = vunpack.c.l.b16 %v1327
    %v1717 = vunpack.c.h.b16 %v1327
    %v1718 = vunpack.c.l.b16 %v1328
    %v1719 = vunpack.c.h.b16 %v1328
    %v1720 = vunpack.c.l.b16 %v1329
    %v1721 = vunpack.c.h.b16 %v1329
    %v1722 = vunpack.c.l.b16 %v1330
    %v1723 = vunpack.c.h.b16 %v1330
    %v1724 = vunpack.c.l.b16 %v1331
    %v1725 = vunpack.c.h.b16 %v1331
    %v1726 = vunpack.c.l.b16 %v1332
    %v1727 = vunpack.c.h.b16 %v1332
    %v1728 = vunpack.c.l.b16 %v1333
    %v1729 = vunpack.c.h.b16 %v1333
    %v1730 = vunpack.c.l.b16 %v1334
    %v1731 = vunpack.c.h.b16 %v1334
    %v1732 = vunpack.c.l.b16 %v1335
    %v1733 = vunpack.c.h.b16 %v1335
    %v1734 = vunpack.c.l.b16 %v1336
    %v1735 = vunpack.c.h.b16 %v1336
    %v1736 = vunpack.c.l.b16 %v1337
    %v1737 = vunpack.c.h.b16 %v1337
    %v1738 = vunpack.c.l.b16 %v1338
    %v1739 = vunpack.c.h.b16 %v1338
    %v1740 = vunpack.c.l.b16 %v1339
    %v1741 = vunpack.c.h.b16 %v1339
    %v1742 = vunpack.c.l.b16 %v1340
    %v1743 = vunpack.c.h.b16 %v1340
    %v1744 = vunpack.c.l.b16 %v1341
    %v1745 = vunpack.c.h.b16 %v1341
    %v1746 = vunpack.c.l.b16 %v1342
    %v1747 = vunpack.c.h.b16 %v1342
    %v1748 = vunpack.c.l.b16 %v1343
    %v1749 = vunpack.c.h.b16 %v1343
    %v1750 = vunpack.c.l.b16 %v1344
    %v1751 = vunpack.c.h.b16 %v1344
    %v1752 = vpack.c.b16 %v1500, %v1496
    %v1753 = vpack.c.b16 %v1501, %v1497
    %v1754 = vpack.c.b16 %v1502, %v1498
    %v1755 = vpack.c.b16 %v1503, %v1499
    %v1756 = vpack.c.b16 %v1508, %v1504
    %v1757 = vpack.c.b16 %v1509, %v1505
    %v1758 = vpack.c.b16 %v1510, %v1506
    %v1759 = vpack.c.b16 %v1511, %v1507
    %v1760 = vpack.c.b16 %v1516, %v1512
    %v1761 = vpack.c.b16 %v1517, %v1513
    %v1762 = vpack.c.b16 %v1518, %v1514
    %v1763 = vpack.c.b16 %v1519, %v1515
    %v1764 = vpack.c.b16 %v1524, %v1520
    %v1765 = vpack.c.b16 %v1525, %v1521
    %v1766 = vpack.c.b16 %v1526, %v1522
    %v1767 = vpack.c.b16 %v1527, %v1523
    %v1768 = vpack.c.b16 %v1532, %v1528
    %v1769 = vpack.c.b16 %v1533, %v1529
    %v1770 = vpack.c.b16 %v1534, %v1530
    %v1771 = vpack.c.b16 %v1535, %v1531
    %v1772 = vpack.c.b16 %v1540, %v1536
    %v1773 = vpack.c.b16 %v1541, %v1537
    %v1774 = vpack.c.b16 %v1542, %v1538
    %v1775 = vpack.c.b16 %v1543, %v1539
    %v1776 = vpack.c.b16 %v1548, %v1544
    %v1777 = vpack.c.b16 %v1549, %v1545
    %v1778 = vpack.c.b16 %v1550, %v1546
    %v1779 = vpack.c.b16 %v1551, %v1547
    %v1780 = vpack.c.b16 %v1556, %v1552
    %v1781 = vpack.c.b16 %v1557, %v1553
    %v1782 = vpack.c.b16 %v1558, %v1554
    %v1783 = vpack.c.b16 %v1559, %v1555
    %v1784 = vpack.c.b16 %v1564, %v1560
    %v1785 = vpack.c.b16 %v1565, %v1561
    %v1786 = vpack.c.b16 %v1566, %v1562
    %v1787 = vpack.c.b16 %v1567, %v1563
    %v1788 = vpack.c.b16 %v1572, %v1568
    %v1789 = vpack.c.b16 %v1573, %v1569
    %v1790 = vpack.c.b16 %v1574, %v1570
    %v1791 = vpack.c.b16 %v1575, %v1571
    %v1792 = vpack.c.b16 %v1580, %v1576
    %v1793 = vpack.c.b16 %v1581, %v1577
    %v1794 = vpack.c.b16 %v1582, %v1578
    %v1795 = vpack.c.b16 %v1583, %v1579
    %v1796 = vpack.c.b16 %v1588, %v1584
    %v1797 = vpack.c.b16 %v1589, %v1585
    %v1798 = vpack.c.b16 %v1590, %v1586
    %v1799 = vpack.c.b16 %v1591, %v1587
    %v1800 = vpack.c.b16 %v1596, %v1592
    %v1801 = vpack.c.b16 %v1597, %v1593
    %v1802 = vpack.c.b16 %v1598, %v1594
    %v1803 = vpack.c.b16 %v1599, %v1595
    %v1804 = vpack.c.b16 %v1604, %v1600
    %v1805 = vpack.c.b16 %v1605, %v1601
    %v1806 = vpack.c.b16 %v1606, %v1602
    %v1807 = vpack.c.b16 %v1607, %v1603
    %v1808 = vpack.c.b16 %v1612, %v1608
    %v1809 = vpack.c.b16 %v1613, %v1609
    %v1810 = vpack.c.b16 %v1614, %v1610
    %v1811 = vpack.c.b16 %v1615, %v1611
    %v1812 = vpack.c.b16 %v1620, %v1616
    %v1813 = vpack.c.b16 %v1621, %v1617
    %v1814 = vpack.c.b16 %v1622, %v1618
    %v1815 = vpack.c.b16 %v1623, %v1619
    %v1816 = vpack.c.b16 %v1628, %v1624
    %v1817 = vpack.c.b16 %v1629, %v1625
    %v1818 = vpack.c.b16 %v1630, %v1626
    %v1819 = vpack.c.b16 %v1631, %v1627
    %v1820 = vpack.c.b16 %v1636, %v1632
    %v1821 = vpack.c.b16 %v1637, %v1633
    %v1822 = vpack.c.b16 %v1638, %v1634
    %v1823 = vpack.c.b16 %v1639, %v1635
    %v1824 = vpack.c.b16 %v1644, %v1640
    %v1825 = vpack.c.b16 %v1645, %v1641
    %v1826 = vpack.c.b16 %v1646, %v1642
    %v1827 = vpack.c.b16 %v1647, %v1643
    %v1828 = vpack.c.b16 %v1652, %v1648
    %v1829 = vpack.c.b16 %v1653, %v1649
    %v1830 = vpack.c.b16 %v1654, %v1650
    %v1831 = vpack.c.b16 %v1655, %v1651
    %v1832 = vpack.c.b16 %v1660, %v1656
    %v1833 = vpack.c.b16 %v1661, %v1657
    %v1834 = vpack.c.b16 %v1662, %v1658
    %v1835 = vpack.c.b16 %v1663, %v1659
    %v1836 = vpack.c.b16 %v1668, %v1664
    %v1837 = vpack.c.b16 %v1669, %v1665
    %v1838 = vpack.c.b16 %v1670, %v1666
    %v1839 = vpack.c.b16 %v1671, %v1667
    %v1840 = vpack.c.b16 %v1676, %v1672
    %v1841 = vpack.c.b16 %v1677, %v1673
    %v1842 = vpack.c.b16 %v1678, %v1674
    %v1843 = vpack.c.b16 %v1679, %v1675
    %v1844 = vpack.c.b16 %v1684, %v1680
    %v1845 = vpack.c.b16 %v1685, %v1681
    %v1846 = vpack.c.b16 %v1686, %v1682
    %v1847 = vpack.c.b16 %v1687, %v1683
    %v1848 = vpack.c.b16 %v1692, %v1688
    %v1849 = vpack.c.b16 %v1693, %v1689
    %v1850 = vpack.c.b16 %v1694, %v1690
    %v1851 = vpack.c.b16 %v1695, %v1691
    %v1852 = vpack.c.b16 %v1700, %v1696
    %v1853 = vpack.c.b16 %v1701, %v1697
    %v1854 = vpack.c.b16 %v1702, %v1698
    %v1855 = vpack.c.b16 %v1703, %v1699
    %v1856 = vpack.c.b16 %v1708, %v1704
    %v1857 = vpack.c.b16 %v1709, %v1705
    %v1858 = vpack.c.b16 %v1710, %v1706
    %v1859 = vpack.c.b16 %v1711, %v1707
    %v1860 = vpack.c.b16 %v1716, %v1712
    %v1861 = vpack.c.b16 %v1717, %v1713
    %v1862 = vpack.c.b16 %v1718, %v1714
    %v1863 = vpack.c.b16 %v1719, %v1715
    %v1864 = vpack.c.b16 %v1724, %v1720
    %v1865 = vpack.c.b16 %v1725, %v1721
    %v1866 = vpack.c.b16 %v1726, %v1722
    %v1867 = vpack.c.b16 %v1727, %v1723
    %v1868 = vpack.c.b16 %v1732, %v1728
    %v1869 = vpack.c.b16 %v1733, %v1729
    %v1870 = vpack.c.b16 %v1734, %v1730
    %v1871 = vpack.c.b16 %v1735, %v1731
    %v1872 = vpack.c.b16 %v1740, %v1736
    %v1873 = vpack.c.b16 %v1741, %v1737
    %v1874 = vpack.c.b16 %v1742, %v1738
    %v1875 = vpack.c.b16 %v1743, %v1739
    %v1876 = vpack.c.b16 %v1748, %v1744
    %v1877 = vpack.c.b16 %v1749, %v1745
    %v1878 = vpack.c.b16 %v1750, %v1746
    %v1879 = vpack.c.b16 %v1751, %v1747
    %2008 = vmatprep.subr.bf16.mxu0 %v1753
    %2009 = vmatpush1.bf16.msra.mxu0 %v1752
    %2010 = vmatprep.subr.bf16.mxu0 %v1757
    %2011 = vmatpush1.bf16.msra.mxu0 %v1756
    %2012 = vmatprep.subr.bf16.mxu0 %v1761
    %2013 = vmatpush1.bf16.msra.mxu0 %v1760
    %2014 = vmatprep.subr.bf16.mxu0 %v1765
    %2015 = vmatpush1.bf16.msra.mxu0 %v1764
    %2016 = vmatprep.subr.bf16.mxu0 %v1769
    %2017 = vmatpush1.bf16.msra.mxu0 %v1768
    %2018 = vmatprep.subr.bf16.mxu0 %v1773
    %2019 = vmatpush1.bf16.msra.mxu0 %v1772
    %2020 = vmatprep.subr.bf16.mxu0 %v1777
    %2021 = vmatpush1.bf16.msra.mxu0 %v1776
    %2022 = vmatprep.subr.bf16.mxu0 %v1781
    %2023 = vmatpush1.bf16.msra.mxu0 %v1780
    %2024 = vmatprep.subr.bf16.mxu0 %v1785
    %2025 = vmatpush1.bf16.msra.mxu0 %v1784
    %2026 = vmatprep.subr.bf16.mxu0 %v1789
    %2027 = vmatpush1.bf16.msra.mxu0 %v1788
    %2028 = vmatprep.subr.bf16.mxu0 %v1793
    %2029 = vmatpush1.bf16.msra.mxu0 %v1792
    %2030 = vmatprep.subr.bf16.mxu0 %v1797
    %2031 = vmatpush1.bf16.msra.mxu0 %v1796
    %2032 = vmatprep.subr.bf16.mxu0 %v1801
    %2033 = vmatpush1.bf16.msra.mxu0 %v1800
    %2034 = vmatprep.subr.bf16.mxu0 %v1805
    %2035 = vmatpush1.bf16.msra.mxu0 %v1804
    %2036 = vmatprep.subr.bf16.mxu0 %v1809
    %2037 = vmatpush1.bf16.msra.mxu0 %v1808
    %2038 = vmatprep.subr.bf16.mxu0 %v1813
    %2039 = vmatpush1.bf16.msra.mxu0 %v1812
    %2040 = vmatprep.mubr.bf16.mxu0 %v1209
    %2041 = vmatmul.mubr.bf16.gmra.mrb[0].mxu0 %v1208
    %v2042 = vpop.f32.mrb[0].mxu0
    %v2043 = vadd.f32 %v1351, %v2042
    %v2044 = vpop.f32.mrb[0].mxu0
    %v2045 = vadd.f32 %v1355, %v2044
    %v2046 = vpop.f32.mrb[0].mxu0
    %v2047 = vadd.f32 %v1351, %v2046
    %v2048 = vpop.f32.mrb[0].mxu0
    %v2049 = vadd.f32 %v1355, %v2048
    %2050 = vmatprep.mubr.bf16.mxu0 %v1213
    %2051 = vmatmul.mubr.bf16.gmra.mrb[0].mxu0 %v1212
    %v2052 = vpop.f32.mrb[0].mxu0
    %v2053 = vadd.f32 %v1351, %v2052
    %v2054 = vpop.f32.mrb[0].mxu0
    %v2055 = vadd.f32 %v1355, %v2054
    %v2056 = vpop.f32.mrb[0].mxu0
    %v2057 = vadd.f32 %v1351, %v2056
    %v2058 = vpop.f32.mrb[0].mxu0
    %v2059 = vadd.f32 %v1355, %v2058
    %2060 = vdwg.mxu0
    %2061 = vmatprep.subr.bf16.mxu0 %v1817
    %2062 = vmatpush1.bf16.msra.mxu0 %v1816
    %2063 = vmatprep.subr.bf16.mxu0 %v1821
    %2064 = vmatpush1.bf16.msra.mxu0 %v1820
    %2065 = vmatprep.subr.bf16.mxu0 %v1825
    %2066 = vmatpush1.bf16.msra.mxu0 %v1824
    %2067 = vmatprep.subr.bf16.mxu0 %v1829
    %2068 = vmatpush1.bf16.msra.mxu0 %v1828
    %2069 = vmatprep.subr.bf16.mxu0 %v1833
    %2070 = vmatpush1.bf16.msra.mxu0 %v1832
    %2071 = vmatprep.subr.bf16.mxu0 %v1837
    %2072 = vmatpush1.bf16.msra.mxu0 %v1836
    %2073 = vmatprep.subr.bf16.mxu0 %v1841
    %2074 = vmatpush1.bf16.msra.mxu0 %v1840
    %2075 = vmatprep.subr.bf16.mxu0 %v1845
    %2076 = vmatpush1.bf16.msra.mxu0 %v1844
    %2077 = vmatprep.subr.bf16.mxu0 %v1849
    %2078 = vmatpush1.bf16.msra.mxu0 %v1848
    %2079 = vmatprep.subr.bf16.mxu0 %v1853
    %2080 = vmatpush1.bf16.msra.mxu0 %v1852
    %2081 = vmatprep.subr.bf16.mxu0 %v1857
    %2082 = vmatpush1.bf16.msra.mxu0 %v1856
    %2083 = vmatprep.subr.bf16.mxu0 %v1861
    %2084 = vmatpush1.bf16.msra.mxu0 %v1860
    %2085 = vmatprep.subr.bf16.mxu0 %v1865
    %2086 = vmatpush1.bf16.msra.mxu0 %v1864
    %2087 = vmatprep.subr.bf16.mxu0 %v1869
    %2088 = vmatpush1.bf16.msra.mxu0 %v1868
    %2089 = vmatprep.subr.bf16.mxu0 %v1873
    %2090 = vmatpush1.bf16.msra.mxu0 %v1872
    %2091 = vmatprep.subr.bf16.mxu0 %v1877
    %2092 = vmatpush1.bf16.msra.mxu0 %v1876
    %2093 = vmatprep.mubr.bf16.mxu0 %v1211
    %2094 = vmatmul.mubr.bf16.gmra.mrb[0].mxu0 %v1210
    %v2095 = vpop.f32.mrb[0].mxu0
    %v2096 = vadd.f32 %v2043, %v2095
    %v2097 = vpop.f32.mrb[0].mxu0
    %v2098 = vadd.f32 %v2045, %v2097
    %v2099 = vpop.f32.mrb[0].mxu0
    %v2100 = vadd.f32 %v2047, %v2099
    %v2101 = vpop.f32.mrb[0].mxu0
    %v2102 = vadd.f32 %v2049, %v2101
    %2103 = vmatprep.mubr.bf16.mxu0 %v1215
    %2104 = vmatmul.mubr.bf16.gmra.mrb[0].mxu0 %v1214
    %v2105 = vpop.f32.mrb[0].mxu0
    %v2106 = vadd.f32 %v2053, %v2105
    %v2107 = vpop.f32.mrb[0].mxu0
    %v2108 = vadd.f32 %v2055, %v2107
    %v2109 = vpop.f32.mrb[0].mxu0
    %v2110 = vadd.f32 %v2057, %v2109
    %v2111 = vpop.f32.mrb[0].mxu0
    %v2112 = vadd.f32 %v2059, %v2111
    %2113 = vdwg.mxu0
    %2114 = vmatprep.subr.bf16.mxu0 %v1755
    %2115 = vmatpush1.bf16.msra.mxu0 %v1754
    %2116 = vmatprep.subr.bf16.mxu0 %v1759
    %2117 = vmatpush1.bf16.msra.mxu0 %v1758
    %2118 = vmatprep.subr.bf16.mxu0 %v1763
    %2119 = vmatpush1.bf16.msra.mxu0 %v1762
    %2120 = vmatprep.subr.bf16.mxu0 %v1767
    %2121 = vmatpush1.bf16.msra.mxu0 %v1766
    %2122 = vmatprep.subr.bf16.mxu0 %v1771
    %2123 = vmatpush1.bf16.msra.mxu0 %v1770
    %2124 = vmatprep.subr.bf16.mxu0 %v1775
    %2125 = vmatpush1.bf16.msra.mxu0 %v1774
    %2126 = vmatprep.subr.bf16.mxu0 %v1779
    %2127 = vmatpush1.bf16.msra.mxu0 %v1778
    %2128 = vmatprep.subr.bf16.mxu0 %v1783
    %2129 = vmatpush1.bf16.msra.mxu0 %v1782
    %2130 = vmatprep.subr.bf16.mxu0 %v1787
    %2131 = vmatpush1.bf16.msra.mxu0 %v1786
    %2132 = vmatprep.subr.bf16.mxu0 %v1791
    %2133 = vmatpush1.bf16.msra.mxu0 %v1790
    %2134 = vmatprep.subr.bf16.mxu0 %v1795
    %2135 = vmatpush1.bf16.msra.mxu0 %v1794
    %2136 = vmatprep.subr.bf16.mxu0 %v1799
    %2137 = vmatpush1.bf16.msra.mxu0 %v1798
    %2138 = vmatprep.subr.bf16.mxu0 %v1803
    %2139 = vmatpush1.bf16.msra.mxu0 %v1802
    %2140 = vmatprep.subr.bf16.mxu0 %v1807
    %2141 = vmatpush1.bf16.msra.mxu0 %v1806
    %2142 = vmatprep.subr.bf16.mxu0 %v1811
    %2143 = vmatpush1.bf16.msra.mxu0 %v1810
    %2144 = vmatprep.subr.bf16.mxu0 %v1815
    %2145 = vmatpush1.bf16.msra.mxu0 %v1814
    %2146 = vmatprep.mubr.bf16.mxu0 %v1209
    %2147 = vmatmul.mubr.bf16.gmra.mrb[0].mxu0 %v1208
    %v2148 = vpop.f32.mrb[0].mxu0
    %v2149 = vadd.f32 %v1359, %v2148
    %v2150 = vpop.f32.mrb[0].mxu0
    %v2151 = vadd.f32 %v1363, %v2150
    %v2152 = vpop.f32.mrb[0].mxu0
    %v2153 = vadd.f32 %v1359, %v2152
    %v2154 = vpop.f32.mrb[0].mxu0
    %v2155 = vadd.f32 %v1363, %v2154
    %2156 = vmatprep.mubr.bf16.mxu0 %v1213
    %2157 = vmatmul.mubr.bf16.gmra.mrb[0].mxu0 %v1212
    %v2158 = vpop.f32.mrb[0].mxu0
    %v2159 = vadd.f32 %v1359, %v2158
    %v2160 = vpop.f32.mrb[0].mxu0
    %v2161 = vadd.f32 %v1363, %v2160
    %v2162 = vpop.f32.mrb[0].mxu0
    %v2163 = vadd.f32 %v1359, %v2162
    %v2164 = vpop.f32.mrb[0].mxu0
    %v2165 = vadd.f32 %v1363, %v2164
    %2166 = vdwg.mxu0
    %2167 = vmatprep.subr.bf16.mxu0 %v1819
    %2168 = vmatpush1.bf16.msra.mxu0 %v1818
    %2169 = vmatprep.subr.bf16.mxu0 %v1823
    %2170 = vmatpush1.bf16.msra.mxu0 %v1822
    %2171 = vmatprep.subr.bf16.mxu0 %v1827
    %2172 = vmatpush1.bf16.msra.mxu0 %v1826
    %2173 = vmatprep.subr.bf16.mxu0 %v1831
    %2174 = vmatpush1.bf16.msra.mxu0 %v1830
    %2175 = vmatprep.subr.bf16.mxu0 %v1835
    %2176 = vmatpush1.bf16.msra.mxu0 %v1834
    %2177 = vmatprep.subr.bf16.mxu0 %v1839
    %2178 = vmatpush1.bf16.msra.mxu0 %v1838
    %2179 = vmatprep.subr.bf16.mxu0 %v1843
    %2180 = vmatpush1.bf16.msra.mxu0 %v1842
    %2181 = vmatprep.subr.bf16.mxu0 %v1847
    %2182 = vmatpush1.bf16.msra.mxu0 %v1846
    %2183 = vmatprep.subr.bf16.mxu0 %v1851
    %2184 = vmatpush1.bf16.msra.mxu0 %v1850
    %2185 = vmatprep.subr.bf16.mxu0 %v1855
    %2186 = vmatpush1.bf16.msra.mxu0 %v1854
    %2187 = vmatprep.subr.bf16.mxu0 %v1859
    %2188 = vmatpush1.bf16.msra.mxu0 %v1858
    %2189 = vmatprep.subr.bf16.mxu0 %v1863
    %2190 = vmatpush1.bf16.msra.mxu0 %v1862
    %2191 = vmatprep.subr.bf16.mxu0 %v1867
    %2192 = vmatpush1.bf16.msra.mxu0 %v1866
    %2193 = vmatprep.subr.bf16.mxu0 %v1871
    %2194 = vmatpush1.bf16.msra.mxu0 %v1870
    %2195 = vmatprep.subr.bf16.mxu0 %v1875
    %2196 = vmatpush1.bf16.msra.mxu0 %v1874
    %2197 = vmatprep.subr.bf16.mxu0 %v1879
    %2198 = vmatpush1.bf16.msra.mxu0 %v1878
    %2199 = vmatprep.mubr.bf16.mxu0 %v1211
    %2200 = vmatmul.mubr.bf16.gmra.mrb[0].mxu0 %v1210
    %v2201 = vpop.f32.mrb[0].mxu0
    %v2202 = vadd.f32 %v2149, %v2201
    %v2203 = vpop.f32.mrb[0].mxu0
    %v2204 = vadd.f32 %v2151, %v2203
    %v2205 = vpop.f32.mrb[0].mxu0
    %v2206 = vadd.f32 %v2153, %v2205
    %v2207 = vpop.f32.mrb[0].mxu0
    %v2208 = vadd.f32 %v2155, %v2207
    %2209 = vmatprep.mubr.bf16.mxu0 %v1215
    %2210 = vmatmul.mubr.bf16.gmra.mrb[0].mxu0 %v1214
    %v2211 = vpop.f32.mrb[0].mxu0
    %v2212 = vadd.f32 %v2159, %v2211
    %v2213 = vpop.f32.mrb[0].mxu0
    %v2214 = vadd.f32 %v2161, %v2213
    %v2215 = vpop.f32.mrb[0].mxu0
    %v2216 = vadd.f32 %v2163, %v2215
    %v2217 = vpop.f32.mrb[0].mxu0
    %v2218 = vadd.f32 %v2165, %v2217
    %2219 = vdwg.mxu0
    %v2220 = vpack.c.bf16 %v186, %v182
    %v2221 = vpack.c.bf16 %v187, %v183
    %v2222 = vpack.c.bf16 %v188, %v184
    %v2223 = vpack.c.bf16 %v189, %v185
    %v2224 = vpack.c.bf16 %v194, %v190
    %v2225 = vpack.c.bf16 %v195, %v191
    %v2226 = vpack.c.bf16 %v196, %v192
    %v2227 = vpack.c.bf16 %v197, %v193
    %s2228 = scalar_lea.vmem [#allocation8], 2048
    %v2229 = vld [vmem:[%s2228] sm:$0xff]
    %v2230 = vld [vmem:[%s2228 + $0x8] sm:$0xff]
    %v2231 = vld [vmem:[%s2228 + $0x10] sm:$0xff]
    %v2232 = vld [vmem:[%s2228 + $0x18] sm:$0xff]
    %v2233 = vld [vmem:[%s2228 + $0x20] sm:$0xff]
    %v2234 = vld [vmem:[%s2228 + $0x28] sm:$0xff]
    %v2235 = vld [vmem:[%s2228 + $0x30] sm:$0xff]
    %v2236 = vld [vmem:[%s2228 + $0x38] sm:$0xff]
    %v2237 = vld [vmem:[%s2228 + $0x40] sm:$0xff]
    %v2238 = vld [vmem:[%s2228 + $0x48] sm:$0xff]
    %v2239 = vld [vmem:[%s2228 + $0x50] sm:$0xff]
    %v2240 = vld [vmem:[%s2228 + $0x58] sm:$0xff]
    %v2241 = vld [vmem:[%s2228 + $0x60] sm:$0xff]
    %v2242 = vld [vmem:[%s2228 + $0x68] sm:$0xff]
    %v2243 = vld [vmem:[%s2228 + $0x70] sm:$0xff]
    %v2244 = vld [vmem:[%s2228 + $0x78] sm:$0xff]
    %v2245 = vld [vmem:[%s2228 + $0x80] sm:$0xff]
    %v2246 = vld [vmem:[%s2228 + $0x88] sm:$0xff]
    %v2247 = vld [vmem:[%s2228 + $0x90] sm:$0xff]
    %v2248 = vld [vmem:[%s2228 + $0x98] sm:$0xff]
    %v2249 = vld [vmem:[%s2228 + $0xa0] sm:$0xff]
    %v2250 = vld [vmem:[%s2228 + $0xa8] sm:$0xff]
    %v2251 = vld [vmem:[%s2228 + $0xb0] sm:$0xff]
    %v2252 = vld [vmem:[%s2228 + $0xb8] sm:$0xff]
    %v2253 = vld [vmem:[%s2228 + $0xc0] sm:$0xff]
    %v2254 = vld [vmem:[%s2228 + $0xc8] sm:$0xff]
    %v2255 = vld [vmem:[%s2228 + $0xd0] sm:$0xff]
    %v2256 = vld [vmem:[%s2228 + $0xd8] sm:$0xff]
    %v2257 = vld [vmem:[%s2228 + $0xe0] sm:$0xff]
    %v2258 = vld [vmem:[%s2228 + $0xe8] sm:$0xff]
    %v2259 = vld [vmem:[%s2228 + $0xf0] sm:$0xff]
    %v2260 = vld [vmem:[%s2228 + $0xf8] sm:$0xff]
    %v2261 = vld [vmem:[%s2228 + $0x100] sm:$0xff]
    %v2262 = vld [vmem:[%s2228 + $0x108] sm:$0xff]
    %v2263 = vld [vmem:[%s2228 + $0x110] sm:$0xff]
    %v2264 = vld [vmem:[%s2228 + $0x118] sm:$0xff]
    %v2265 = vld [vmem:[%s2228 + $0x120] sm:$0xff]
    %v2266 = vld [vmem:[%s2228 + $0x128] sm:$0xff]
    %v2267 = vld [vmem:[%s2228 + $0x130] sm:$0xff]
    %v2268 = vld [vmem:[%s2228 + $0x138] sm:$0xff]
    %v2269 = vld [vmem:[%s2228 + $0x140] sm:$0xff]
    %v2270 = vld [vmem:[%s2228 + $0x148] sm:$0xff]
    %v2271 = vld [vmem:[%s2228 + $0x150] sm:$0xff]
    %v2272 = vld [vmem:[%s2228 + $0x158] sm:$0xff]
    %v2273 = vld [vmem:[%s2228 + $0x160] sm:$0xff]
    %v2274 = vld [vmem:[%s2228 + $0x168] sm:$0xff]
    %v2275 = vld [vmem:[%s2228 + $0x170] sm:$0xff]
    %v2276 = vld [vmem:[%s2228 + $0x178] sm:$0xff]
    %v2277 = vld [vmem:[%s2228 + $0x180] sm:$0xff]
    %v2278 = vld [vmem:[%s2228 + $0x188] sm:$0xff]
    %v2279 = vld [vmem:[%s2228 + $0x190] sm:$0xff]
    %v2280 = vld [vmem:[%s2228 + $0x198] sm:$0xff]
    %v2281 = vld [vmem:[%s2228 + $0x1a0] sm:$0xff]
    %v2282 = vld [vmem:[%s2228 + $0x1a8] sm:$0xff]
    %v2283 = vld [vmem:[%s2228 + $0x1b0] sm:$0xff]
    %v2284 = vld [vmem:[%s2228 + $0x1b8] sm:$0xff]
    %v2285 = vld [vmem:[%s2228 + $0x1c0] sm:$0xff]
    %v2286 = vld [vmem:[%s2228 + $0x1c8] sm:$0xff]
    %v2287 = vld [vmem:[%s2228 + $0x1d0] sm:$0xff]
    %v2288 = vld [vmem:[%s2228 + $0x1d8] sm:$0xff]
    %v2289 = vld [vmem:[%s2228 + $0x1e0] sm:$0xff]
    %v2290 = vld [vmem:[%s2228 + $0x1e8] sm:$0xff]
    %v2291 = vld [vmem:[%s2228 + $0x1f0] sm:$0xff]
    %v2292 = vld [vmem:[%s2228 + $0x1f8] sm:$0xff]
    %v2293 = vld [vmem:[%s2228 + $0x200] sm:$0xff]
    %v2294 = vld [vmem:[%s2228 + $0x208] sm:$0xff]
    %v2295 = vld [vmem:[%s2228 + $0x210] sm:$0xff]
    %v2296 = vld [vmem:[%s2228 + $0x218] sm:$0xff]
    %v2297 = vld [vmem:[%s2228 + $0x220] sm:$0xff]
    %v2298 = vld [vmem:[%s2228 + $0x228] sm:$0xff]
    %v2299 = vld [vmem:[%s2228 + $0x230] sm:$0xff]
    %v2300 = vld [vmem:[%s2228 + $0x238] sm:$0xff]
    %v2301 = vld [vmem:[%s2228 + $0x240] sm:$0xff]
    %v2302 = vld [vmem:[%s2228 + $0x248] sm:$0xff]
    %v2303 = vld [vmem:[%s2228 + $0x250] sm:$0xff]
    %v2304 = vld [vmem:[%s2228 + $0x258] sm:$0xff]
    %v2305 = vld [vmem:[%s2228 + $0x260] sm:$0xff]
    %v2306 = vld [vmem:[%s2228 + $0x268] sm:$0xff]
    %v2307 = vld [vmem:[%s2228 + $0x270] sm:$0xff]
    %v2308 = vld [vmem:[%s2228 + $0x278] sm:$0xff]
    %v2309 = vld [vmem:[%s2228 + $0x280] sm:$0xff]
    %v2310 = vld [vmem:[%s2228 + $0x288] sm:$0xff]
    %v2311 = vld [vmem:[%s2228 + $0x290] sm:$0xff]
    %v2312 = vld [vmem:[%s2228 + $0x298] sm:$0xff]
    %v2313 = vld [vmem:[%s2228 + $0x2a0] sm:$0xff]
    %v2314 = vld [vmem:[%s2228 + $0x2a8] sm:$0xff]
    %v2315 = vld [vmem:[%s2228 + $0x2b0] sm:$0xff]
    %v2316 = vld [vmem:[%s2228 + $0x2b8] sm:$0xff]
    %v2317 = vld [vmem:[%s2228 + $0x2c0] sm:$0xff]
    %v2318 = vld [vmem:[%s2228 + $0x2c8] sm:$0xff]
    %v2319 = vld [vmem:[%s2228 + $0x2d0] sm:$0xff]
    %v2320 = vld [vmem:[%s2228 + $0x2d8] sm:$0xff]
    %v2321 = vld [vmem:[%s2228 + $0x2e0] sm:$0xff]
    %v2322 = vld [vmem:[%s2228 + $0x2e8] sm:$0xff]
    %v2323 = vld [vmem:[%s2228 + $0x2f0] sm:$0xff]
    %v2324 = vld [vmem:[%s2228 + $0x2f8] sm:$0xff]
    %v2325 = vld [vmem:[%s2228 + $0x300] sm:$0xff]
    %v2326 = vld [vmem:[%s2228 + $0x308] sm:$0xff]
    %v2327 = vld [vmem:[%s2228 + $0x310] sm:$0xff]
    %v2328 = vld [vmem:[%s2228 + $0x318] sm:$0xff]
    %v2329 = vld [vmem:[%s2228 + $0x320] sm:$0xff]
    %v2330 = vld [vmem:[%s2228 + $0x328] sm:$0xff]
    %v2331 = vld [vmem:[%s2228 + $0x330] sm:$0xff]
    %v2332 = vld [vmem:[%s2228 + $0x338] sm:$0xff]
    %v2333 = vld [vmem:[%s2228 + $0x340] sm:$0xff]
    %v2334 = vld [vmem:[%s2228 + $0x348] sm:$0xff]
    %v2335 = vld [vmem:[%s2228 + $0x350] sm:$0xff]
    %v2336 = vld [vmem:[%s2228 + $0x358] sm:$0xff]
    %v2337 = vld [vmem:[%s2228 + $0x360] sm:$0xff]
    %v2338 = vld [vmem:[%s2228 + $0x368] sm:$0xff]
    %v2339 = vld [vmem:[%s2228 + $0x370] sm:$0xff]
    %v2340 = vld [vmem:[%s2228 + $0x378] sm:$0xff]
    %v2341 = vld [vmem:[%s2228 + $0x380] sm:$0xff]
    %v2342 = vld [vmem:[%s2228 + $0x388] sm:$0xff]
    %v2343 = vld [vmem:[%s2228 + $0x390] sm:$0xff]
    %v2344 = vld [vmem:[%s2228 + $0x398] sm:$0xff]
    %v2345 = vld [vmem:[%s2228 + $0x3a0] sm:$0xff]
    %v2346 = vld [vmem:[%s2228 + $0x3a8] sm:$0xff]
    %v2347 = vld [vmem:[%s2228 + $0x3b0] sm:$0xff]
    %v2348 = vld [vmem:[%s2228 + $0x3b8] sm:$0xff]
    %v2349 = vld [vmem:[%s2228 + $0x3c0] sm:$0xff]
    %v2350 = vld [vmem:[%s2228 + $0x3c8] sm:$0xff]
    %v2351 = vld [vmem:[%s2228 + $0x3d0] sm:$0xff]
    %v2352 = vld [vmem:[%s2228 + $0x3d8] sm:$0xff]
    %v2353 = vld [vmem:[%s2228 + $0x3e0] sm:$0xff]
    %v2354 = vld [vmem:[%s2228 + $0x3e8] sm:$0xff]
    %v2355 = vld [vmem:[%s2228 + $0x3f0] sm:$0xff]
    %v2356 = vld [vmem:[%s2228 + $0x3f8] sm:$0xff]
    %s2357 = scalar_lea.vmem [#allocation10], 8
    %v2358 = vld [vmem:[%s2357] sm:$0xf]
    %v2360 = vlaneseq
    %v2361 = vshrl.u32 %v2360, 7
    %v2362 = vsub.s32 0, %v2361
    %v2363 = vrot.slane %v2358, %v2362
    %v2364 = vlaneseq
    %v2365 = vshrl.u32 %v2364, 7
    %v2366 = vsub.s32 1, %v2365
    %v2367 = vrot.slane %v2358, %v2366
    %v2368 = vlaneseq
    %v2369 = vshrl.u32 %v2368, 7
    %v2370 = vsub.s32 2, %v2369
    %v2371 = vrot.slane %v2358, %v2370
    %v2372 = vlaneseq
    %v2373 = vshrl.u32 %v2372, 7
    %v2374 = vsub.s32 3, %v2373
    %v2375 = vrot.slane %v2358, %v2374
    %v2508 = vunpack.c.l.b16 %v2229
    %v2509 = vunpack.c.h.b16 %v2229
    %v2510 = vunpack.c.l.b16 %v2230
    %v2511 = vunpack.c.h.b16 %v2230
    %v2512 = vunpack.c.l.b16 %v2231
    %v2513 = vunpack.c.h.b16 %v2231
    %v2514 = vunpack.c.l.b16 %v2232
    %v2515 = vunpack.c.h.b16 %v2232
    %v2516 = vunpack.c.l.b16 %v2233
    %v2517 = vunpack.c.h.b16 %v2233
    %v2518 = vunpack.c.l.b16 %v2234
    %v2519 = vunpack.c.h.b16 %v2234
    %v2520 = vunpack.c.l.b16 %v2235
    %v2521 = vunpack.c.h.b16 %v2235
    %v2522 = vunpack.c.l.b16 %v2236
    %v2523 = vunpack.c.h.b16 %v2236
    %v2524 = vunpack.c.l.b16 %v2237
    %v2525 = vunpack.c.h.b16 %v2237
    %v2526 = vunpack.c.l.b16 %v2238
    %v2527 = vunpack.c.h.b16 %v2238
    %v2528 = vunpack.c.l.b16 %v2239
    %v2529 = vunpack.c.h.b16 %v2239
    %v2530 = vunpack.c.l.b16 %v2240
    %v2531 = vunpack.c.h.b16 %v2240
    %v2532 = vunpack.c.l.b16 %v2241
    %v2533 = vunpack.c.h.b16 %v2241
    %v2534 = vunpack.c.l.b16 %v2242
    %v2535 = vunpack.c.h.b16 %v2242
    %v2536 = vunpack.c.l.b16 %v2243
    %v2537 = vunpack.c.h.b16 %v2243
    %v2538 = vunpack.c.l.b16 %v2244
    %v2539 = vunpack.c.h.b16 %v2244
    %v2540 = vunpack.c.l.b16 %v2245
    %v2541 = vunpack.c.h.b16 %v2245
    %v2542 = vunpack.c.l.b16 %v2246
    %v2543 = vunpack.c.h.b16 %v2246
    %v2544 = vunpack.c.l.b16 %v2247
    %v2545 = vunpack.c.h.b16 %v2247
    %v2546 = vunpack.c.l.b16 %v2248
    %v2547 = vunpack.c.h.b16 %v2248
    %v2548 = vunpack.c.l.b16 %v2249
    %v2549 = vunpack.c.h.b16 %v2249
    %v2550 = vunpack.c.l.b16 %v2250
    %v2551 = vunpack.c.h.b16 %v2250
    %v2552 = vunpack.c.l.b16 %v2251
    %v2553 = vunpack.c.h.b16 %v2251
    %v2554 = vunpack.c.l.b16 %v2252
    %v2555 = vunpack.c.h.b16 %v2252
    %v2556 = vunpack.c.l.b16 %v2253
    %v2557 = vunpack.c.h.b16 %v2253
    %v2558 = vunpack.c.l.b16 %v2254
    %v2559 = vunpack.c.h.b16 %v2254
    %v2560 = vunpack.c.l.b16 %v2255
    %v2561 = vunpack.c.h.b16 %v2255
    %v2562 = vunpack.c.l.b16 %v2256
    %v2563 = vunpack.c.h.b16 %v2256
    %v2564 = vunpack.c.l.b16 %v2257
    %v2565 = vunpack.c.h.b16 %v2257
    %v2566 = vunpack.c.l.b16 %v2258
    %v2567 = vunpack.c.h.b16 %v2258
    %v2568 = vunpack.c.l.b16 %v2259
    %v2569 = vunpack.c.h.b16 %v2259
    %v2570 = vunpack.c.l.b16 %v2260
    %v2571 = vunpack.c.h.b16 %v2260
    %v2572 = vunpack.c.l.b16 %v2261
    %v2573 = vunpack.c.h.b16 %v2261
    %v2574 = vunpack.c.l.b16 %v2262
    %v2575 = vunpack.c.h.b16 %v2262
    %v2576 = vunpack.c.l.b16 %v2263
    %v2577 = vunpack.c.h.b16 %v2263
    %v2578 = vunpack.c.l.b16 %v2264
    %v2579 = vunpack.c.h.b16 %v2264
    %v2580 = vunpack.c.l.b16 %v2265
    %v2581 = vunpack.c.h.b16 %v2265
    %v2582 = vunpack.c.l.b16 %v2266
    %v2583 = vunpack.c.h.b16 %v2266
    %v2584 = vunpack.c.l.b16 %v2267
    %v2585 = vunpack.c.h.b16 %v2267
    %v2586 = vunpack.c.l.b16 %v2268
    %v2587 = vunpack.c.h.b16 %v2268
    %v2588 = vunpack.c.l.b16 %v2269
    %v2589 = vunpack.c.h.b16 %v2269
    %v2590 = vunpack.c.l.b16 %v2270
    %v2591 = vunpack.c.h.b16 %v2270
    %v2592 = vunpack.c.l.b16 %v2271
    %v2593 = vunpack.c.h.b16 %v2271
    %v2594 = vunpack.c.l.b16 %v2272
    %v2595 = vunpack.c.h.b16 %v2272
    %v2596 = vunpack.c.l.b16 %v2273
    %v2597 = vunpack.c.h.b16 %v2273
    %v2598 = vunpack.c.l.b16 %v2274
    %v2599 = vunpack.c.h.b16 %v2274
    %v2600 = vunpack.c.l.b16 %v2275
    %v2601 = vunpack.c.h.b16 %v2275
    %v2602 = vunpack.c.l.b16 %v2276
    %v2603 = vunpack.c.h.b16 %v2276
    %v2604 = vunpack.c.l.b16 %v2277
    %v2605 = vunpack.c.h.b16 %v2277
    %v2606 = vunpack.c.l.b16 %v2278
    %v2607 = vunpack.c.h.b16 %v2278
    %v2608 = vunpack.c.l.b16 %v2279
    %v2609 = vunpack.c.h.b16 %v2279
    %v2610 = vunpack.c.l.b16 %v2280
    %v2611 = vunpack.c.h.b16 %v2280
    %v2612 = vunpack.c.l.b16 %v2281
    %v2613 = vunpack.c.h.b16 %v2281
    %v2614 = vunpack.c.l.b16 %v2282
    %v2615 = vunpack.c.h.b16 %v2282
    %v2616 = vunpack.c.l.b16 %v2283
    %v2617 = vunpack.c.h.b16 %v2283
    %v2618 = vunpack.c.l.b16 %v2284
    %v2619 = vunpack.c.h.b16 %v2284
    %v2620 = vunpack.c.l.b16 %v2285
    %v2621 = vunpack.c.h.b16 %v2285
    %v2622 = vunpack.c.l.b16 %v2286
    %v2623 = vunpack.c.h.b16 %v2286
    %v2624 = vunpack.c.l.b16 %v2287
    %v2625 = vunpack.c.h.b16 %v2287
    %v2626 = vunpack.c.l.b16 %v2288
    %v2627 = vunpack.c.h.b16 %v2288
    %v2628 = vunpack.c.l.b16 %v2289
    %v2629 = vunpack.c.h.b16 %v2289
    %v2630 = vunpack.c.l.b16 %v2290
    %v2631 = vunpack.c.h.b16 %v2290
    %v2632 = vunpack.c.l.b16 %v2291
    %v2633 = vunpack.c.h.b16 %v2291
    %v2634 = vunpack.c.l.b16 %v2292
    %v2635 = vunpack.c.h.b16 %v2292
    %v2636 = vunpack.c.l.b16 %v2293
    %v2637 = vunpack.c.h.b16 %v2293
    %v2638 = vunpack.c.l.b16 %v2294
    %v2639 = vunpack.c.h.b16 %v2294
    %v2640 = vunpack.c.l.b16 %v2295
    %v2641 = vunpack.c.h.b16 %v2295
    %v2642 = vunpack.c.l.b16 %v2296
    %v2643 = vunpack.c.h.b16 %v2296
    %v2644 = vunpack.c.l.b16 %v2297
    %v2645 = vunpack.c.h.b16 %v2297
    %v2646 = vunpack.c.l.b16 %v2298
    %v2647 = vunpack.c.h.b16 %v2298
    %v2648 = vunpack.c.l.b16 %v2299
    %v2649 = vunpack.c.h.b16 %v2299
    %v2650 = vunpack.c.l.b16 %v2300
    %v2651 = vunpack.c.h.b16 %v2300
    %v2652 = vunpack.c.l.b16 %v2301
    %v2653 = vunpack.c.h.b16 %v2301
    %v2654 = vunpack.c.l.b16 %v2302
    %v2655 = vunpack.c.h.b16 %v2302
    %v2656 = vunpack.c.l.b16 %v2303
    %v2657 = vunpack.c.h.b16 %v2303
    %v2658 = vunpack.c.l.b16 %v2304
    %v2659 = vunpack.c.h.b16 %v2304
    %v2660 = vunpack.c.l.b16 %v2305
    %v2661 = vunpack.c.h.b16 %v2305
    %v2662 = vunpack.c.l.b16 %v2306
    %v2663 = vunpack.c.h.b16 %v2306
    %v2664 = vunpack.c.l.b16 %v2307
    %v2665 = vunpack.c.h.b16 %v2307
    %v2666 = vunpack.c.l.b16 %v2308
    %v2667 = vunpack.c.h.b16 %v2308
    %v2668 = vunpack.c.l.b16 %v2309
    %v2669 = vunpack.c.h.b16 %v2309
    %v2670 = vunpack.c.l.b16 %v2310
    %v2671 = vunpack.c.h.b16 %v2310
    %v2672 = vunpack.c.l.b16 %v2311
    %v2673 = vunpack.c.h.b16 %v2311
    %v2674 = vunpack.c.l.b16 %v2312
    %v2675 = vunpack.c.h.b16 %v2312
    %v2676 = vunpack.c.l.b16 %v2313
    %v2677 = vunpack.c.h.b16 %v2313
    %v2678 = vunpack.c.l.b16 %v2314
    %v2679 = vunpack.c.h.b16 %v2314
    %v2680 = vunpack.c.l.b16 %v2315
    %v2681 = vunpack.c.h.b16 %v2315
    %v2682 = vunpack.c.l.b16 %v2316
    %v2683 = vunpack.c.h.b16 %v2316
    %v2684 = vunpack.c.l.b16 %v2317
    %v2685 = vunpack.c.h.b16 %v2317
    %v2686 = vunpack.c.l.b16 %v2318
    %v2687 = vunpack.c.h.b16 %v2318
    %v2688 = vunpack.c.l.b16 %v2319
    %v2689 = vunpack.c.h.b16 %v2319
    %v2690 = vunpack.c.l.b16 %v2320
    %v2691 = vunpack.c.h.b16 %v2320
    %v2692 = vunpack.c.l.b16 %v2321
    %v2693 = vunpack.c.h.b16 %v2321
    %v2694 = vunpack.c.l.b16 %v2322
    %v2695 = vunpack.c.h.b16 %v2322
    %v2696 = vunpack.c.l.b16 %v2323
    %v2697 = vunpack.c.h.b16 %v2323
    %v2698 = vunpack.c.l.b16 %v2324
    %v2699 = vunpack.c.h.b16 %v2324
    %v2700 = vunpack.c.l.b16 %v2325
    %v2701 = vunpack.c.h.b16 %v2325
    %v2702 = vunpack.c.l.b16 %v2326
    %v2703 = vunpack.c.h.b16 %v2326
    %v2704 = vunpack.c.l.b16 %v2327
    %v2705 = vunpack.c.h.b16 %v2327
    %v2706 = vunpack.c.l.b16 %v2328
    %v2707 = vunpack.c.h.b16 %v2328
    %v2708 = vunpack.c.l.b16 %v2329
    %v2709 = vunpack.c.h.b16 %v2329
    %v2710 = vunpack.c.l.b16 %v2330
    %v2711 = vunpack.c.h.b16 %v2330
    %v2712 = vunpack.c.l.b16 %v2331
    %v2713 = vunpack.c.h.b16 %v2331
    %v2714 = vunpack.c.l.b16 %v2332
    %v2715 = vunpack.c.h.b16 %v2332
    %v2716 = vunpack.c.l.b16 %v2333
    %v2717 = vunpack.c.h.b16 %v2333
    %v2718 = vunpack.c.l.b16 %v2334
    %v2719 = vunpack.c.h.b16 %v2334
    %v2720 = vunpack.c.l.b16 %v2335
    %v2721 = vunpack.c.h.b16 %v2335
    %v2722 = vunpack.c.l.b16 %v2336
    %v2723 = vunpack.c.h.b16 %v2336
    %v2724 = vunpack.c.l.b16 %v2337
    %v2725 = vunpack.c.h.b16 %v2337
    %v2726 = vunpack.c.l.b16 %v2338
    %v2727 = vunpack.c.h.b16 %v2338
    %v2728 = vunpack.c.l.b16 %v2339
    %v2729 = vunpack.c.h.b16 %v2339
    %v2730 = vunpack.c.l.b16 %v2340
    %v2731 = vunpack.c.h.b16 %v2340
    %v2732 = vunpack.c.l.b16 %v2341
    %v2733 = vunpack.c.h.b16 %v2341
    %v2734 = vunpack.c.l.b16 %v2342
    %v2735 = vunpack.c.h.b16 %v2342
    %v2736 = vunpack.c.l.b16 %v2343
    %v2737 = vunpack.c.h.b16 %v2343
    %v2738 = vunpack.c.l.b16 %v2344
    %v2739 = vunpack.c.h.b16 %v2344
    %v2740 = vunpack.c.l.b16 %v2345
    %v2741 = vunpack.c.h.b16 %v2345
    %v2742 = vunpack.c.l.b16 %v2346
    %v2743 = vunpack.c.h.b16 %v2346
    %v2744 = vunpack.c.l.b16 %v2347
    %v2745 = vunpack.c.h.b16 %v2347
    %v2746 = vunpack.c.l.b16 %v2348
    %v2747 = vunpack.c.h.b16 %v2348
    %v2748 = vunpack.c.l.b16 %v2349
    %v2749 = vunpack.c.h.b16 %v2349
    %v2750 = vunpack.c.l.b16 %v2350
    %v2751 = vunpack.c.h.b16 %v2350
    %v2752 = vunpack.c.l.b16 %v2351
    %v2753 = vunpack.c.h.b16 %v2351
    %v2754 = vunpack.c.l.b16 %v2352
    %v2755 = vunpack.c.h.b16 %v2352
    %v2756 = vunpack.c.l.b16 %v2353
    %v2757 = vunpack.c.h.b16 %v2353
    %v2758 = vunpack.c.l.b16 %v2354
    %v2759 = vunpack.c.h.b16 %v2354
    %v2760 = vunpack.c.l.b16 %v2355
    %v2761 = vunpack.c.h.b16 %v2355
    %v2762 = vunpack.c.l.b16 %v2356
    %v2763 = vunpack.c.h.b16 %v2356
    %v2764 = vpack.c.b16 %v2512, %v2508
    %v2765 = vpack.c.b16 %v2513, %v2509
    %v2766 = vpack.c.b16 %v2514, %v2510
    %v2767 = vpack.c.b16 %v2515, %v2511
    %v2768 = vpack.c.b16 %v2520, %v2516
    %v2769 = vpack.c.b16 %v2521, %v2517
    %v2770 = vpack.c.b16 %v2522, %v2518
    %v2771 = vpack.c.b16 %v2523, %v2519
    %v2772 = vpack.c.b16 %v2528, %v2524
    %v2773 = vpack.c.b16 %v2529, %v2525
    %v2774 = vpack.c.b16 %v2530, %v2526
    %v2775 = vpack.c.b16 %v2531, %v2527
    %v2776 = vpack.c.b16 %v2536, %v2532
    %v2777 = vpack.c.b16 %v2537, %v2533
    %v2778 = vpack.c.b16 %v2538, %v2534
    %v2779 = vpack.c.b16 %v2539, %v2535
    %v2780 = vpack.c.b16 %v2544, %v2540
    %v2781 = vpack.c.b16 %v2545, %v2541
    %v2782 = vpack.c.b16 %v2546, %v2542
    %v2783 = vpack.c.b16 %v2547, %v2543
    %v2784 = vpack.c.b16 %v2552, %v2548
    %v2785 = vpack.c.b16 %v2553, %v2549
    %v2786 = vpack.c.b16 %v2554, %v2550
    %v2787 = vpack.c.b16 %v2555, %v2551
    %v2788 = vpack.c.b16 %v2560, %v2556
    %v2789 = vpack.c.b16 %v2561, %v2557
    %v2790 = vpack.c.b16 %v2562, %v2558
    %v2791 = vpack.c.b16 %v2563, %v2559
    %v2792 = vpack.c.b16 %v2568, %v2564
    %v2793 = vpack.c.b16 %v2569, %v2565
    %v2794 = vpack.c.b16 %v2570, %v2566
    %v2795 = vpack.c.b16 %v2571, %v2567
    %v2796 = vpack.c.b16 %v2576, %v2572
    %v2797 = vpack.c.b16 %v2577, %v2573
    %v2798 = vpack.c.b16 %v2578, %v2574
    %v2799 = vpack.c.b16 %v2579, %v2575
    %v2800 = vpack.c.b16 %v2584, %v2580
    %v2801 = vpack.c.b16 %v2585, %v2581
    %v2802 = vpack.c.b16 %v2586, %v2582
    %v2803 = vpack.c.b16 %v2587, %v2583
    %v2804 = vpack.c.b16 %v2592, %v2588
    %v2805 = vpack.c.b16 %v2593, %v2589
    %v2806 = vpack.c.b16 %v2594, %v2590
    %v2807 = vpack.c.b16 %v2595, %v2591
    %v2808 = vpack.c.b16 %v2600, %v2596
    %v2809 = vpack.c.b16 %v2601, %v2597
    %v2810 = vpack.c.b16 %v2602, %v2598
    %v2811 = vpack.c.b16 %v2603, %v2599
    %v2812 = vpack.c.b16 %v2608, %v2604
    %v2813 = vpack.c.b16 %v2609, %v2605
    %v2814 = vpack.c.b16 %v2610, %v2606
    %v2815 = vpack.c.b16 %v2611, %v2607
    %v2816 = vpack.c.b16 %v2616, %v2612
    %v2817 = vpack.c.b16 %v2617, %v2613
    %v2818 = vpack.c.b16 %v2618, %v2614
    %v2819 = vpack.c.b16 %v2619, %v2615
    %v2820 = vpack.c.b16 %v2624, %v2620
    %v2821 = vpack.c.b16 %v2625, %v2621
    %v2822 = vpack.c.b16 %v2626, %v2622
    %v2823 = vpack.c.b16 %v2627, %v2623
    %v2824 = vpack.c.b16 %v2632, %v2628
    %v2825 = vpack.c.b16 %v2633, %v2629
    %v2826 = vpack.c.b16 %v2634, %v2630
    %v2827 = vpack.c.b16 %v2635, %v2631
    %v2828 = vpack.c.b16 %v2640, %v2636
    %v2829 = vpack.c.b16 %v2641, %v2637
    %v2830 = vpack.c.b16 %v2642, %v2638
    %v2831 = vpack.c.b16 %v2643, %v2639
    %v2832 = vpack.c.b16 %v2648, %v2644
    %v2833 = vpack.c.b16 %v2649, %v2645
    %v2834 = vpack.c.b16 %v2650, %v2646
    %v2835 = vpack.c.b16 %v2651, %v2647
    %v2836 = vpack.c.b16 %v2656, %v2652
    %v2837 = vpack.c.b16 %v2657, %v2653
    %v2838 = vpack.c.b16 %v2658, %v2654
    %v2839 = vpack.c.b16 %v2659, %v2655
    %v2840 = vpack.c.b16 %v2664, %v2660
    %v2841 = vpack.c.b16 %v2665, %v2661
    %v2842 = vpack.c.b16 %v2666, %v2662
    %v2843 = vpack.c.b16 %v2667, %v2663
    %v2844 = vpack.c.b16 %v2672, %v2668
    %v2845 = vpack.c.b16 %v2673, %v2669
    %v2846 = vpack.c.b16 %v2674, %v2670
    %v2847 = vpack.c.b16 %v2675, %v2671
    %v2848 = vpack.c.b16 %v2680, %v2676
    %v2849 = vpack.c.b16 %v2681, %v2677
    %v2850 = vpack.c.b16 %v2682, %v2678
    %v2851 = vpack.c.b16 %v2683, %v2679
    %v2852 = vpack.c.b16 %v2688, %v2684
    %v2853 = vpack.c.b16 %v2689, %v2685
    %v2854 = vpack.c.b16 %v2690, %v2686
    %v2855 = vpack.c.b16 %v2691, %v2687
    %v2856 = vpack.c.b16 %v2696, %v2692
    %v2857 = vpack.c.b16 %v2697, %v2693
    %v2858 = vpack.c.b16 %v2698, %v2694
    %v2859 = vpack.c.b16 %v2699, %v2695
    %v2860 = vpack.c.b16 %v2704, %v2700
    %v2861 = vpack.c.b16 %v2705, %v2701
    %v2862 = vpack.c.b16 %v2706, %v2702
    %v2863 = vpack.c.b16 %v2707, %v2703
    %v2864 = vpack.c.b16 %v2712, %v2708
    %v2865 = vpack.c.b16 %v2713, %v2709
    %v2866 = vpack.c.b16 %v2714, %v2710
    %v2867 = vpack.c.b16 %v2715, %v2711
    %v2868 = vpack.c.b16 %v2720, %v2716
    %v2869 = vpack.c.b16 %v2721, %v2717
    %v2870 = vpack.c.b16 %v2722, %v2718
    %v2871 = vpack.c.b16 %v2723, %v2719
    %v2872 = vpack.c.b16 %v2728, %v2724
    %v2873 = vpack.c.b16 %v2729, %v2725
    %v2874 = vpack.c.b16 %v2730, %v2726
    %v2875 = vpack.c.b16 %v2731, %v2727
    %v2876 = vpack.c.b16 %v2736, %v2732
    %v2877 = vpack.c.b16 %v2737, %v2733
    %v2878 = vpack.c.b16 %v2738, %v2734
    %v2879 = vpack.c.b16 %v2739, %v2735
    %v2880 = vpack.c.b16 %v2744, %v2740
    %v2881 = vpack.c.b16 %v2745, %v2741
    %v2882 = vpack.c.b16 %v2746, %v2742
    %v2883 = vpack.c.b16 %v2747, %v2743
    %v2884 = vpack.c.b16 %v2752, %v2748
    %v2885 = vpack.c.b16 %v2753, %v2749
    %v2886 = vpack.c.b16 %v2754, %v2750
    %v2887 = vpack.c.b16 %v2755, %v2751
    %v2888 = vpack.c.b16 %v2760, %v2756
    %v2889 = vpack.c.b16 %v2761, %v2757
    %v2890 = vpack.c.b16 %v2762, %v2758
    %v2891 = vpack.c.b16 %v2763, %v2759
    %3020 = vmatprep.subr.bf16.mxu0 %v2765
    %3021 = vmatpush1.bf16.msra.mxu0 %v2764
    %3022 = vmatprep.subr.bf16.mxu0 %v2769
    %3023 = vmatpush1.bf16.msra.mxu0 %v2768
    %3024 = vmatprep.subr.bf16.mxu0 %v2773
    %3025 = vmatpush1.bf16.msra.mxu0 %v2772
    %3026 = vmatprep.subr.bf16.mxu0 %v2777
    %3027 = vmatpush1.bf16.msra.mxu0 %v2776
    %3028 = vmatprep.subr.bf16.mxu0 %v2781
    %3029 = vmatpush1.bf16.msra.mxu0 %v2780
    %3030 = vmatprep.subr.bf16.mxu0 %v2785
    %3031 = vmatpush1.bf16.msra.mxu0 %v2784
    %3032 = vmatprep.subr.bf16.mxu0 %v2789
    %3033 = vmatpush1.bf16.msra.mxu0 %v2788
    %3034 = vmatprep.subr.bf16.mxu0 %v2793
    %3035 = vmatpush1.bf16.msra.mxu0 %v2792
    %3036 = vmatprep.subr.bf16.mxu0 %v2797
    %3037 = vmatpush1.bf16.msra.mxu0 %v2796
    %3038 = vmatprep.subr.bf16.mxu0 %v2801
    %3039 = vmatpush1.bf16.msra.mxu0 %v2800
    %3040 = vmatprep.subr.bf16.mxu0 %v2805
    %3041 = vmatpush1.bf16.msra.mxu0 %v2804
    %3042 = vmatprep.subr.bf16.mxu0 %v2809
    %3043 = vmatpush1.bf16.msra.mxu0 %v2808
    %3044 = vmatprep.subr.bf16.mxu0 %v2813
    %3045 = vmatpush1.bf16.msra.mxu0 %v2812
    %3046 = vmatprep.subr.bf16.mxu0 %v2817
    %3047 = vmatpush1.bf16.msra.mxu0 %v2816
    %3048 = vmatprep.subr.bf16.mxu0 %v2821
    %3049 = vmatpush1.bf16.msra.mxu0 %v2820
    %3050 = vmatprep.subr.bf16.mxu0 %v2825
    %3051 = vmatpush1.bf16.msra.mxu0 %v2824
    %3052 = vmatprep.mubr.bf16.mxu0 %v2221
    %3053 = vmatmul.mubr.bf16.gmra.mrb[0].mxu0 %v2220
    %v3054 = vpop.f32.mrb[0].mxu0
    %v3055 = vadd.f32 %v2363, %v3054
    %v3056 = vpop.f32.mrb[0].mxu0
    %v3057 = vadd.f32 %v2367, %v3056
    %v3058 = vpop.f32.mrb[0].mxu0
    %v3059 = vadd.f32 %v2363, %v3058
    %v3060 = vpop.f32.mrb[0].mxu0
    %v3061 = vadd.f32 %v2367, %v3060
    %3062 = vmatprep.mubr.bf16.mxu0 %v2225
    %3063 = vmatmul.mubr.bf16.gmra.mrb[0].mxu0 %v2224
    %v3064 = vpop.f32.mrb[0].mxu0
    %v3065 = vadd.f32 %v2363, %v3064
    %v3066 = vpop.f32.mrb[0].mxu0
    %v3067 = vadd.f32 %v2367, %v3066
    %v3068 = vpop.f32.mrb[0].mxu0
    %v3069 = vadd.f32 %v2363, %v3068
    %v3070 = vpop.f32.mrb[0].mxu0
    %v3071 = vadd.f32 %v2367, %v3070
    %3072 = vdwg.mxu0
    %3073 = vmatprep.subr.bf16.mxu0 %v2829
    %3074 = vmatpush1.bf16.msra.mxu0 %v2828
    %3075 = vmatprep.subr.bf16.mxu0 %v2833
    %3076 = vmatpush1.bf16.msra.mxu0 %v2832
    %3077 = vmatprep.subr.bf16.mxu0 %v2837
    %3078 = vmatpush1.bf16.msra.mxu0 %v2836
    %3079 = vmatprep.subr.bf16.mxu0 %v2841
    %3080 = vmatpush1.bf16.msra.mxu0 %v2840
    %3081 = vmatprep.subr.bf16.mxu0 %v2845
    %3082 = vmatpush1.bf16.msra.mxu0 %v2844
    %3083 = vmatprep.subr.bf16.mxu0 %v2849
    %3084 = vmatpush1.bf16.msra.mxu0 %v2848
    %3085 = vmatprep.subr.bf16.mxu0 %v2853
    %3086 = vmatpush1.bf16.msra.mxu0 %v2852
    %3087 = vmatprep.subr.bf16.mxu0 %v2857
    %3088 = vmatpush1.bf16.msra.mxu0 %v2856
    %3089 = vmatprep.subr.bf16.mxu0 %v2861
    %3090 = vmatpush1.bf16.msra.mxu0 %v2860
    %3091 = vmatprep.subr.bf16.mxu0 %v2865
    %3092 = vmatpush1.bf16.msra.mxu0 %v2864
    %3093 = vmatprep.subr.bf16.mxu0 %v2869
    %3094 = vmatpush1.bf16.msra.mxu0 %v2868
    %3095 = vmatprep.subr.bf16.mxu0 %v2873
    %3096 = vmatpush1.bf16.msra.mxu0 %v2872
    %3097 = vmatprep.subr.bf16.mxu0 %v2877
    %3098 = vmatpush1.bf16.msra.mxu0 %v2876
    %3099 = vmatprep.subr.bf16.mxu0 %v2881
    %3100 = vmatpush1.bf16.msra.mxu0 %v2880
    %3101 = vmatprep.subr.bf16.mxu0 %v2885
    %3102 = vmatpush1.bf16.msra.mxu0 %v2884
    %3103 = vmatprep.subr.bf16.mxu0 %v2889
    %3104 = vmatpush1.bf16.msra.mxu0 %v2888
    %3105 = vmatprep.mubr.bf16.mxu0 %v2223
    %3106 = vmatmul.mubr.bf16.gmra.mrb[0].mxu0 %v2222
    %v3107 = vpop.f32.mrb[0].mxu0
    %v3108 = vadd.f32 %v3055, %v3107
    %v3109 = vpop.f32.mrb[0].mxu0
    %v3110 = vadd.f32 %v3057, %v3109
    %v3111 = vpop.f32.mrb[0].mxu0
    %v3112 = vadd.f32 %v3059, %v3111
    %v3113 = vpop.f32.mrb[0].mxu0
    %v3114 = vadd.f32 %v3061, %v3113
    %3115 = vmatprep.mubr.bf16.mxu0 %v2227
    %3116 = vmatmul.mubr.bf16.gmra.mrb[0].mxu0 %v2226
    %v3117 = vpop.f32.mrb[0].mxu0
    %v3118 = vadd.f32 %v3065, %v3117
    %v3119 = vpop.f32.mrb[0].mxu0
    %v3120 = vadd.f32 %v3067, %v3119
    %v3121 = vpop.f32.mrb[0].mxu0
    %v3122 = vadd.f32 %v3069, %v3121
    %v3123 = vpop.f32.mrb[0].mxu0
    %v3124 = vadd.f32 %v3071, %v3123
    %3125 = vdwg.mxu0
    %3126 = vmatprep.subr.bf16.mxu0 %v2767
    %3127 = vmatpush1.bf16.msra.mxu0 %v2766
    %3128 = vmatprep.subr.bf16.mxu0 %v2771
    %3129 = vmatpush1.bf16.msra.mxu0 %v2770
    %3130 = vmatprep.subr.bf16.mxu0 %v2775
    %3131 = vmatpush1.bf16.msra.mxu0 %v2774
    %3132 = vmatprep.subr.bf16.mxu0 %v2779
    %3133 = vmatpush1.bf16.msra.mxu0 %v2778
    %3134 = vmatprep.subr.bf16.mxu0 %v2783
    %3135 = vmatpush1.bf16.msra.mxu0 %v2782
    %3136 = vmatprep.subr.bf16.mxu0 %v2787
    %3137 = vmatpush1.bf16.msra.mxu0 %v2786
    %3138 = vmatprep.subr.bf16.mxu0 %v2791
    %3139 = vmatpush1.bf16.msra.mxu0 %v2790
    %3140 = vmatprep.subr.bf16.mxu0 %v2795
    %3141 = vmatpush1.bf16.msra.mxu0 %v2794
    %3142 = vmatprep.subr.bf16.mxu0 %v2799
    %3143 = vmatpush1.bf16.msra.mxu0 %v2798
    %3144 = vmatprep.subr.bf16.mxu0 %v2803
    %3145 = vmatpush1.bf16.msra.mxu0 %v2802
    %3146 = vmatprep.subr.bf16.mxu0 %v2807
    %3147 = vmatpush1.bf16.msra.mxu0 %v2806
    %3148 = vmatprep.subr.bf16.mxu0 %v2811
    %3149 = vmatpush1.bf16.msra.mxu0 %v2810
    %3150 = vmatprep.subr.bf16.mxu0 %v2815
    %3151 = vmatpush1.bf16.msra.mxu0 %v2814
    %3152 = vmatprep.subr.bf16.mxu0 %v2819
    %3153 = vmatpush1.bf16.msra.mxu0 %v2818
    %3154 = vmatprep.subr.bf16.mxu0 %v2823
    %3155 = vmatpush1.bf16.msra.mxu0 %v2822
    %3156 = vmatprep.subr.bf16.mxu0 %v2827
    %3157 = vmatpush1.bf16.msra.mxu0 %v2826
    %3158 = vmatprep.mubr.bf16.mxu0 %v2221
    %3159 = vmatmul.mubr.bf16.gmra.mrb[0].mxu0 %v2220
    %v3160 = vpop.f32.mrb[0].mxu0
    %v3161 = vadd.f32 %v2371, %v3160
    %v3162 = vpop.f32.mrb[0].mxu0
    %v3163 = vadd.f32 %v2375, %v3162
    %v3164 = vpop.f32.mrb[0].mxu0
    %v3165 = vadd.f32 %v2371, %v3164
    %v3166 = vpop.f32.mrb[0].mxu0
    %v3167 = vadd.f32 %v2375, %v3166
    %3168 = vmatprep.mubr.bf16.mxu0 %v2225
    %3169 = vmatmul.mubr.bf16.gmra.mrb[0].mxu0 %v2224
    %v3170 = vpop.f32.mrb[0].mxu0
    %v3171 = vadd.f32 %v2371, %v3170
    %v3172 = vpop.f32.mrb[0].mxu0
    %v3173 = vadd.f32 %v2375, %v3172
    %v3174 = vpop.f32.mrb[0].mxu0
    %v3175 = vadd.f32 %v2371, %v3174
    %v3176 = vpop.f32.mrb[0].mxu0
    %v3177 = vadd.f32 %v2375, %v3176
    %3178 = vdwg.mxu0
    %3179 = vmatprep.subr.bf16.mxu0 %v2831
    %3180 = vmatpush1.bf16.msra.mxu0 %v2830
    %3181 = vmatprep.subr.bf16.mxu0 %v2835
    %3182 = vmatpush1.bf16.msra.mxu0 %v2834
    %3183 = vmatprep.subr.bf16.mxu0 %v2839
    %3184 = vmatpush1.bf16.msra.mxu0 %v2838
    %3185 = vmatprep.subr.bf16.mxu0 %v2843
    %3186 = vmatpush1.bf16.msra.mxu0 %v2842
    %3187 = vmatprep.subr.bf16.mxu0 %v2847
    %3188 = vmatpush1.bf16.msra.mxu0 %v2846
    %3189 = vmatprep.subr.bf16.mxu0 %v2851
    %3190 = vmatpush1.bf16.msra.mxu0 %v2850
    %3191 = vmatprep.subr.bf16.mxu0 %v2855
    %3192 = vmatpush1.bf16.msra.mxu0 %v2854
    %3193 = vmatprep.subr.bf16.mxu0 %v2859
    %3194 = vmatpush1.bf16.msra.mxu0 %v2858
    %3195 = vmatprep.subr.bf16.mxu0 %v2863
    %3196 = vmatpush1.bf16.msra.mxu0 %v2862
    %3197 = vmatprep.subr.bf16.mxu0 %v2867
    %3198 = vmatpush1.bf16.msra.mxu0 %v2866
    %3199 = vmatprep.subr.bf16.mxu0 %v2871
    %3200 = vmatpush1.bf16.msra.mxu0 %v2870
    %3201 = vmatprep.subr.bf16.mxu0 %v2875
    %3202 = vmatpush1.bf16.msra.mxu0 %v2874
    %3203 = vmatprep.subr.bf16.mxu0 %v2879
    %3204 = vmatpush1.bf16.msra.mxu0 %v2878
    %3205 = vmatprep.subr.bf16.mxu0 %v2883
    %3206 = vmatpush1.bf16.msra.mxu0 %v2882
    %3207 = vmatprep.subr.bf16.mxu0 %v2887
    %3208 = vmatpush1.bf16.msra.mxu0 %v2886
    %3209 = vmatprep.subr.bf16.mxu0 %v2891
    %3210 = vmatpush1.bf16.msra.mxu0 %v2890
    %3211 = vmatprep.mubr.bf16.mxu0 %v2223
    %3212 = vmatmul.mubr.bf16.gmra.mrb[0].mxu0 %v2222
    %v3213 = vpop.f32.mrb[0].mxu0
    %v3214 = vadd.f32 %v3161, %v3213
    %v3215 = vpop.f32.mrb[0].mxu0
    %v3216 = vadd.f32 %v3163, %v3215
    %v3217 = vpop.f32.mrb[0].mxu0
    %v3218 = vadd.f32 %v3165, %v3217
    %v3219 = vpop.f32.mrb[0].mxu0
    %v3220 = vadd.f32 %v3167, %v3219
    %3221 = vmatprep.mubr.bf16.mxu0 %v2227
    %3222 = vmatmul.mubr.bf16.gmra.mrb[0].mxu0 %v2226
    %v3223 = vpop.f32.mrb[0].mxu0
    %v3224 = vadd.f32 %v3171, %v3223
    %v3225 = vpop.f32.mrb[0].mxu0
    %v3226 = vadd.f32 %v3173, %v3225
    %v3227 = vpop.f32.mrb[0].mxu0
    %v3228 = vadd.f32 %v3175, %v3227
    %v3229 = vpop.f32.mrb[0].mxu0
    %v3230 = vadd.f32 %v3177, %v3229
    %3231 = vdwg.mxu0
    %v3232 = vpack.c.bf16 %v1088, %v1084
    %v3233 = vpack.c.bf16 %v1090, %v1086
    %v3234 = vpack.c.bf16 %v1194, %v1190
    %v3235 = vpack.c.bf16 %v1196, %v1192
    %v3236 = vpack.c.bf16 %v1098, %v1094
    %v3237 = vpack.c.bf16 %v1100, %v1096
    %v3238 = vpack.c.bf16 %v1204, %v1200
    %v3239 = vpack.c.bf16 %v1206, %v1202
    %v3240 = vpack.c.bf16 %v2100, %v2096
    %v3241 = vpack.c.bf16 %v2102, %v2098
    %v3242 = vpack.c.bf16 %v2206, %v2202
    %v3243 = vpack.c.bf16 %v2208, %v2204
    %v3244 = vpack.c.bf16 %v2110, %v2106
    %v3245 = vpack.c.bf16 %v2112, %v2108
    %v3246 = vpack.c.bf16 %v2216, %v2212
    %v3247 = vpack.c.bf16 %v2218, %v2214
    %v3248 = vpack.c.bf16 %v3112, %v3108
    %v3249 = vpack.c.bf16 %v3114, %v3110
    %v3250 = vpack.c.bf16 %v3218, %v3214
    %v3251 = vpack.c.bf16 %v3220, %v3216
    %v3252 = vpack.c.bf16 %v3122, %v3118
    %v3253 = vpack.c.bf16 %v3124, %v3120
    %v3254 = vpack.c.bf16 %v3228, %v3224
    %v3255 = vpack.c.bf16 %v3230, %v3226
    %3256 = vmatprep.subr.bf16.mxu0 0
    %3257 = vmatpush1.bf16.xpose.msra.mxu0 %v3232
    %3258 = vmatprep.subr.bf16.mxu0 0
    %3259 = vmatpush1.bf16.xpose.msra.mxu0 0
    %3260 = vmatprep.subr.bf16.mxu0 0
    %3261 = vmatpush1.bf16.xpose.msra.mxu0 0
    %3262 = vmatprep.subr.bf16.mxu0 0
    %3263 = vmatpush1.bf16.xpose.msra.mxu0 0
    %3264 = vmatprep.subr.bf16.mxu0 0
    %3265 = vmatpush1.bf16.xpose.msra.mxu0 0
    %3266 = vmatprep.subr.bf16.mxu0 0
    %3267 = vmatpush1.bf16.xpose.msra.mxu0 0
    %3268 = vmatprep.subr.bf16.mxu0 0
    %3269 = vmatpush1.bf16.xpose.msra.mxu0 0
    %3270 = vmatprep.subr.bf16.mxu0 0
    %3271 = vmatpush1.bf16.xpose.msra.mxu0 0
    %3272 = vmatprep.subr.bf16.mxu0 0
    %3273 = vmatpush1.bf16.xpose.msra.mxu0 0
    %3274 = vmatprep.subr.bf16.mxu0 0
    %3275 = vmatpush1.bf16.xpose.msra.mxu0 0
    %3276 = vmatprep.subr.bf16.mxu0 0
    %3277 = vmatpush1.bf16.xpose.msra.mxu0 0
    %3278 = vmatprep.subr.bf16.mxu0 0
    %3279 = vmatpush1.bf16.xpose.msra.mxu0 0
    %3280 = vmatprep.subr.bf16.mxu0 0
    %3281 = vmatpush1.bf16.xpose.msra.mxu0 0
    %3282 = vmatprep.subr.bf16.mxu0 0
    %3283 = vmatpush1.bf16.xpose.msra.mxu0 0
    %3284 = vmatprep.subr.bf16.mxu0 0
    %3285 = vmatpush1.bf16.xpose.msra.mxu0 0
    %3286 = vmatprep.subr.bf16.mxu0 0
    %3287 = vmatpush1.bf16.xpose.msra.mxu0 0
    %3288 = vmatprep.mubr.bf16.mxu0 0
    %3289 = vmatmul.mubr.bf16.gmra.mrb[0].mxu0 %v3248
    %v3290 = vpop.f32.mrb[0].mxu0
    %v3291 = vadd.f32 0.0, %v3290
    %v3292 = vpop.f32.mrb[0].mxu0
    %v3293 = vpop.f32.mrb[0].mxu0
    %v3294 = vadd.f32 0.0, %v3293
    %v3295 = vpop.f32.mrb[0].mxu0
    %3296 = vdwg.mxu0
    %vm3297 = vcmask 130048
    %v3298 = vsel %vm3297, %v3291, -inf
    %3299 = vmax.xlane.f32.xlu0 %v3298
    %v3300 = vpop.xlane.xlu0 %3299
    %v3301 = vsel %vm3297, %v3294, -inf
    %3302 = vmax.xlane.f32.xlu0 %v3301
    %v3303 = vpop.xlane.xlu0 %3302
    %v3304 = vsub.f32 %v3291, %v3300
    %v3305 = vsub.f32 %v3294, %v3303
    %v3306 = vmul.f32 %v3304, 1.442695
    %v3307 = vpow.pop %v3306
    %v3308 = vmul.f32 %v3305, 1.442695
    %v3309 = vpow.pop %v3308
    %v3310 = vsel %vm3297, %v3307, 0.0
    %3311 = vadd.xlane.f32.xlu0 %v3310
    %v3312 = vpop.xlane.xlu0 %3311
    %v3313 = vsel %vm3297, %v3309, 0.0
    %3314 = vadd.xlane.f32.xlu0 %v3313
    %v3315 = vpop.xlane.xlu0 %3314
    %v3316 = vrcp.pop %v3312
    %v3317 = vrcp.pop %v3315
    %v3318 = vmul.f32 %v3312, %v3316
    %v3319 = vmul.f32 %v3315, %v3317
    %v3320 = vsub.f32 2.0, %v3318
    %v3321 = vsub.f32 2.0, %v3319
    %v3322 = vmul.f32 %v3316, %v3320
    %v3323 = vmul.f32 %v3317, %v3321
    %v3324 = vmul.f32 %v3307, %v3322
    %v3325 = vmul.f32 %v3309, %v3323
    %v3326 = vpack.c.bf16 %v3325, %v3324
    %v3328 = vsel %vm3297, %v3326, 0
    %3330 = vmatprep.subr.bf16.mxu0 0
    %3331 = vmatpush1.bf16.msra.mxu0 %v3240
    %3332 = vmatprep.subr.bf16.mxu0 0
    %3333 = vmatpush1.bf16.msra.mxu0 0
    %3334 = vmatprep.subr.bf16.mxu0 0
    %3335 = vmatpush1.bf16.msra.mxu0 0
    %3336 = vmatprep.subr.bf16.mxu0 0
    %3337 = vmatpush1.bf16.msra.mxu0 0
    %3338 = vmatprep.subr.bf16.mxu0 0
    %3339 = vmatpush1.bf16.msra.mxu0 0
    %3340 = vmatprep.subr.bf16.mxu0 0
    %3341 = vmatpush1.bf16.msra.mxu0 0
    %3342 = vmatprep.subr.bf16.mxu0 0
    %3343 = vmatpush1.bf16.msra.mxu0 0
    %3344 = vmatprep.subr.bf16.mxu0 0
    %3345 = vmatpush1.bf16.msra.mxu0 0
    %3346 = vmatprep.subr.bf16.mxu0 0
    %3347 = vmatpush1.bf16.msra.mxu0 0
    %3348 = vmatprep.subr.bf16.mxu0 0
    %3349 = vmatpush1.bf16.msra.mxu0 0
    %3350 = vmatprep.subr.bf16.mxu0 0
    %3351 = vmatpush1.bf16.msra.mxu0 0
    %3352 = vmatprep.subr.bf16.mxu0 0
    %3353 = vmatpush1.bf16.msra.mxu0 0
    %3354 = vmatprep.subr.bf16.mxu0 0
    %3355 = vmatpush1.bf16.msra.mxu0 0
    %3356 = vmatprep.subr.bf16.mxu0 0
    %3357 = vmatpush1.bf16.msra.mxu0 0
    %3358 = vmatprep.subr.bf16.mxu0 0
    %3359 = vmatpush1.bf16.msra.mxu0 0
    %3360 = vmatprep.subr.bf16.mxu0 0
    %3361 = vmatpush1.bf16.msra.mxu0 0
    %3362 = vmatprep.mubr.bf16.mxu0 0
    %3363 = vmatmul.mubr.bf16.gmra.mrb[0].mxu0 %v3328
    %v3364 = vpop.f32.mrb[0].mxu0
    %v3365 = vadd.f32 0.0, %v3364
    %v3366 = vpop.f32.mrb[0].mxu0
    %v3367 = vpop.f32.mrb[0].mxu0
    %v3368 = vadd.f32 0.0, %v3367
    %v3369 = vpop.f32.mrb[0].mxu0
    %3370 = vdwg.mxu0
    %3371 = vmatprep.subr.bf16.mxu0 0
    %3372 = vmatpush1.bf16.xpose.msra.mxu0 %v3233
    %3373 = vmatprep.subr.bf16.mxu0 0
    %3374 = vmatpush1.bf16.xpose.msra.mxu0 0
    %3375 = vmatprep.subr.bf16.mxu0 0
    %3376 = vmatpush1.bf16.xpose.msra.mxu0 0
    %3377 = vmatprep.subr.bf16.mxu0 0
    %3378 = vmatpush1.bf16.xpose.msra.mxu0 0
    %3379 = vmatprep.subr.bf16.mxu0 0
    %3380 = vmatpush1.bf16.xpose.msra.mxu0 0
    %3381 = vmatprep.subr.bf16.mxu0 0
    %3382 = vmatpush1.bf16.xpose.msra.mxu0 0
    %3383 = vmatprep.subr.bf16.mxu0 0
    %3384 = vmatpush1.bf16.xpose.msra.mxu0 0
    %3385 = vmatprep.subr.bf16.mxu0 0
    %3386 = vmatpush1.bf16.xpose.msra.mxu0 0
    %3387 = vmatprep.subr.bf16.mxu0 0
    %3388 = vmatpush1.bf16.xpose.msra.mxu0 0
    %3389 = vmatprep.subr.bf16.mxu0 0
    %3390 = vmatpush1.bf16.xpose.msra.mxu0 0
    %3391 = vmatprep.subr.bf16.mxu0 0
    %3392 = vmatpush1.bf16.xpose.msra.mxu0 0
    %3393 = vmatprep.subr.bf16.mxu0 0
    %3394 = vmatpush1.bf16.xpose.msra.mxu0 0
    %3395 = vmatprep.subr.bf16.mxu0 0
    %3396 = vmatpush1.bf16.xpose.msra.mxu0 0
    %3397 = vmatprep.subr.bf16.mxu0 0
    %3398 = vmatpush1.bf16.xpose.msra.mxu0 0
    %3399 = vmatprep.subr.bf16.mxu0 0
    %3400 = vmatpush1.bf16.xpose.msra.mxu0 0
    %3401 = vmatprep.subr.bf16.mxu0 0
    %3402 = vmatpush1.bf16.xpose.msra.mxu0 0
    %3403 = vmatprep.mubr.bf16.mxu0 0
    %3404 = vmatmul.mubr.bf16.gmra.mrb[0].mxu0 %v3249
    %v3405 = vpop.f32.mrb[0].mxu0
    %v3406 = vadd.f32 0.0, %v3405
    %v3407 = vpop.f32.mrb[0].mxu0
    %v3408 = vpop.f32.mrb[0].mxu0
    %v3409 = vadd.f32 0.0, %v3408
    %v3410 = vpop.f32.mrb[0].mxu0
    %3411 = vdwg.mxu0
    %v3412 = vsel %vm3297, %v3406, -inf
    %3413 = vmax.xlane.f32.xlu0 %v3412
    %v3414 = vpop.xlane.xlu0 %3413
    %v3415 = vsel %vm3297, %v3409, -inf
    %3416 = vmax.xlane.f32.xlu0 %v3415
    %v3417 = vpop.xlane.xlu0 %3416
    %v3418 = vsub.f32 %v3406, %v3414
    %v3419 = vsub.f32 %v3409, %v3417
    %v3420 = vmul.f32 %v3418, 1.442695
    %v3421 = vpow.pop %v3420
    %v3422 = vmul.f32 %v3419, 1.442695
    %v3423 = vpow.pop %v3422
    %v3424 = vsel %vm3297, %v3421, 0.0
    %3425 = vadd.xlane.f32.xlu0 %v3424
    %v3426 = vpop.xlane.xlu0 %3425
    %v3427 = vsel %vm3297, %v3423, 0.0
    %3428 = vadd.xlane.f32.xlu0 %v3427
    %v3429 = vpop.xlane.xlu0 %3428
    %v3430 = vrcp.pop %v3426
    %v3431 = vrcp.pop %v3429
    %v3432 = vmul.f32 %v3426, %v3430
    %v3433 = vmul.f32 %v3429, %v3431
    %v3434 = vsub.f32 2.0, %v3432
    %v3435 = vsub.f32 2.0, %v3433
    %v3436 = vmul.f32 %v3430, %v3434
    %v3437 = vmul.f32 %v3431, %v3435
    %v3438 = vmul.f32 %v3421, %v3436
    %v3439 = vmul.f32 %v3423, %v3437
    %v3440 = vpack.c.bf16 %v3439, %v3438
    %v3442 = vsel %vm3297, %v3440, 0
    %3444 = vmatprep.subr.bf16.mxu0 0
    %3445 = vmatpush1.bf16.msra.mxu0 %v3241
    %3446 = vmatprep.subr.bf16.mxu0 0
    %3447 = vmatpush1.bf16.msra.mxu0 0
    %3448 = vmatprep.subr.bf16.mxu0 0
    %3449 = vmatpush1.bf16.msra.mxu0 0
    %3450 = vmatprep.subr.bf16.mxu0 0
    %3451 = vmatpush1.bf16.msra.mxu0 0
    %3452 = vmatprep.subr.bf16.mxu0 0
    %3453 = vmatpush1.bf16.msra.mxu0 0
    %3454 = vmatprep.subr.bf16.mxu0 0
    %3455 = vmatpush1.bf16.msra.mxu0 0
    %3456 = vmatprep.subr.bf16.mxu0 0
    %3457 = vmatpush1.bf16.msra.mxu0 0
    %3458 = vmatprep.subr.bf16.mxu0 0
    %3459 = vmatpush1.bf16.msra.mxu0 0
    %3460 = vmatprep.subr.bf16.mxu0 0
    %3461 = vmatpush1.bf16.msra.mxu0 0
    %3462 = vmatprep.subr.bf16.mxu0 0
    %3463 = vmatpush1.bf16.msra.mxu0 0
    %3464 = vmatprep.subr.bf16.mxu0 0
    %3465 = vmatpush1.bf16.msra.mxu0 0
    %3466 = vmatprep.subr.bf16.mxu0 0
    %3467 = vmatpush1.bf16.msra.mxu0 0
    %3468 = vmatprep.subr.bf16.mxu0 0
    %3469 = vmatpush1.bf16.msra.mxu0 0
    %3470 = vmatprep.subr.bf16.mxu0 0
    %3471 = vmatpush1.bf16.msra.mxu0 0
    %3472 = vmatprep.subr.bf16.mxu0 0
    %3473 = vmatpush1.bf16.msra.mxu0 0
    %3474 = vmatprep.subr.bf16.mxu0 0
    %3475 = vmatpush1.bf16.msra.mxu0 0
    %3476 = vmatprep.mubr.bf16.mxu0 0
    %3477 = vmatmul.mubr.bf16.gmra.mrb[0].mxu0 %v3442
    %v3478 = vpop.f32.mrb[0].mxu0
    %v3479 = vadd.f32 0.0, %v3478
    %v3480 = vpop.f32.mrb[0].mxu0
    %v3481 = vpop.f32.mrb[0].mxu0
    %v3482 = vadd.f32 0.0, %v3481
    %v3483 = vpop.f32.mrb[0].mxu0
    %3484 = vdwg.mxu0
    %3485 = vmatprep.subr.bf16.mxu0 0
    %3486 = vmatpush1.bf16.xpose.msra.mxu0 %v3234
    %3487 = vmatprep.subr.bf16.mxu0 0
    %3488 = vmatpush1.bf16.xpose.msra.mxu0 0
    %3489 = vmatprep.subr.bf16.mxu0 0
    %3490 = vmatpush1.bf16.xpose.msra.mxu0 0
    %3491 = vmatprep.subr.bf16.mxu0 0
    %3492 = vmatpush1.bf16.xpose.msra.mxu0 0
    %3493 = vmatprep.subr.bf16.mxu0 0
    %3494 = vmatpush1.bf16.xpose.msra.mxu0 0
    %3495 = vmatprep.subr.bf16.mxu0 0
    %3496 = vmatpush1.bf16.xpose.msra.mxu0 0
    %3497 = vmatprep.subr.bf16.mxu0 0
    %3498 = vmatpush1.bf16.xpose.msra.mxu0 0
    %3499 = vmatprep.subr.bf16.mxu0 0
    %3500 = vmatpush1.bf16.xpose.msra.mxu0 0
    %3501 = vmatprep.subr.bf16.mxu0 0
    %3502 = vmatpush1.bf16.xpose.msra.mxu0 0
    %3503 = vmatprep.subr.bf16.mxu0 0
    %3504 = vmatpush1.bf16.xpose.msra.mxu0 0
    %3505 = vmatprep.subr.bf16.mxu0 0
    %3506 = vmatpush1.bf16.xpose.msra.mxu0 0
    %3507 = vmatprep.subr.bf16.mxu0 0
    %3508 = vmatpush1.bf16.xpose.msra.mxu0 0
    %3509 = vmatprep.subr.bf16.mxu0 0
    %3510 = vmatpush1.bf16.xpose.msra.mxu0 0
    %3511 = vmatprep.subr.bf16.mxu0 0
    %3512 = vmatpush1.bf16.xpose.msra.mxu0 0
    %3513 = vmatprep.subr.bf16.mxu0 0
    %3514 = vmatpush1.bf16.xpose.msra.mxu0 0
    %3515 = vmatprep.subr.bf16.mxu0 0
    %3516 = vmatpush1.bf16.xpose.msra.mxu0 0
    %3517 = vmatprep.mubr.bf16.mxu0 0
    %3518 = vmatmul.mubr.bf16.gmra.mrb[0].mxu0 %v3250
    %v3519 = vpop.f32.mrb[0].mxu0
    %v3520 = vadd.f32 0.0, %v3519
    %v3521 = vpop.f32.mrb[0].mxu0
    %v3522 = vpop.f32.mrb[0].mxu0
    %v3523 = vadd.f32 0.0, %v3522
    %v3524 = vpop.f32.mrb[0].mxu0
    %3525 = vdwg.mxu0
    %v3526 = vsel %vm3297, %v3520, -inf
    %3527 = vmax.xlane.f32.xlu0 %v3526
    %v3528 = vpop.xlane.xlu0 %3527
    %v3529 = vsel %vm3297, %v3523, -inf
    %3530 = vmax.xlane.f32.xlu0 %v3529
    %v3531 = vpop.xlane.xlu0 %3530
    %v3532 = vsub.f32 %v3520, %v3528
    %v3533 = vsub.f32 %v3523, %v3531
    %v3534 = vmul.f32 %v3532, 1.442695
    %v3535 = vpow.pop %v3534
    %v3536 = vmul.f32 %v3533, 1.442695
    %v3537 = vpow.pop %v3536
    %v3538 = vsel %vm3297, %v3535, 0.0
    %3539 = vadd.xlane.f32.xlu0 %v3538
    %v3540 = vpop.xlane.xlu0 %3539
    %v3541 = vsel %vm3297, %v3537, 0.0
    %3542 = vadd.xlane.f32.xlu0 %v3541
    %v3543 = vpop.xlane.xlu0 %3542
    %v3544 = vrcp.pop %v3540
    %v3545 = vrcp.pop %v3543
    %v3546 = vmul.f32 %v3540, %v3544
    %v3547 = vmul.f32 %v3543, %v3545
    %v3548 = vsub.f32 2.0, %v3546
    %v3549 = vsub.f32 2.0, %v3547
    %v3550 = vmul.f32 %v3544, %v3548
    %v3551 = vmul.f32 %v3545, %v3549
    %v3552 = vmul.f32 %v3535, %v3550
    %v3553 = vmul.f32 %v3537, %v3551
    %v3554 = vpack.c.bf16 %v3553, %v3552
    %v3556 = vsel %vm3297, %v3554, 0
    %3558 = vmatprep.subr.bf16.mxu0 0
    %3559 = vmatpush1.bf16.msra.mxu0 %v3242
    %3560 = vmatprep.subr.bf16.mxu0 0
    %3561 = vmatpush1.bf16.msra.mxu0 0
    %3562 = vmatprep.subr.bf16.mxu0 0
    %3563 = vmatpush1.bf16.msra.mxu0 0
    %3564 = vmatprep.subr.bf16.mxu0 0
    %3565 = vmatpush1.bf16.msra.mxu0 0
    %3566 = vmatprep.subr.bf16.mxu0 0
    %3567 = vmatpush1.bf16.msra.mxu0 0
    %3568 = vmatprep.subr.bf16.mxu0 0
    %3569 = vmatpush1.bf16.msra.mxu0 0
    %3570 = vmatprep.subr.bf16.mxu0 0
    %3571 = vmatpush1.bf16.msra.mxu0 0
    %3572 = vmatprep.subr.bf16.mxu0 0
    %3573 = vmatpush1.bf16.msra.mxu0 0
    %3574 = vmatprep.subr.bf16.mxu0 0
    %3575 = vmatpush1.bf16.msra.mxu0 0
    %3576 = vmatprep.subr.bf16.mxu0 0
    %3577 = vmatpush1.bf16.msra.mxu0 0
    %3578 = vmatprep.subr.bf16.mxu0 0
    %3579 = vmatpush1.bf16.msra.mxu0 0
    %3580 = vmatprep.subr.bf16.mxu0 0
    %3581 = vmatpush1.bf16.msra.mxu0 0
    %3582 = vmatprep.subr.bf16.mxu0 0
    %3583 = vmatpush1.bf16.msra.mxu0 0
    %3584 = vmatprep.subr.bf16.mxu0 0
    %3585 = vmatpush1.bf16.msra.mxu0 0
    %3586 = vmatprep.subr.bf16.mxu0 0
    %3587 = vmatpush1.bf16.msra.mxu0 0
    %3588 = vmatprep.subr.bf16.mxu0 0
    %3589 = vmatpush1.bf16.msra.mxu0 0
    %3590 = vmatprep.mubr.bf16.mxu0 0
    %3591 = vmatmul.mubr.bf16.gmra.mrb[0].mxu0 %v3556
    %v3592 = vpop.f32.mrb[0].mxu0
    %v3593 = vadd.f32 0.0, %v3592
    %v3594 = vpop.f32.mrb[0].mxu0
    %v3595 = vpop.f32.mrb[0].mxu0
    %v3596 = vadd.f32 0.0, %v3595
    %v3597 = vpop.f32.mrb[0].mxu0
    %3598 = vdwg.mxu0
    %3599 = vmatprep.subr.bf16.mxu0 0
    %3600 = vmatpush1.bf16.xpose.msra.mxu0 %v3235
    %3601 = vmatprep.subr.bf16.mxu0 0
    %3602 = vmatpush1.bf16.xpose.msra.mxu0 0
    %3603 = vmatprep.subr.bf16.mxu0 0
    %3604 = vmatpush1.bf16.xpose.msra.mxu0 0
    %3605 = vmatprep.subr.bf16.mxu0 0
    %3606 = vmatpush1.bf16.xpose.msra.mxu0 0
    %3607 = vmatprep.subr.bf16.mxu0 0
    %3608 = vmatpush1.bf16.xpose.msra.mxu0 0
    %3609 = vmatprep.subr.bf16.mxu0 0
    %3610 = vmatpush1.bf16.xpose.msra.mxu0 0
    %3611 = vmatprep.subr.bf16.mxu0 0
    %3612 = vmatpush1.bf16.xpose.msra.mxu0 0
    %3613 = vmatprep.subr.bf16.mxu0 0
    %3614 = vmatpush1.bf16.xpose.msra.mxu0 0
    %3615 = vmatprep.subr.bf16.mxu0 0
    %3616 = vmatpush1.bf16.xpose.msra.mxu0 0
    %3617 = vmatprep.subr.bf16.mxu0 0
    %3618 = vmatpush1.bf16.xpose.msra.mxu0 0
    %3619 = vmatprep.subr.bf16.mxu0 0
    %3620 = vmatpush1.bf16.xpose.msra.mxu0 0
    %3621 = vmatprep.subr.bf16.mxu0 0
    %3622 = vmatpush1.bf16.xpose.msra.mxu0 0
    %3623 = vmatprep.subr.bf16.mxu0 0
    %3624 = vmatpush1.bf16.xpose.msra.mxu0 0
    %3625 = vmatprep.subr.bf16.mxu0 0
    %3626 = vmatpush1.bf16.xpose.msra.mxu0 0
    %3627 = vmatprep.subr.bf16.mxu0 0
    %3628 = vmatpush1.bf16.xpose.msra.mxu0 0
    %3629 = vmatprep.subr.bf16.mxu0 0
    %3630 = vmatpush1.bf16.xpose.msra.mxu0 0
    %3631 = vmatprep.mubr.bf16.mxu0 0
    %3632 = vmatmul.mubr.bf16.gmra.mrb[0].mxu0 %v3251
    %v3633 = vpop.f32.mrb[0].mxu0
    %v3634 = vadd.f32 0.0, %v3633
    %v3635 = vpop.f32.mrb[0].mxu0
    %v3636 = vpop.f32.mrb[0].mxu0
    %v3637 = vadd.f32 0.0, %v3636
    %v3638 = vpop.f32.mrb[0].mxu0
    %3639 = vdwg.mxu0
    %v3640 = vsel %vm3297, %v3634, -inf
    %3641 = vmax.xlane.f32.xlu0 %v3640
    %v3642 = vpop.xlane.xlu0 %3641
    %v3643 = vsel %vm3297, %v3637, -inf
    %3644 = vmax.xlane.f32.xlu0 %v3643
    %v3645 = vpop.xlane.xlu0 %3644
    %v3646 = vsub.f32 %v3634, %v3642
    %v3647 = vsub.f32 %v3637, %v3645
    %v3648 = vmul.f32 %v3646, 1.442695
    %v3649 = vpow.pop %v3648
    %v3650 = vmul.f32 %v3647, 1.442695
    %v3651 = vpow.pop %v3650
    %v3652 = vsel %vm3297, %v3649, 0.0
    %3653 = vadd.xlane.f32.xlu0 %v3652
    %v3654 = vpop.xlane.xlu0 %3653
    %v3655 = vsel %vm3297, %v3651, 0.0
    %3656 = vadd.xlane.f32.xlu0 %v3655
    %v3657 = vpop.xlane.xlu0 %3656
    %v3658 = vrcp.pop %v3654
    %v3659 = vrcp.pop %v3657
    %v3660 = vmul.f32 %v3654, %v3658
    %v3661 = vmul.f32 %v3657, %v3659
    %v3662 = vsub.f32 2.0, %v3660
    %v3663 = vsub.f32 2.0, %v3661
    %v3664 = vmul.f32 %v3658, %v3662
    %v3665 = vmul.f32 %v3659, %v3663
    %v3666 = vmul.f32 %v3649, %v3664
    %v3667 = vmul.f32 %v3651, %v3665
    %v3668 = vpack.c.bf16 %v3667, %v3666
    %v3670 = vsel %vm3297, %v3668, 0
    %3672 = vmatprep.subr.bf16.mxu0 0
    %3673 = vmatpush1.bf16.msra.mxu0 %v3243
    %3674 = vmatprep.subr.bf16.mxu0 0
    %3675 = vmatpush1.bf16.msra.mxu0 0
    %3676 = vmatprep.subr.bf16.mxu0 0
    %3677 = vmatpush1.bf16.msra.mxu0 0
    %3678 = vmatprep.subr.bf16.mxu0 0
    %3679 = vmatpush1.bf16.msra.mxu0 0
    %3680 = vmatprep.subr.bf16.mxu0 0
    %3681 = vmatpush1.bf16.msra.mxu0 0
    %3682 = vmatprep.subr.bf16.mxu0 0
    %3683 = vmatpush1.bf16.msra.mxu0 0
    %3684 = vmatprep.subr.bf16.mxu0 0
    %3685 = vmatpush1.bf16.msra.mxu0 0
    %3686 = vmatprep.subr.bf16.mxu0 0
    %3687 = vmatpush1.bf16.msra.mxu0 0
    %3688 = vmatprep.subr.bf16.mxu0 0
    %3689 = vmatpush1.bf16.msra.mxu0 0
    %3690 = vmatprep.subr.bf16.mxu0 0
    %3691 = vmatpush1.bf16.msra.mxu0 0
    %3692 = vmatprep.subr.bf16.mxu0 0
    %3693 = vmatpush1.bf16.msra.mxu0 0
    %3694 = vmatprep.subr.bf16.mxu0 0
    %3695 = vmatpush1.bf16.msra.mxu0 0
    %3696 = vmatprep.subr.bf16.mxu0 0
    %3697 = vmatpush1.bf16.msra.mxu0 0
    %3698 = vmatprep.subr.bf16.mxu0 0
    %3699 = vmatpush1.bf16.msra.mxu0 0
    %3700 = vmatprep.subr.bf16.mxu0 0
    %3701 = vmatpush1.bf16.msra.mxu0 0
    %3702 = vmatprep.subr.bf16.mxu0 0
    %3703 = vmatpush1.bf16.msra.mxu0 0
    %3704 = vmatprep.mubr.bf16.mxu0 0
    %3705 = vmatmul.mubr.bf16.gmra.mrb[0].mxu0 %v3670
    %v3706 = vpop.f32.mrb[0].mxu0
    %v3707 = vadd.f32 0.0, %v3706
    %v3708 = vpop.f32.mrb[0].mxu0
    %v3709 = vpop.f32.mrb[0].mxu0
    %v3710 = vadd.f32 0.0, %v3709
    %v3711 = vpop.f32.mrb[0].mxu0
    %3712 = vdwg.mxu0
    %3713 = vmatprep.subr.bf16.mxu0 0
    %3714 = vmatpush1.bf16.xpose.msra.mxu0 %v3236
    %3715 = vmatprep.subr.bf16.mxu0 0
    %3716 = vmatpush1.bf16.xpose.msra.mxu0 0
    %3717 = vmatprep.subr.bf16.mxu0 0
    %3718 = vmatpush1.bf16.xpose.msra.mxu0 0
    %3719 = vmatprep.subr.bf16.mxu0 0
    %3720 = vmatpush1.bf16.xpose.msra.mxu0 0
    %3721 = vmatprep.subr.bf16.mxu0 0
    %3722 = vmatpush1.bf16.xpose.msra.mxu0 0
    %3723 = vmatprep.subr.bf16.mxu0 0
    %3724 = vmatpush1.bf16.xpose.msra.mxu0 0
    %3725 = vmatprep.subr.bf16.mxu0 0
    %3726 = vmatpush1.bf16.xpose.msra.mxu0 0
    %3727 = vmatprep.subr.bf16.mxu0 0
    %3728 = vmatpush1.bf16.xpose.msra.mxu0 0
    %3729 = vmatprep.subr.bf16.mxu0 0
    %3730 = vmatpush1.bf16.xpose.msra.mxu0 0
    %3731 = vmatprep.subr.bf16.mxu0 0
    %3732 = vmatpush1.bf16.xpose.msra.mxu0 0
    %3733 = vmatprep.subr.bf16.mxu0 0
    %3734 = vmatpush1.bf16.xpose.msra.mxu0 0
    %3735 = vmatprep.subr.bf16.mxu0 0
    %3736 = vmatpush1.bf16.xpose.msra.mxu0 0
    %3737 = vmatprep.subr.bf16.mxu0 0
    %3738 = vmatpush1.bf16.xpose.msra.mxu0 0
    %3739 = vmatprep.subr.bf16.mxu0 0
    %3740 = vmatpush1.bf16.xpose.msra.mxu0 0
    %3741 = vmatprep.subr.bf16.mxu0 0
    %3742 = vmatpush1.bf16.xpose.msra.mxu0 0
    %3743 = vmatprep.subr.bf16.mxu0 0
    %3744 = vmatpush1.bf16.xpose.msra.mxu0 0
    %3745 = vmatprep.mubr.bf16.mxu0 0
    %3746 = vmatmul.mubr.bf16.gmra.mrb[0].mxu0 %v3252
    %v3747 = vpop.f32.mrb[0].mxu0
    %v3748 = vadd.f32 0.0, %v3747
    %v3749 = vpop.f32.mrb[0].mxu0
    %v3750 = vpop.f32.mrb[0].mxu0
    %v3751 = vadd.f32 0.0, %v3750
    %v3752 = vpop.f32.mrb[0].mxu0
    %3753 = vdwg.mxu0
    %v3754 = vsel %vm3297, %v3748, -inf
    %3755 = vmax.xlane.f32.xlu0 %v3754
    %v3756 = vpop.xlane.xlu0 %3755
    %v3757 = vsel %vm3297, %v3751, -inf
    %3758 = vmax.xlane.f32.xlu0 %v3757
    %v3759 = vpop.xlane.xlu0 %3758
    %v3760 = vsub.f32 %v3748, %v3756
    %v3761 = vsub.f32 %v3751, %v3759
    %v3762 = vmul.f32 %v3760, 1.442695
    %v3763 = vpow.pop %v3762
    %v3764 = vmul.f32 %v3761, 1.442695
    %v3765 = vpow.pop %v3764
    %v3766 = vsel %vm3297, %v3763, 0.0
    %3767 = vadd.xlane.f32.xlu0 %v3766
    %v3768 = vpop.xlane.xlu0 %3767
    %v3769 = vsel %vm3297, %v3765, 0.0
    %3770 = vadd.xlane.f32.xlu0 %v3769
    %v3771 = vpop.xlane.xlu0 %3770
    %v3772 = vrcp.pop %v3768
    %v3773 = vrcp.pop %v3771
    %v3774 = vmul.f32 %v3768, %v3772
    %v3775 = vmul.f32 %v3771, %v3773
    %v3776 = vsub.f32 2.0, %v3774
    %v3777 = vsub.f32 2.0, %v3775
    %v3778 = vmul.f32 %v3772, %v3776
    %v3779 = vmul.f32 %v3773, %v3777
    %v3780 = vmul.f32 %v3763, %v3778
    %v3781 = vmul.f32 %v3765, %v3779
    %v3782 = vpack.c.bf16 %v3781, %v3780
    %v3784 = vsel %vm3297, %v3782, 0
    %3786 = vmatprep.subr.bf16.mxu0 0
    %3787 = vmatpush1.bf16.msra.mxu0 %v3244
    %3788 = vmatprep.subr.bf16.mxu0 0
    %3789 = vmatpush1.bf16.msra.mxu0 0
    %3790 = vmatprep.subr.bf16.mxu0 0
    %3791 = vmatpush1.bf16.msra.mxu0 0
    %3792 = vmatprep.subr.bf16.mxu0 0
    %3793 = vmatpush1.bf16.msra.mxu0 0
    %3794 = vmatprep.subr.bf16.mxu0 0
    %3795 = vmatpush1.bf16.msra.mxu0 0
    %3796 = vmatprep.subr.bf16.mxu0 0
    %3797 = vmatpush1.bf16.msra.mxu0 0
    %3798 = vmatprep.subr.bf16.mxu0 0
    %3799 = vmatpush1.bf16.msra.mxu0 0
    %3800 = vmatprep.subr.bf16.mxu0 0
    %3801 = vmatpush1.bf16.msra.mxu0 0
    %3802 = vmatprep.subr.bf16.mxu0 0
    %3803 = vmatpush1.bf16.msra.mxu0 0
    %3804 = vmatprep.subr.bf16.mxu0 0
    %3805 = vmatpush1.bf16.msra.mxu0 0
    %3806 = vmatprep.subr.bf16.mxu0 0
    %3807 = vmatpush1.bf16.msra.mxu0 0
    %3808 = vmatprep.subr.bf16.mxu0 0
    %3809 = vmatpush1.bf16.msra.mxu0 0
    %3810 = vmatprep.subr.bf16.mxu0 0
    %3811 = vmatpush1.bf16.msra.mxu0 0
    %3812 = vmatprep.subr.bf16.mxu0 0
    %3813 = vmatpush1.bf16.msra.mxu0 0
    %3814 = vmatprep.subr.bf16.mxu0 0
    %3815 = vmatpush1.bf16.msra.mxu0 0
    %3816 = vmatprep.subr.bf16.mxu0 0
    %3817 = vmatpush1.bf16.msra.mxu0 0
    %3818 = vmatprep.mubr.bf16.mxu0 0
    %3819 = vmatmul.mubr.bf16.gmra.mrb[0].mxu0 %v3784
    %v3820 = vpop.f32.mrb[0].mxu0
    %v3821 = vadd.f32 0.0, %v3820
    %v3822 = vpop.f32.mrb[0].mxu0
    %v3823 = vpop.f32.mrb[0].mxu0
    %v3824 = vadd.f32 0.0, %v3823
    %v3825 = vpop.f32.mrb[0].mxu0
    %3826 = vdwg.mxu0
    %3827 = vmatprep.subr.bf16.mxu0 0
    %3828 = vmatpush1.bf16.xpose.msra.mxu0 %v3237
    %3829 = vmatprep.subr.bf16.mxu0 0
    %3830 = vmatpush1.bf16.xpose.msra.mxu0 0
    %3831 = vmatprep.subr.bf16.mxu0 0
    %3832 = vmatpush1.bf16.xpose.msra.mxu0 0
    %3833 = vmatprep.subr.bf16.mxu0 0
    %3834 = vmatpush1.bf16.xpose.msra.mxu0 0
    %3835 = vmatprep.subr.bf16.mxu0 0
    %3836 = vmatpush1.bf16.xpose.msra.mxu0 0
    %3837 = vmatprep.subr.bf16.mxu0 0
    %3838 = vmatpush1.bf16.xpose.msra.mxu0 0
    %3839 = vmatprep.subr.bf16.mxu0 0
    %3840 = vmatpush1.bf16.xpose.msra.mxu0 0
    %3841 = vmatprep.subr.bf16.mxu0 0
    %3842 = vmatpush1.bf16.xpose.msra.mxu0 0
    %3843 = vmatprep.subr.bf16.mxu0 0
    %3844 = vmatpush1.bf16.xpose.msra.mxu0 0
    %3845 = vmatprep.subr.bf16.mxu0 0
    %3846 = vmatpush1.bf16.xpose.msra.mxu0 0
    %3847 = vmatprep.subr.bf16.mxu0 0
    %3848 = vmatpush1.bf16.xpose.msra.mxu0 0
    %3849 = vmatprep.subr.bf16.mxu0 0
    %3850 = vmatpush1.bf16.xpose.msra.mxu0 0
    %3851 = vmatprep.subr.bf16.mxu0 0
    %3852 = vmatpush1.bf16.xpose.msra.mxu0 0
    %3853 = vmatprep.subr.bf16.mxu0 0
    %3854 = vmatpush1.bf16.xpose.msra.mxu0 0
    %3855 = vmatprep.subr.bf16.mxu0 0
    %3856 = vmatpush1.bf16.xpose.msra.mxu0 0
    %3857 = vmatprep.subr.bf16.mxu0 0
    %3858 = vmatpush1.bf16.xpose.msra.mxu0 0
    %3859 = vmatprep.mubr.bf16.mxu0 0
    %3860 = vmatmul.mubr.bf16.gmra.mrb[0].mxu0 %v3253
    %v3861 = vpop.f32.mrb[0].mxu0
    %v3862 = vadd.f32 0.0, %v3861
    %v3863 = vpop.f32.mrb[0].mxu0
    %v3864 = vpop.f32.mrb[0].mxu0
    %v3865 = vadd.f32 0.0, %v3864
    %v3866 = vpop.f32.mrb[0].mxu0
    %3867 = vdwg.mxu0
    %v3868 = vsel %vm3297, %v3862, -inf
    %3869 = vmax.xlane.f32.xlu0 %v3868
    %v3870 = vpop.xlane.xlu0 %3869
    %v3871 = vsel %vm3297, %v3865, -inf
    %3872 = vmax.xlane.f32.xlu0 %v3871
    %v3873 = vpop.xlane.xlu0 %3872
    %v3874 = vsub.f32 %v3862, %v3870
    %v3875 = vsub.f32 %v3865, %v3873
    %v3876 = vmul.f32 %v3874, 1.442695
    %v3877 = vpow.pop %v3876
    %v3878 = vmul.f32 %v3875, 1.442695
    %v3879 = vpow.pop %v3878
    %v3880 = vsel %vm3297, %v3877, 0.0
    %3881 = vadd.xlane.f32.xlu0 %v3880
    %v3882 = vpop.xlane.xlu0 %3881
    %v3883 = vsel %vm3297, %v3879, 0.0
    %3884 = vadd.xlane.f32.xlu0 %v3883
    %v3885 = vpop.xlane.xlu0 %3884
    %v3886 = vrcp.pop %v3882
    %v3887 = vrcp.pop %v3885
    %v3888 = vmul.f32 %v3882, %v3886
    %v3889 = vmul.f32 %v3885, %v3887
    %v3890 = vsub.f32 2.0, %v3888
    %v3891 = vsub.f32 2.0, %v3889
    %v3892 = vmul.f32 %v3886, %v3890
    %v3893 = vmul.f32 %v3887, %v3891
    %v3894 = vmul.f32 %v3877, %v3892
    %v3895 = vmul.f32 %v3879, %v3893
    %v3896 = vpack.c.bf16 %v3895, %v3894
    %v3898 = vsel %vm3297, %v3896, 0
    %3900 = vmatprep.subr.bf16.mxu0 0
    %3901 = vmatpush1.bf16.msra.mxu0 %v3245
    %3902 = vmatprep.subr.bf16.mxu0 0
    %3903 = vmatpush1.bf16.msra.mxu0 0
    %3904 = vmatprep.subr.bf16.mxu0 0
    %3905 = vmatpush1.bf16.msra.mxu0 0
    %3906 = vmatprep.subr.bf16.mxu0 0
    %3907 = vmatpush1.bf16.msra.mxu0 0
    %3908 = vmatprep.subr.bf16.mxu0 0
    %3909 = vmatpush1.bf16.msra.mxu0 0
    %3910 = vmatprep.subr.bf16.mxu0 0
    %3911 = vmatpush1.bf16.msra.mxu0 0
    %3912 = vmatprep.subr.bf16.mxu0 0
    %3913 = vmatpush1.bf16.msra.mxu0 0
    %3914 = vmatprep.subr.bf16.mxu0 0
    %3915 = vmatpush1.bf16.msra.mxu0 0
    %3916 = vmatprep.subr.bf16.mxu0 0
    %3917 = vmatpush1.bf16.msra.mxu0 0
    %3918 = vmatprep.subr.bf16.mxu0 0
    %3919 = vmatpush1.bf16.msra.mxu0 0
    %3920 = vmatprep.subr.bf16.mxu0 0
    %3921 = vmatpush1.bf16.msra.mxu0 0
    %3922 = vmatprep.subr.bf16.mxu0 0
    %3923 = vmatpush1.bf16.msra.mxu0 0
    %3924 = vmatprep.subr.bf16.mxu0 0
    %3925 = vmatpush1.bf16.msra.mxu0 0
    %3926 = vmatprep.subr.bf16.mxu0 0
    %3927 = vmatpush1.bf16.msra.mxu0 0
    %3928 = vmatprep.subr.bf16.mxu0 0
    %3929 = vmatpush1.bf16.msra.mxu0 0
    %3930 = vmatprep.subr.bf16.mxu0 0
    %3931 = vmatpush1.bf16.msra.mxu0 0
    %3932 = vmatprep.mubr.bf16.mxu0 0
    %3933 = vmatmul.mubr.bf16.gmra.mrb[0].mxu0 %v3898
    %v3934 = vpop.f32.mrb[0].mxu0
    %v3935 = vadd.f32 0.0, %v3934
    %v3936 = vpop.f32.mrb[0].mxu0
    %v3937 = vpop.f32.mrb[0].mxu0
    %v3938 = vadd.f32 0.0, %v3937
    %v3939 = vpop.f32.mrb[0].mxu0
    %3940 = vdwg.mxu0
    %3941 = vmatprep.subr.bf16.mxu0 0
    %3942 = vmatpush1.bf16.xpose.msra.mxu0 %v3238
    %3943 = vmatprep.subr.bf16.mxu0 0
    %3944 = vmatpush1.bf16.xpose.msra.mxu0 0
    %3945 = vmatprep.subr.bf16.mxu0 0
    %3946 = vmatpush1.bf16.xpose.msra.mxu0 0
    %3947 = vmatprep.subr.bf16.mxu0 0
    %3948 = vmatpush1.bf16.xpose.msra.mxu0 0
    %3949 = vmatprep.subr.bf16.mxu0 0
    %3950 = vmatpush1.bf16.xpose.msra.mxu0 0
    %3951 = vmatprep.subr.bf16.mxu0 0
    %3952 = vmatpush1.bf16.xpose.msra.mxu0 0
    %3953 = vmatprep.subr.bf16.mxu0 0
    %3954 = vmatpush1.bf16.xpose.msra.mxu0 0
    %3955 = vmatprep.subr.bf16.mxu0 0
    %3956 = vmatpush1.bf16.xpose.msra.mxu0 0
    %3957 = vmatprep.subr.bf16.mxu0 0
    %3958 = vmatpush1.bf16.xpose.msra.mxu0 0
    %3959 = vmatprep.subr.bf16.mxu0 0
    %3960 = vmatpush1.bf16.xpose.msra.mxu0 0
    %3961 = vmatprep.subr.bf16.mxu0 0
    %3962 = vmatpush1.bf16.xpose.msra.mxu0 0
    %3963 = vmatprep.subr.bf16.mxu0 0
    %3964 = vmatpush1.bf16.xpose.msra.mxu0 0
    %3965 = vmatprep.subr.bf16.mxu0 0
    %3966 = vmatpush1.bf16.xpose.msra.mxu0 0
    %3967 = vmatprep.subr.bf16.mxu0 0
    %3968 = vmatpush1.bf16.xpose.msra.mxu0 0
    %3969 = vmatprep.subr.bf16.mxu0 0
    %3970 = vmatpush1.bf16.xpose.msra.mxu0 0
    %3971 = vmatprep.subr.bf16.mxu0 0
    %3972 = vmatpush1.bf16.xpose.msra.mxu0 0
    %3973 = vmatprep.mubr.bf16.mxu0 0
    %3974 = vmatmul.mubr.bf16.gmra.mrb[0].mxu0 %v3254
    %v3975 = vpop.f32.mrb[0].mxu0
    %v3976 = vadd.f32 0.0, %v3975
    %v3977 = vpop.f32.mrb[0].mxu0
    %v3978 = vpop.f32.mrb[0].mxu0
    %v3979 = vadd.f32 0.0, %v3978
    %v3980 = vpop.f32.mrb[0].mxu0
    %3981 = vdwg.mxu0
    %v3982 = vsel %vm3297, %v3976, -inf
    %3983 = vmax.xlane.f32.xlu0 %v3982
    %v3984 = vpop.xlane.xlu0 %3983
    %v3985 = vsel %vm3297, %v3979, -inf
    %3986 = vmax.xlane.f32.xlu0 %v3985
    %v3987 = vpop.xlane.xlu0 %3986
    %v3988 = vsub.f32 %v3976, %v3984
    %v3989 = vsub.f32 %v3979, %v3987
    %v3990 = vmul.f32 %v3988, 1.442695
    %v3991 = vpow.pop %v3990
    %v3992 = vmul.f32 %v3989, 1.442695
    %v3993 = vpow.pop %v3992
    %v3994 = vsel %vm3297, %v3991, 0.0
    %3995 = vadd.xlane.f32.xlu0 %v3994
    %v3996 = vpop.xlane.xlu0 %3995
    %v3997 = vsel %vm3297, %v3993, 0.0
    %3998 = vadd.xlane.f32.xlu0 %v3997
    %v3999 = vpop.xlane.xlu0 %3998
    %v4000 = vrcp.pop %v3996
    %v4001 = vrcp.pop %v3999
    %v4002 = vmul.f32 %v3996, %v4000
    %v4003 = vmul.f32 %v3999, %v4001
    %v4004 = vsub.f32 2.0, %v4002
    %v4005 = vsub.f32 2.0, %v4003
    %v4006 = vmul.f32 %v4000, %v4004
    %v4007 = vmul.f32 %v4001, %v4005
    %v4008 = vmul.f32 %v3991, %v4006
    %v4009 = vmul.f32 %v3993, %v4007
    %v4010 = vpack.c.bf16 %v4009, %v4008
    %v4012 = vsel %vm3297, %v4010, 0
    %4014 = vmatprep.subr.bf16.mxu0 0
    %4015 = vmatpush1.bf16.msra.mxu0 %v3246
    %4016 = vmatprep.subr.bf16.mxu0 0
    %4017 = vmatpush1.bf16.msra.mxu0 0
    %4018 = vmatprep.subr.bf16.mxu0 0
    %4019 = vmatpush1.bf16.msra.mxu0 0
    %4020 = vmatprep.subr.bf16.mxu0 0
    %4021 = vmatpush1.bf16.msra.mxu0 0
    %4022 = vmatprep.subr.bf16.mxu0 0
    %4023 = vmatpush1.bf16.msra.mxu0 0
    %4024 = vmatprep.subr.bf16.mxu0 0
    %4025 = vmatpush1.bf16.msra.mxu0 0
    %4026 = vmatprep.subr.bf16.mxu0 0
    %4027 = vmatpush1.bf16.msra.mxu0 0
    %4028 = vmatprep.subr.bf16.mxu0 0
    %4029 = vmatpush1.bf16.msra.mxu0 0
    %4030 = vmatprep.subr.bf16.mxu0 0
    %4031 = vmatpush1.bf16.msra.mxu0 0
    %4032 = vmatprep.subr.bf16.mxu0 0
    %4033 = vmatpush1.bf16.msra.mxu0 0
    %4034 = vmatprep.subr.bf16.mxu0 0
    %4035 = vmatpush1.bf16.msra.mxu0 0
    %4036 = vmatprep.subr.bf16.mxu0 0
    %4037 = vmatpush1.bf16.msra.mxu0 0
    %4038 = vmatprep.subr.bf16.mxu0 0
    %4039 = vmatpush1.bf16.msra.mxu0 0
    %4040 = vmatprep.subr.bf16.mxu0 0
    %4041 = vmatpush1.bf16.msra.mxu0 0
    %4042 = vmatprep.subr.bf16.mxu0 0
    %4043 = vmatpush1.bf16.msra.mxu0 0
    %4044 = vmatprep.subr.bf16.mxu0 0
    %4045 = vmatpush1.bf16.msra.mxu0 0
    %4046 = vmatprep.mubr.bf16.mxu0 0
    %4047 = vmatmul.mubr.bf16.gmra.mrb[0].mxu0 %v4012
    %v4048 = vpop.f32.mrb[0].mxu0
    %v4049 = vadd.f32 0.0, %v4048
    %v4050 = vpop.f32.mrb[0].mxu0
    %v4051 = vpop.f32.mrb[0].mxu0
    %v4052 = vadd.f32 0.0, %v4051
    %v4053 = vpop.f32.mrb[0].mxu0
    %4054 = vdwg.mxu0
    %4055 = vmatprep.subr.bf16.mxu0 0
    %4056 = vmatpush1.bf16.xpose.msra.mxu0 %v3239
    %4057 = vmatprep.subr.bf16.mxu0 0
    %4058 = vmatpush1.bf16.xpose.msra.mxu0 0
    %4059 = vmatprep.subr.bf16.mxu0 0
    %4060 = vmatpush1.bf16.xpose.msra.mxu0 0
    %4061 = vmatprep.subr.bf16.mxu0 0
    %4062 = vmatpush1.bf16.xpose.msra.mxu0 0
    %4063 = vmatprep.subr.bf16.mxu0 0
    %4064 = vmatpush1.bf16.xpose.msra.mxu0 0
    %4065 = vmatprep.subr.bf16.mxu0 0
    %4066 = vmatpush1.bf16.xpose.msra.mxu0 0
    %4067 = vmatprep.subr.bf16.mxu0 0
    %4068 = vmatpush1.bf16.xpose.msra.mxu0 0
    %4069 = vmatprep.subr.bf16.mxu0 0
    %4070 = vmatpush1.bf16.xpose.msra.mxu0 0
    %4071 = vmatprep.subr.bf16.mxu0 0
    %4072 = vmatpush1.bf16.xpose.msra.mxu0 0
    %4073 = vmatprep.subr.bf16.mxu0 0
    %4074 = vmatpush1.bf16.xpose.msra.mxu0 0
    %4075 = vmatprep.subr.bf16.mxu0 0
    %4076 = vmatpush1.bf16.xpose.msra.mxu0 0
    %4077 = vmatprep.subr.bf16.mxu0 0
    %4078 = vmatpush1.bf16.xpose.msra.mxu0 0
    %4079 = vmatprep.subr.bf16.mxu0 0
    %4080 = vmatpush1.bf16.xpose.msra.mxu0 0
    %4081 = vmatprep.subr.bf16.mxu0 0
    %4082 = vmatpush1.bf16.xpose.msra.mxu0 0
    %4083 = vmatprep.subr.bf16.mxu0 0
    %4084 = vmatpush1.bf16.xpose.msra.mxu0 0
    %4085 = vmatprep.subr.bf16.mxu0 0
    %4086 = vmatpush1.bf16.xpose.msra.mxu0 0
    %4087 = vmatprep.mubr.bf16.mxu0 0
    %4088 = vmatmul.mubr.bf16.gmra.mrb[0].mxu0 %v3255
    %v4089 = vpop.f32.mrb[0].mxu0
    %v4090 = vadd.f32 0.0, %v4089
    %v4091 = vpop.f32.mrb[0].mxu0
    %v4092 = vpop.f32.mrb[0].mxu0
    %v4093 = vadd.f32 0.0, %v4092
    %v4094 = vpop.f32.mrb[0].mxu0
    %4095 = vdwg.mxu0
    %v4096 = vsel %vm3297, %v4090, -inf
    %4097 = vmax.xlane.f32.xlu0 %v4096
    %v4098 = vpop.xlane.xlu0 %4097
    %v4099 = vsel %vm3297, %v4093, -inf
    %4100 = vmax.xlane.f32.xlu0 %v4099
    %v4101 = vpop.xlane.xlu0 %4100
    %v4102 = vsub.f32 %v4090, %v4098
    %v4103 = vsub.f32 %v4093, %v4101
    %v4104 = vmul.f32 %v4102, 1.442695
    %v4105 = vpow.pop %v4104
    %v4106 = vmul.f32 %v4103, 1.442695
    %v4107 = vpow.pop %v4106
    %v4108 = vsel %vm3297, %v4105, 0.0
    %4109 = vadd.xlane.f32.xlu0 %v4108
    %v4110 = vpop.xlane.xlu0 %4109
    %v4111 = vsel %vm3297, %v4107, 0.0
    %4112 = vadd.xlane.f32.xlu0 %v4111
    %v4113 = vpop.xlane.xlu0 %4112
    %v4114 = vrcp.pop %v4110
    %v4115 = vrcp.pop %v4113
    %v4116 = vmul.f32 %v4110, %v4114
    %v4117 = vmul.f32 %v4113, %v4115
    %v4118 = vsub.f32 2.0, %v4116
    %v4119 = vsub.f32 2.0, %v4117
    %v4120 = vmul.f32 %v4114, %v4118
    %v4121 = vmul.f32 %v4115, %v4119
    %v4122 = vmul.f32 %v4105, %v4120
    %v4123 = vmul.f32 %v4107, %v4121
    %v4124 = vpack.c.bf16 %v4123, %v4122
    %v4126 = vsel %vm3297, %v4124, 0
    %4128 = vmatprep.subr.bf16.mxu0 0
    %4129 = vmatpush1.bf16.msra.mxu0 %v3247
    %4130 = vmatprep.subr.bf16.mxu0 0
    %4131 = vmatpush1.bf16.msra.mxu0 0
    %4132 = vmatprep.subr.bf16.mxu0 0
    %4133 = vmatpush1.bf16.msra.mxu0 0
    %4134 = vmatprep.subr.bf16.mxu0 0
    %4135 = vmatpush1.bf16.msra.mxu0 0
    %4136 = vmatprep.subr.bf16.mxu0 0
    %4137 = vmatpush1.bf16.msra.mxu0 0
    %4138 = vmatprep.subr.bf16.mxu0 0
    %4139 = vmatpush1.bf16.msra.mxu0 0
    %4140 = vmatprep.subr.bf16.mxu0 0
    %4141 = vmatpush1.bf16.msra.mxu0 0
    %4142 = vmatprep.subr.bf16.mxu0 0
    %4143 = vmatpush1.bf16.msra.mxu0 0
    %4144 = vmatprep.subr.bf16.mxu0 0
    %4145 = vmatpush1.bf16.msra.mxu0 0
    %4146 = vmatprep.subr.bf16.mxu0 0
    %4147 = vmatpush1.bf16.msra.mxu0 0
    %4148 = vmatprep.subr.bf16.mxu0 0
    %4149 = vmatpush1.bf16.msra.mxu0 0
    %4150 = vmatprep.subr.bf16.mxu0 0
    %4151 = vmatpush1.bf16.msra.mxu0 0
    %4152 = vmatprep.subr.bf16.mxu0 0
    %4153 = vmatpush1.bf16.msra.mxu0 0
    %4154 = vmatprep.subr.bf16.mxu0 0
    %4155 = vmatpush1.bf16.msra.mxu0 0
    %4156 = vmatprep.subr.bf16.mxu0 0
    %4157 = vmatpush1.bf16.msra.mxu0 0
    %4158 = vmatprep.subr.bf16.mxu0 0
    %4159 = vmatpush1.bf16.msra.mxu0 0
    %4160 = vmatprep.mubr.bf16.mxu0 0
    %4161 = vmatmul.mubr.bf16.gmra.mrb[0].mxu0 %v4126
    %v4162 = vpop.f32.mrb[0].mxu0
    %v4163 = vadd.f32 0.0, %v4162
    %v4164 = vpop.f32.mrb[0].mxu0
    %v4165 = vpop.f32.mrb[0].mxu0
    %v4166 = vadd.f32 0.0, %v4165
    %v4167 = vpop.f32.mrb[0].mxu0
    %4168 = vdwg.mxu0
    %v4169 = vpack.c.bf16 %v3368, %v3365
    %v4170 = vpack.c.bf16 %v3482, %v3479
    %v4171 = vpack.c.bf16 %v3596, %v3593
    %v4172 = vpack.c.bf16 %v3710, %v3707
    %v4173 = vpack.c.bf16 %v3824, %v3821
    %v4174 = vpack.c.bf16 %v3938, %v3935
    %v4175 = vpack.c.bf16 %v4052, %v4049
    %v4176 = vpack.c.bf16 %v4166, %v4163
    %v4177 = vld [vmem:[#allocation11] sm:$0xff]
    %v4178 = vld [vmem:[#allocation11 + $0x8] sm:$0xff]
    %v4179 = vld [vmem:[#allocation11 + $0x10] sm:$0xff]
    %v4180 = vld [vmem:[#allocation11 + $0x18] sm:$0xff]
    %v4181 = vld [vmem:[#allocation11 + $0x20] sm:$0xff]
    %v4182 = vld [vmem:[#allocation11 + $0x28] sm:$0xff]
    %v4183 = vld [vmem:[#allocation11 + $0x30] sm:$0xff]
    %v4184 = vld [vmem:[#allocation11 + $0x38] sm:$0xff]
    %v4185 = vld [vmem:[#allocation11 + $0x40] sm:$0xff]
    %v4186 = vld [vmem:[#allocation11 + $0x48] sm:$0xff]
    %v4187 = vld [vmem:[#allocation11 + $0x50] sm:$0xff]
    %v4188 = vld [vmem:[#allocation11 + $0x58] sm:$0xff]
    %v4189 = vld [vmem:[#allocation11 + $0x60] sm:$0xff]
    %v4190 = vld [vmem:[#allocation11 + $0x68] sm:$0xff]
    %v4191 = vld [vmem:[#allocation11 + $0x70] sm:$0xff]
    %v4192 = vld [vmem:[#allocation11 + $0x78] sm:$0xff]
    %v4193 = vld [vmem:[#allocation11 + $0x80] sm:$0xff]
    %v4194 = vld [vmem:[#allocation11 + $0x88] sm:$0xff]
    %v4195 = vld [vmem:[#allocation11 + $0x90] sm:$0xff]
    %v4196 = vld [vmem:[#allocation11 + $0x98] sm:$0xff]
    %v4197 = vld [vmem:[#allocation11 + $0xa0] sm:$0xff]
    %v4198 = vld [vmem:[#allocation11 + $0xa8] sm:$0xff]
    %v4199 = vld [vmem:[#allocation11 + $0xb0] sm:$0xff]
    %v4200 = vld [vmem:[#allocation11 + $0xb8] sm:$0xff]
    %v4201 = vld [vmem:[#allocation11 + $0xc0] sm:$0xff]
    %v4202 = vld [vmem:[#allocation11 + $0xc8] sm:$0xff]
    %v4203 = vld [vmem:[#allocation11 + $0xd0] sm:$0xff]
    %v4204 = vld [vmem:[#allocation11 + $0xd8] sm:$0xff]
    %v4205 = vld [vmem:[#allocation11 + $0xe0] sm:$0xff]
    %v4206 = vld [vmem:[#allocation11 + $0xe8] sm:$0xff]
    %v4207 = vld [vmem:[#allocation11 + $0xf0] sm:$0xff]
    %v4208 = vld [vmem:[#allocation11 + $0xf8] sm:$0xff]
    %v4209 = vld [vmem:[#allocation11 + $0x100] sm:$0xff]
    %v4210 = vld [vmem:[#allocation11 + $0x108] sm:$0xff]
    %v4211 = vld [vmem:[#allocation11 + $0x110] sm:$0xff]
    %v4212 = vld [vmem:[#allocation11 + $0x118] sm:$0xff]
    %v4213 = vld [vmem:[#allocation11 + $0x120] sm:$0xff]
    %v4214 = vld [vmem:[#allocation11 + $0x128] sm:$0xff]
    %v4215 = vld [vmem:[#allocation11 + $0x130] sm:$0xff]
    %v4216 = vld [vmem:[#allocation11 + $0x138] sm:$0xff]
    %v4217 = vld [vmem:[#allocation11 + $0x140] sm:$0xff]
    %v4218 = vld [vmem:[#allocation11 + $0x148] sm:$0xff]
    %v4219 = vld [vmem:[#allocation11 + $0x150] sm:$0xff]
    %v4220 = vld [vmem:[#allocation11 + $0x158] sm:$0xff]
    %v4221 = vld [vmem:[#allocation11 + $0x160] sm:$0xff]
    %v4222 = vld [vmem:[#allocation11 + $0x168] sm:$0xff]
    %v4223 = vld [vmem:[#allocation11 + $0x170] sm:$0xff]
    %v4224 = vld [vmem:[#allocation11 + $0x178] sm:$0xff]
    %v4225 = vld [vmem:[#allocation11 + $0x180] sm:$0xff]
    %v4226 = vld [vmem:[#allocation11 + $0x188] sm:$0xff]
    %v4227 = vld [vmem:[#allocation11 + $0x190] sm:$0xff]
    %v4228 = vld [vmem:[#allocation11 + $0x198] sm:$0xff]
    %v4229 = vld [vmem:[#allocation11 + $0x1a0] sm:$0xff]
    %v4230 = vld [vmem:[#allocation11 + $0x1a8] sm:$0xff]
    %v4231 = vld [vmem:[#allocation11 + $0x1b0] sm:$0xff]
    %v4232 = vld [vmem:[#allocation11 + $0x1b8] sm:$0xff]
    %v4233 = vld [vmem:[#allocation11 + $0x1c0] sm:$0xff]
    %v4234 = vld [vmem:[#allocation11 + $0x1c8] sm:$0xff]
    %v4235 = vld [vmem:[#allocation11 + $0x1d0] sm:$0xff]
    %v4236 = vld [vmem:[#allocation11 + $0x1d8] sm:$0xff]
    %v4237 = vld [vmem:[#allocation11 + $0x1e0] sm:$0xff]
    %v4238 = vld [vmem:[#allocation11 + $0x1e8] sm:$0xff]
    %v4239 = vld [vmem:[#allocation11 + $0x1f0] sm:$0xff]
    %v4240 = vld [vmem:[#allocation11 + $0x1f8] sm:$0xff]
    %v4241 = vld [vmem:[#allocation11 + $0x200] sm:$0xff]
    %v4242 = vld [vmem:[#allocation11 + $0x208] sm:$0xff]
    %v4243 = vld [vmem:[#allocation11 + $0x210] sm:$0xff]
    %v4244 = vld [vmem:[#allocation11 + $0x218] sm:$0xff]
    %v4245 = vld [vmem:[#allocation11 + $0x220] sm:$0xff]
    %v4246 = vld [vmem:[#allocation11 + $0x228] sm:$0xff]
    %v4247 = vld [vmem:[#allocation11 + $0x230] sm:$0xff]
    %v4248 = vld [vmem:[#allocation11 + $0x238] sm:$0xff]
    %v4249 = vld [vmem:[#allocation11 + $0x240] sm:$0xff]
    %v4250 = vld [vmem:[#allocation11 + $0x248] sm:$0xff]
    %v4251 = vld [vmem:[#allocation11 + $0x250] sm:$0xff]
    %v4252 = vld [vmem:[#allocation11 + $0x258] sm:$0xff]
    %v4253 = vld [vmem:[#allocation11 + $0x260] sm:$0xff]
    %v4254 = vld [vmem:[#allocation11 + $0x268] sm:$0xff]
    %v4255 = vld [vmem:[#allocation11 + $0x270] sm:$0xff]
    %v4256 = vld [vmem:[#allocation11 + $0x278] sm:$0xff]
    %v4257 = vld [vmem:[#allocation11 + $0x280] sm:$0xff]
    %v4258 = vld [vmem:[#allocation11 + $0x288] sm:$0xff]
    %v4259 = vld [vmem:[#allocation11 + $0x290] sm:$0xff]
    %v4260 = vld [vmem:[#allocation11 + $0x298] sm:$0xff]
    %v4261 = vld [vmem:[#allocation11 + $0x2a0] sm:$0xff]
    %v4262 = vld [vmem:[#allocation11 + $0x2a8] sm:$0xff]
    %v4263 = vld [vmem:[#allocation11 + $0x2b0] sm:$0xff]
    %v4264 = vld [vmem:[#allocation11 + $0x2b8] sm:$0xff]
    %v4265 = vld [vmem:[#allocation11 + $0x2c0] sm:$0xff]
    %v4266 = vld [vmem:[#allocation11 + $0x2c8] sm:$0xff]
    %v4267 = vld [vmem:[#allocation11 + $0x2d0] sm:$0xff]
    %v4268 = vld [vmem:[#allocation11 + $0x2d8] sm:$0xff]
    %v4269 = vld [vmem:[#allocation11 + $0x2e0] sm:$0xff]
    %v4270 = vld [vmem:[#allocation11 + $0x2e8] sm:$0xff]
    %v4271 = vld [vmem:[#allocation11 + $0x2f0] sm:$0xff]
    %v4272 = vld [vmem:[#allocation11 + $0x2f8] sm:$0xff]
    %v4273 = vld [vmem:[#allocation11 + $0x300] sm:$0xff]
    %v4274 = vld [vmem:[#allocation11 + $0x308] sm:$0xff]
    %v4275 = vld [vmem:[#allocation11 + $0x310] sm:$0xff]
    %v4276 = vld [vmem:[#allocation11 + $0x318] sm:$0xff]
    %v4277 = vld [vmem:[#allocation11 + $0x320] sm:$0xff]
    %v4278 = vld [vmem:[#allocation11 + $0x328] sm:$0xff]
    %v4279 = vld [vmem:[#allocation11 + $0x330] sm:$0xff]
    %v4280 = vld [vmem:[#allocation11 + $0x338] sm:$0xff]
    %v4281 = vld [vmem:[#allocation11 + $0x340] sm:$0xff]
    %v4282 = vld [vmem:[#allocation11 + $0x348] sm:$0xff]
    %v4283 = vld [vmem:[#allocation11 + $0x350] sm:$0xff]
    %v4284 = vld [vmem:[#allocation11 + $0x358] sm:$0xff]
    %v4285 = vld [vmem:[#allocation11 + $0x360] sm:$0xff]
    %v4286 = vld [vmem:[#allocation11 + $0x368] sm:$0xff]
    %v4287 = vld [vmem:[#allocation11 + $0x370] sm:$0xff]
    %v4288 = vld [vmem:[#allocation11 + $0x378] sm:$0xff]
    %v4289 = vld [vmem:[#allocation11 + $0x380] sm:$0xff]
    %v4290 = vld [vmem:[#allocation11 + $0x388] sm:$0xff]
    %v4291 = vld [vmem:[#allocation11 + $0x390] sm:$0xff]
    %v4292 = vld [vmem:[#allocation11 + $0x398] sm:$0xff]
    %v4293 = vld [vmem:[#allocation11 + $0x3a0] sm:$0xff]
    %v4294 = vld [vmem:[#allocation11 + $0x3a8] sm:$0xff]
    %v4295 = vld [vmem:[#allocation11 + $0x3b0] sm:$0xff]
    %v4296 = vld [vmem:[#allocation11 + $0x3b8] sm:$0xff]
    %v4297 = vld [vmem:[#allocation11 + $0x3c0] sm:$0xff]
    %v4298 = vld [vmem:[#allocation11 + $0x3c8] sm:$0xff]
    %v4299 = vld [vmem:[#allocation11 + $0x3d0] sm:$0xff]
    %v4300 = vld [vmem:[#allocation11 + $0x3d8] sm:$0xff]
    %v4301 = vld [vmem:[#allocation11 + $0x3e0] sm:$0xff]
    %v4302 = vld [vmem:[#allocation11 + $0x3e8] sm:$0xff]
    %v4303 = vld [vmem:[#allocation11 + $0x3f0] sm:$0xff]
    %v4304 = vld [vmem:[#allocation11 + $0x3f8] sm:$0xff]
    %v4305 = vld [vmem:[#allocation13] sm:$0xf]
    %v4307 = vlaneseq
    %v4308 = vshrl.u32 %v4307, 7
    %v4309 = vsub.s32 0, %v4308
    %v4310 = vrot.slane %v4305, %v4309
    %v4311 = vlaneseq
    %v4312 = vshrl.u32 %v4311, 7
    %v4313 = vsub.s32 1, %v4312
    %v4314 = vrot.slane %v4305, %v4313
    %v4315 = vlaneseq
    %v4316 = vshrl.u32 %v4315, 7
    %v4317 = vsub.s32 2, %v4316
    %v4318 = vrot.slane %v4305, %v4317
    %v4319 = vlaneseq
    %v4320 = vshrl.u32 %v4319, 7
    %v4321 = vsub.s32 3, %v4320
    %v4322 = vrot.slane %v4305, %v4321
    %v4455 = vunpack.c.l.b16 %v4177
    %v4456 = vunpack.c.h.b16 %v4177
    %v4457 = vunpack.c.l.b16 %v4178
    %v4458 = vunpack.c.h.b16 %v4178
    %v4459 = vunpack.c.l.b16 %v4179
    %v4460 = vunpack.c.h.b16 %v4179
    %v4461 = vunpack.c.l.b16 %v4180
    %v4462 = vunpack.c.h.b16 %v4180
    %v4463 = vunpack.c.l.b16 %v4181
    %v4464 = vunpack.c.h.b16 %v4181
    %v4465 = vunpack.c.l.b16 %v4182
    %v4466 = vunpack.c.h.b16 %v4182
    %v4467 = vunpack.c.l.b16 %v4183
    %v4468 = vunpack.c.h.b16 %v4183
    %v4469 = vunpack.c.l.b16 %v4184
    %v4470 = vunpack.c.h.b16 %v4184
    %v4471 = vunpack.c.l.b16 %v4185
    %v4472 = vunpack.c.h.b16 %v4185
    %v4473 = vunpack.c.l.b16 %v4186
    %v4474 = vunpack.c.h.b16 %v4186
    %v4475 = vunpack.c.l.b16 %v4187
    %v4476 = vunpack.c.h.b16 %v4187
    %v4477 = vunpack.c.l.b16 %v4188
    %v4478 = vunpack.c.h.b16 %v4188
    %v4479 = vunpack.c.l.b16 %v4189
    %v4480 = vunpack.c.h.b16 %v4189
    %v4481 = vunpack.c.l.b16 %v4190
    %v4482 = vunpack.c.h.b16 %v4190
    %v4483 = vunpack.c.l.b16 %v4191
    %v4484 = vunpack.c.h.b16 %v4191
    %v4485 = vunpack.c.l.b16 %v4192
    %v4486 = vunpack.c.h.b16 %v4192
    %v4487 = vunpack.c.l.b16 %v4193
    %v4488 = vunpack.c.h.b16 %v4193
    %v4489 = vunpack.c.l.b16 %v4194
    %v4490 = vunpack.c.h.b16 %v4194
    %v4491 = vunpack.c.l.b16 %v4195
    %v4492 = vunpack.c.h.b16 %v4195
    %v4493 = vunpack.c.l.b16 %v4196
    %v4494 = vunpack.c.h.b16 %v4196
    %v4495 = vunpack.c.l.b16 %v4197
    %v4496 = vunpack.c.h.b16 %v4197
    %v4497 = vunpack.c.l.b16 %v4198
    %v4498 = vunpack.c.h.b16 %v4198
    %v4499 = vunpack.c.l.b16 %v4199
    %v4500 = vunpack.c.h.b16 %v4199
    %v4501 = vunpack.c.l.b16 %v4200
    %v4502 = vunpack.c.h.b16 %v4200
    %v4503 = vunpack.c.l.b16 %v4201
    %v4504 = vunpack.c.h.b16 %v4201
    %v4505 = vunpack.c.l.b16 %v4202
    %v4506 = vunpack.c.h.b16 %v4202
    %v4507 = vunpack.c.l.b16 %v4203
    %v4508 = vunpack.c.h.b16 %v4203
    %v4509 = vunpack.c.l.b16 %v4204
    %v4510 = vunpack.c.h.b16 %v4204
    %v4511 = vunpack.c.l.b16 %v4205
    %v4512 = vunpack.c.h.b16 %v4205
    %v4513 = vunpack.c.l.b16 %v4206
    %v4514 = vunpack.c.h.b16 %v4206
    %v4515 = vunpack.c.l.b16 %v4207
    %v4516 = vunpack.c.h.b16 %v4207
    %v4517 = vunpack.c.l.b16 %v4208
    %v4518 = vunpack.c.h.b16 %v4208
    %v4519 = vunpack.c.l.b16 %v4209
    %v4520 = vunpack.c.h.b16 %v4209
    %v4521 = vunpack.c.l.b16 %v4210
    %v4522 = vunpack.c.h.b16 %v4210
    %v4523 = vunpack.c.l.b16 %v4211
    %v4524 = vunpack.c.h.b16 %v4211
    %v4525 = vunpack.c.l.b16 %v4212
    %v4526 = vunpack.c.h.b16 %v4212
    %v4527 = vunpack.c.l.b16 %v4213
    %v4528 = vunpack.c.h.b16 %v4213
    %v4529 = vunpack.c.l.b16 %v4214
    %v4530 = vunpack.c.h.b16 %v4214
    %v4531 = vunpack.c.l.b16 %v4215
    %v4532 = vunpack.c.h.b16 %v4215
    %v4533 = vunpack.c.l.b16 %v4216
    %v4534 = vunpack.c.h.b16 %v4216
    %v4535 = vunpack.c.l.b16 %v4217
    %v4536 = vunpack.c.h.b16 %v4217
    %v4537 = vunpack.c.l.b16 %v4218
    %v4538 = vunpack.c.h.b16 %v4218
    %v4539 = vunpack.c.l.b16 %v4219
    %v4540 = vunpack.c.h.b16 %v4219
    %v4541 = vunpack.c.l.b16 %v4220
    %v4542 = vunpack.c.h.b16 %v4220
    %v4543 = vunpack.c.l.b16 %v4221
    %v4544 = vunpack.c.h.b16 %v4221
    %v4545 = vunpack.c.l.b16 %v4222
    %v4546 = vunpack.c.h.b16 %v4222
    %v4547 = vunpack.c.l.b16 %v4223
    %v4548 = vunpack.c.h.b16 %v4223
    %v4549 = vunpack.c.l.b16 %v4224
    %v4550 = vunpack.c.h.b16 %v4224
    %v4551 = vunpack.c.l.b16 %v4225
    %v4552 = vunpack.c.h.b16 %v4225
    %v4553 = vunpack.c.l.b16 %v4226
    %v4554 = vunpack.c.h.b16 %v4226
    %v4555 = vunpack.c.l.b16 %v4227
    %v4556 = vunpack.c.h.b16 %v4227
    %v4557 = vunpack.c.l.b16 %v4228
    %v4558 = vunpack.c.h.b16 %v4228
    %v4559 = vunpack.c.l.b16 %v4229
    %v4560 = vunpack.c.h.b16 %v4229
    %v4561 = vunpack.c.l.b16 %v4230
    %v4562 = vunpack.c.h.b16 %v4230
    %v4563 = vunpack.c.l.b16 %v4231
    %v4564 = vunpack.c.h.b16 %v4231
    %v4565 = vunpack.c.l.b16 %v4232
    %v4566 = vunpack.c.h.b16 %v4232
    %v4567 = vunpack.c.l.b16 %v4233
    %v4568 = vunpack.c.h.b16 %v4233
    %v4569 = vunpack.c.l.b16 %v4234
    %v4570 = vunpack.c.h.b16 %v4234
    %v4571 = vunpack.c.l.b16 %v4235
    %v4572 = vunpack.c.h.b16 %v4235
    %v4573 = vunpack.c.l.b16 %v4236
    %v4574 = vunpack.c.h.b16 %v4236
    %v4575 = vunpack.c.l.b16 %v4237
    %v4576 = vunpack.c.h.b16 %v4237
    %v4577 = vunpack.c.l.b16 %v4238
    %v4578 = vunpack.c.h.b16 %v4238
    %v4579 = vunpack.c.l.b16 %v4239
    %v4580 = vunpack.c.h.b16 %v4239
    %v4581 = vunpack.c.l.b16 %v4240
    %v4582 = vunpack.c.h.b16 %v4240
    %v4583 = vunpack.c.l.b16 %v4241
    %v4584 = vunpack.c.h.b16 %v4241
    %v4585 = vunpack.c.l.b16 %v4242
    %v4586 = vunpack.c.h.b16 %v4242
    %v4587 = vunpack.c.l.b16 %v4243
    %v4588 = vunpack.c.h.b16 %v4243
    %v4589 = vunpack.c.l.b16 %v4244
    %v4590 = vunpack.c.h.b16 %v4244
    %v4591 = vunpack.c.l.b16 %v4245
    %v4592 = vunpack.c.h.b16 %v4245
    %v4593 = vunpack.c.l.b16 %v4246
    %v4594 = vunpack.c.h.b16 %v4246
    %v4595 = vunpack.c.l.b16 %v4247
    %v4596 = vunpack.c.h.b16 %v4247
    %v4597 = vunpack.c.l.b16 %v4248
    %v4598 = vunpack.c.h.b16 %v4248
    %v4599 = vunpack.c.l.b16 %v4249
    %v4600 = vunpack.c.h.b16 %v4249
    %v4601 = vunpack.c.l.b16 %v4250
    %v4602 = vunpack.c.h.b16 %v4250
    %v4603 = vunpack.c.l.b16 %v4251
    %v4604 = vunpack.c.h.b16 %v4251
    %v4605 = vunpack.c.l.b16 %v4252
    %v4606 = vunpack.c.h.b16 %v4252
    %v4607 = vunpack.c.l.b16 %v4253
    %v4608 = vunpack.c.h.b16 %v4253
    %v4609 = vunpack.c.l.b16 %v4254
    %v4610 = vunpack.c.h.b16 %v4254
    %v4611 = vunpack.c.l.b16 %v4255
    %v4612 = vunpack.c.h.b16 %v4255
    %v4613 = vunpack.c.l.b16 %v4256
    %v4614 = vunpack.c.h.b16 %v4256
    %v4615 = vunpack.c.l.b16 %v4257
    %v4616 = vunpack.c.h.b16 %v4257
    %v4617 = vunpack.c.l.b16 %v4258
    %v4618 = vunpack.c.h.b16 %v4258
    %v4619 = vunpack.c.l.b16 %v4259
    %v4620 = vunpack.c.h.b16 %v4259
    %v4621 = vunpack.c.l.b16 %v4260
    %v4622 = vunpack.c.h.b16 %v4260
    %v4623 = vunpack.c.l.b16 %v4261
    %v4624 = vunpack.c.h.b16 %v4261
    %v4625 = vunpack.c.l.b16 %v4262
    %v4626 = vunpack.c.h.b16 %v4262
    %v4627 = vunpack.c.l.b16 %v4263
    %v4628 = vunpack.c.h.b16 %v4263
    %v4629 = vunpack.c.l.b16 %v4264
    %v4630 = vunpack.c.h.b16 %v4264
    %v4631 = vunpack.c.l.b16 %v4265
    %v4632 = vunpack.c.h.b16 %v4265
    %v4633 = vunpack.c.l.b16 %v4266
    %v4634 = vunpack.c.h.b16 %v4266
    %v4635 = vunpack.c.l.b16 %v4267
    %v4636 = vunpack.c.h.b16 %v4267
    %v4637 = vunpack.c.l.b16 %v4268
    %v4638 = vunpack.c.h.b16 %v4268
    %v4639 = vunpack.c.l.b16 %v4269
    %v4640 = vunpack.c.h.b16 %v4269
    %v4641 = vunpack.c.l.b16 %v4270
    %v4642 = vunpack.c.h.b16 %v4270
    %v4643 = vunpack.c.l.b16 %v4271
    %v4644 = vunpack.c.h.b16 %v4271
    %v4645 = vunpack.c.l.b16 %v4272
    %v4646 = vunpack.c.h.b16 %v4272
    %v4647 = vunpack.c.l.b16 %v4273
    %v4648 = vunpack.c.h.b16 %v4273
    %v4649 = vunpack.c.l.b16 %v4274
    %v4650 = vunpack.c.h.b16 %v4274
    %v4651 = vunpack.c.l.b16 %v4275
    %v4652 = vunpack.c.h.b16 %v4275
    %v4653 = vunpack.c.l.b16 %v4276
    %v4654 = vunpack.c.h.b16 %v4276
    %v4655 = vunpack.c.l.b16 %v4277
    %v4656 = vunpack.c.h.b16 %v4277
    %v4657 = vunpack.c.l.b16 %v4278
    %v4658 = vunpack.c.h.b16 %v4278
    %v4659 = vunpack.c.l.b16 %v4279
    %v4660 = vunpack.c.h.b16 %v4279
    %v4661 = vunpack.c.l.b16 %v4280
    %v4662 = vunpack.c.h.b16 %v4280
    %v4663 = vunpack.c.l.b16 %v4281
    %v4664 = vunpack.c.h.b16 %v4281
    %v4665 = vunpack.c.l.b16 %v4282
    %v4666 = vunpack.c.h.b16 %v4282
    %v4667 = vunpack.c.l.b16 %v4283
    %v4668 = vunpack.c.h.b16 %v4283
    %v4669 = vunpack.c.l.b16 %v4284
    %v4670 = vunpack.c.h.b16 %v4284
    %v4671 = vunpack.c.l.b16 %v4285
    %v4672 = vunpack.c.h.b16 %v4285
    %v4673 = vunpack.c.l.b16 %v4286
    %v4674 = vunpack.c.h.b16 %v4286
    %v4675 = vunpack.c.l.b16 %v4287
    %v4676 = vunpack.c.h.b16 %v4287
    %v4677 = vunpack.c.l.b16 %v4288
    %v4678 = vunpack.c.h.b16 %v4288
    %v4679 = vunpack.c.l.b16 %v4289
    %v4680 = vunpack.c.h.b16 %v4289
    %v4681 = vunpack.c.l.b16 %v4290
    %v4682 = vunpack.c.h.b16 %v4290
    %v4683 = vunpack.c.l.b16 %v4291
    %v4684 = vunpack.c.h.b16 %v4291
    %v4685 = vunpack.c.l.b16 %v4292
    %v4686 = vunpack.c.h.b16 %v4292
    %v4687 = vunpack.c.l.b16 %v4293
    %v4688 = vunpack.c.h.b16 %v4293
    %v4689 = vunpack.c.l.b16 %v4294
    %v4690 = vunpack.c.h.b16 %v4294
    %v4691 = vunpack.c.l.b16 %v4295
    %v4692 = vunpack.c.h.b16 %v4295
    %v4693 = vunpack.c.l.b16 %v4296
    %v4694 = vunpack.c.h.b16 %v4296
    %v4695 = vunpack.c.l.b16 %v4297
    %v4696 = vunpack.c.h.b16 %v4297
    %v4697 = vunpack.c.l.b16 %v4298
    %v4698 = vunpack.c.h.b16 %v4298
    %v4699 = vunpack.c.l.b16 %v4299
    %v4700 = vunpack.c.h.b16 %v4299
    %v4701 = vunpack.c.l.b16 %v4300
    %v4702 = vunpack.c.h.b16 %v4300
    %v4703 = vunpack.c.l.b16 %v4301
    %v4704 = vunpack.c.h.b16 %v4301
    %v4705 = vunpack.c.l.b16 %v4302
    %v4706 = vunpack.c.h.b16 %v4302
    %v4707 = vunpack.c.l.b16 %v4303
    %v4708 = vunpack.c.h.b16 %v4303
    %v4709 = vunpack.c.l.b16 %v4304
    %v4710 = vunpack.c.h.b16 %v4304
    %v4711 = vpack.c.b16 %v4459, %v4455
    %v4712 = vpack.c.b16 %v4460, %v4456
    %v4713 = vpack.c.b16 %v4461, %v4457
    %v4714 = vpack.c.b16 %v4462, %v4458
    %v4715 = vpack.c.b16 %v4467, %v4463
    %v4716 = vpack.c.b16 %v4468, %v4464
    %v4717 = vpack.c.b16 %v4469, %v4465
    %v4718 = vpack.c.b16 %v4470, %v4466
    %v4719 = vpack.c.b16 %v4475, %v4471
    %v4720 = vpack.c.b16 %v4476, %v4472
    %v4721 = vpack.c.b16 %v4477, %v4473
    %v4722 = vpack.c.b16 %v4478, %v4474
    %v4723 = vpack.c.b16 %v4483, %v4479
    %v4724 = vpack.c.b16 %v4484, %v4480
    %v4725 = vpack.c.b16 %v4485, %v4481
    %v4726 = vpack.c.b16 %v4486, %v4482
    %v4727 = vpack.c.b16 %v4491, %v4487
    %v4728 = vpack.c.b16 %v4492, %v4488
    %v4729 = vpack.c.b16 %v4493, %v4489
    %v4730 = vpack.c.b16 %v4494, %v4490
    %v4731 = vpack.c.b16 %v4499, %v4495
    %v4732 = vpack.c.b16 %v4500, %v4496
    %v4733 = vpack.c.b16 %v4501, %v4497
    %v4734 = vpack.c.b16 %v4502, %v4498
    %v4735 = vpack.c.b16 %v4507, %v4503
    %v4736 = vpack.c.b16 %v4508, %v4504
    %v4737 = vpack.c.b16 %v4509, %v4505
    %v4738 = vpack.c.b16 %v4510, %v4506
    %v4739 = vpack.c.b16 %v4515, %v4511
    %v4740 = vpack.c.b16 %v4516, %v4512
    %v4741 = vpack.c.b16 %v4517, %v4513
    %v4742 = vpack.c.b16 %v4518, %v4514
    %v4743 = vpack.c.b16 %v4523, %v4519
    %v4744 = vpack.c.b16 %v4524, %v4520
    %v4745 = vpack.c.b16 %v4525, %v4521
    %v4746 = vpack.c.b16 %v4526, %v4522
    %v4747 = vpack.c.b16 %v4531, %v4527
    %v4748 = vpack.c.b16 %v4532, %v4528
    %v4749 = vpack.c.b16 %v4533, %v4529
    %v4750 = vpack.c.b16 %v4534, %v4530
    %v4751 = vpack.c.b16 %v4539, %v4535
    %v4752 = vpack.c.b16 %v4540, %v4536
    %v4753 = vpack.c.b16 %v4541, %v4537
    %v4754 = vpack.c.b16 %v4542, %v4538
    %v4755 = vpack.c.b16 %v4547, %v4543
    %v4756 = vpack.c.b16 %v4548, %v4544
    %v4757 = vpack.c.b16 %v4549, %v4545
    %v4758 = vpack.c.b16 %v4550, %v4546
    %v4759 = vpack.c.b16 %v4555, %v4551
    %v4760 = vpack.c.b16 %v4556, %v4552
    %v4761 = vpack.c.b16 %v4557, %v4553
    %v4762 = vpack.c.b16 %v4558, %v4554
    %v4763 = vpack.c.b16 %v4563, %v4559
    %v4764 = vpack.c.b16 %v4564, %v4560
    %v4765 = vpack.c.b16 %v4565, %v4561
    %v4766 = vpack.c.b16 %v4566, %v4562
    %v4767 = vpack.c.b16 %v4571, %v4567
    %v4768 = vpack.c.b16 %v4572, %v4568
    %v4769 = vpack.c.b16 %v4573, %v4569
    %v4770 = vpack.c.b16 %v4574, %v4570
    %v4771 = vpack.c.b16 %v4579, %v4575
    %v4772 = vpack.c.b16 %v4580, %v4576
    %v4773 = vpack.c.b16 %v4581, %v4577
    %v4774 = vpack.c.b16 %v4582, %v4578
    %v4775 = vpack.c.b16 %v4587, %v4583
    %v4776 = vpack.c.b16 %v4588, %v4584
    %v4777 = vpack.c.b16 %v4589, %v4585
    %v4778 = vpack.c.b16 %v4590, %v4586
    %v4779 = vpack.c.b16 %v4595, %v4591
    %v4780 = vpack.c.b16 %v4596, %v4592
    %v4781 = vpack.c.b16 %v4597, %v4593
    %v4782 = vpack.c.b16 %v4598, %v4594
    %v4783 = vpack.c.b16 %v4603, %v4599
    %v4784 = vpack.c.b16 %v4604, %v4600
    %v4785 = vpack.c.b16 %v4605, %v4601
    %v4786 = vpack.c.b16 %v4606, %v4602
    %v4787 = vpack.c.b16 %v4611, %v4607
    %v4788 = vpack.c.b16 %v4612, %v4608
    %v4789 = vpack.c.b16 %v4613, %v4609
    %v4790 = vpack.c.b16 %v4614, %v4610
    %v4791 = vpack.c.b16 %v4619, %v4615
    %v4792 = vpack.c.b16 %v4620, %v4616
    %v4793 = vpack.c.b16 %v4621, %v4617
    %v4794 = vpack.c.b16 %v4622, %v4618
    %v4795 = vpack.c.b16 %v4627, %v4623
    %v4796 = vpack.c.b16 %v4628, %v4624
    %v4797 = vpack.c.b16 %v4629, %v4625
    %v4798 = vpack.c.b16 %v4630, %v4626
    %v4799 = vpack.c.b16 %v4635, %v4631
    %v4800 = vpack.c.b16 %v4636, %v4632
    %v4801 = vpack.c.b16 %v4637, %v4633
    %v4802 = vpack.c.b16 %v4638, %v4634
    %v4803 = vpack.c.b16 %v4643, %v4639
    %v4804 = vpack.c.b16 %v4644, %v4640
    %v4805 = vpack.c.b16 %v4645, %v4641
    %v4806 = vpack.c.b16 %v4646, %v4642
    %v4807 = vpack.c.b16 %v4651, %v4647
    %v4808 = vpack.c.b16 %v4652, %v4648
    %v4809 = vpack.c.b16 %v4653, %v4649
    %v4810 = vpack.c.b16 %v4654, %v4650
    %v4811 = vpack.c.b16 %v4659, %v4655
    %v4812 = vpack.c.b16 %v4660, %v4656
    %v4813 = vpack.c.b16 %v4661, %v4657
    %v4814 = vpack.c.b16 %v4662, %v4658
    %v4815 = vpack.c.b16 %v4667, %v4663
    %v4816 = vpack.c.b16 %v4668, %v4664
    %v4817 = vpack.c.b16 %v4669, %v4665
    %v4818 = vpack.c.b16 %v4670, %v4666
    %v4819 = vpack.c.b16 %v4675, %v4671
    %v4820 = vpack.c.b16 %v4676, %v4672
    %v4821 = vpack.c.b16 %v4677, %v4673
    %v4822 = vpack.c.b16 %v4678, %v4674
    %v4823 = vpack.c.b16 %v4683, %v4679
    %v4824 = vpack.c.b16 %v4684, %v4680
    %v4825 = vpack.c.b16 %v4685, %v4681
    %v4826 = vpack.c.b16 %v4686, %v4682
    %v4827 = vpack.c.b16 %v4691, %v4687
    %v4828 = vpack.c.b16 %v4692, %v4688
    %v4829 = vpack.c.b16 %v4693, %v4689
    %v4830 = vpack.c.b16 %v4694, %v4690
    %v4831 = vpack.c.b16 %v4699, %v4695
    %v4832 = vpack.c.b16 %v4700, %v4696
    %v4833 = vpack.c.b16 %v4701, %v4697
    %v4834 = vpack.c.b16 %v4702, %v4698
    %v4835 = vpack.c.b16 %v4707, %v4703
    %v4836 = vpack.c.b16 %v4708, %v4704
    %v4837 = vpack.c.b16 %v4709, %v4705
    %v4838 = vpack.c.b16 %v4710, %v4706
    %4967 = vmatprep.subr.bf16.mxu0 %v4712
    %4968 = vmatpush1.bf16.msra.mxu0 %v4711
    %4969 = vmatprep.subr.bf16.mxu0 %v4716
    %4970 = vmatpush1.bf16.msra.mxu0 %v4715
    %4971 = vmatprep.subr.bf16.mxu0 %v4720
    %4972 = vmatpush1.bf16.msra.mxu0 %v4719
    %4973 = vmatprep.subr.bf16.mxu0 %v4724
    %4974 = vmatpush1.bf16.msra.mxu0 %v4723
    %4975 = vmatprep.subr.bf16.mxu0 %v4728
    %4976 = vmatpush1.bf16.msra.mxu0 %v4727
    %4977 = vmatprep.subr.bf16.mxu0 %v4732
    %4978 = vmatpush1.bf16.msra.mxu0 %v4731
    %4979 = vmatprep.subr.bf16.mxu0 %v4736
    %4980 = vmatpush1.bf16.msra.mxu0 %v4735
    %4981 = vmatprep.subr.bf16.mxu0 %v4740
    %4982 = vmatpush1.bf16.msra.mxu0 %v4739
    %4983 = vmatprep.subr.bf16.mxu0 %v4744
    %4984 = vmatpush1.bf16.msra.mxu0 %v4743
    %4985 = vmatprep.subr.bf16.mxu0 %v4748
    %4986 = vmatpush1.bf16.msra.mxu0 %v4747
    %4987 = vmatprep.subr.bf16.mxu0 %v4752
    %4988 = vmatpush1.bf16.msra.mxu0 %v4751
    %4989 = vmatprep.subr.bf16.mxu0 %v4756
    %4990 = vmatpush1.bf16.msra.mxu0 %v4755
    %4991 = vmatprep.subr.bf16.mxu0 %v4760
    %4992 = vmatpush1.bf16.msra.mxu0 %v4759
    %4993 = vmatprep.subr.bf16.mxu0 %v4764
    %4994 = vmatpush1.bf16.msra.mxu0 %v4763
    %4995 = vmatprep.subr.bf16.mxu0 %v4768
    %4996 = vmatpush1.bf16.msra.mxu0 %v4767
    %4997 = vmatprep.subr.bf16.mxu0 %v4772
    %4998 = vmatpush1.bf16.msra.mxu0 %v4771
    %4999 = vmatprep.mubr.bf16.mxu0 %v4170
    %5000 = vmatmul.mubr.bf16.gmra.mrb[0].mxu0 %v4169
    %v5001 = vpop.f32.mrb[0].mxu0
    %v5002 = vadd.f32 %v4310, %v5001
    %v5003 = vpop.f32.mrb[0].mxu0
    %v5004 = vadd.f32 %v4314, %v5003
    %v5005 = vpop.f32.mrb[0].mxu0
    %v5006 = vadd.f32 %v4310, %v5005
    %v5007 = vpop.f32.mrb[0].mxu0
    %v5008 = vadd.f32 %v4314, %v5007
    %5009 = vmatprep.mubr.bf16.mxu0 %v4174
    %5010 = vmatmul.mubr.bf16.gmra.mrb[0].mxu0 %v4173
    %v5011 = vpop.f32.mrb[0].mxu0
    %v5012 = vadd.f32 %v4310, %v5011
    %v5013 = vpop.f32.mrb[0].mxu0
    %v5014 = vadd.f32 %v4314, %v5013
    %v5015 = vpop.f32.mrb[0].mxu0
    %v5016 = vadd.f32 %v4310, %v5015
    %v5017 = vpop.f32.mrb[0].mxu0
    %v5018 = vadd.f32 %v4314, %v5017
    %5019 = vdwg.mxu0
    %5020 = vmatprep.subr.bf16.mxu0 %v4776
    %5021 = vmatpush1.bf16.msra.mxu0 %v4775
    %5022 = vmatprep.subr.bf16.mxu0 %v4780
    %5023 = vmatpush1.bf16.msra.mxu0 %v4779
    %5024 = vmatprep.subr.bf16.mxu0 %v4784
    %5025 = vmatpush1.bf16.msra.mxu0 %v4783
    %5026 = vmatprep.subr.bf16.mxu0 %v4788
    %5027 = vmatpush1.bf16.msra.mxu0 %v4787
    %5028 = vmatprep.subr.bf16.mxu0 %v4792
    %5029 = vmatpush1.bf16.msra.mxu0 %v4791
    %5030 = vmatprep.subr.bf16.mxu0 %v4796
    %5031 = vmatpush1.bf16.msra.mxu0 %v4795
    %5032 = vmatprep.subr.bf16.mxu0 %v4800
    %5033 = vmatpush1.bf16.msra.mxu0 %v4799
    %5034 = vmatprep.subr.bf16.mxu0 %v4804
    %5035 = vmatpush1.bf16.msra.mxu0 %v4803
    %5036 = vmatprep.subr.bf16.mxu0 %v4808
    %5037 = vmatpush1.bf16.msra.mxu0 %v4807
    %5038 = vmatprep.subr.bf16.mxu0 %v4812
    %5039 = vmatpush1.bf16.msra.mxu0 %v4811
    %5040 = vmatprep.subr.bf16.mxu0 %v4816
    %5041 = vmatpush1.bf16.msra.mxu0 %v4815
    %5042 = vmatprep.subr.bf16.mxu0 %v4820
    %5043 = vmatpush1.bf16.msra.mxu0 %v4819
    %5044 = vmatprep.subr.bf16.mxu0 %v4824
    %5045 = vmatpush1.bf16.msra.mxu0 %v4823
    %5046 = vmatprep.subr.bf16.mxu0 %v4828
    %5047 = vmatpush1.bf16.msra.mxu0 %v4827
    %5048 = vmatprep.subr.bf16.mxu0 %v4832
    %5049 = vmatpush1.bf16.msra.mxu0 %v4831
    %5050 = vmatprep.subr.bf16.mxu0 %v4836
    %5051 = vmatpush1.bf16.msra.mxu0 %v4835
    %5052 = vmatprep.mubr.bf16.mxu0 %v4172
    %5053 = vmatmul.mubr.bf16.gmra.mrb[0].mxu0 %v4171
    %v5054 = vpop.f32.mrb[0].mxu0
    %v5055 = vadd.f32 %v5002, %v5054
    %v5056 = vpop.f32.mrb[0].mxu0
    %v5057 = vadd.f32 %v5004, %v5056
    %v5058 = vpop.f32.mrb[0].mxu0
    %v5059 = vadd.f32 %v5006, %v5058
    %v5060 = vpop.f32.mrb[0].mxu0
    %v5061 = vadd.f32 %v5008, %v5060
    %5062 = vmatprep.mubr.bf16.mxu0 %v4176
    %5063 = vmatmul.mubr.bf16.gmra.mrb[0].mxu0 %v4175
    %v5064 = vpop.f32.mrb[0].mxu0
    %v5065 = vadd.f32 %v5012, %v5064
    %v5066 = vpop.f32.mrb[0].mxu0
    %v5067 = vadd.f32 %v5014, %v5066
    %v5068 = vpop.f32.mrb[0].mxu0
    %v5069 = vadd.f32 %v5016, %v5068
    %v5070 = vpop.f32.mrb[0].mxu0
    %v5071 = vadd.f32 %v5018, %v5070
    %5072 = vdwg.mxu0
    %5073 = vmatprep.subr.bf16.mxu0 %v4714
    %5074 = vmatpush1.bf16.msra.mxu0 %v4713
    %5075 = vmatprep.subr.bf16.mxu0 %v4718
    %5076 = vmatpush1.bf16.msra.mxu0 %v4717
    %5077 = vmatprep.subr.bf16.mxu0 %v4722
    %5078 = vmatpush1.bf16.msra.mxu0 %v4721
    %5079 = vmatprep.subr.bf16.mxu0 %v4726
    %5080 = vmatpush1.bf16.msra.mxu0 %v4725
    %5081 = vmatprep.subr.bf16.mxu0 %v4730
    %5082 = vmatpush1.bf16.msra.mxu0 %v4729
    %5083 = vmatprep.subr.bf16.mxu0 %v4734
    %5084 = vmatpush1.bf16.msra.mxu0 %v4733
    %5085 = vmatprep.subr.bf16.mxu0 %v4738
    %5086 = vmatpush1.bf16.msra.mxu0 %v4737
    %5087 = vmatprep.subr.bf16.mxu0 %v4742
    %5088 = vmatpush1.bf16.msra.mxu0 %v4741
    %5089 = vmatprep.subr.bf16.mxu0 %v4746
    %5090 = vmatpush1.bf16.msra.mxu0 %v4745
    %5091 = vmatprep.subr.bf16.mxu0 %v4750
    %5092 = vmatpush1.bf16.msra.mxu0 %v4749
    %5093 = vmatprep.subr.bf16.mxu0 %v4754
    %5094 = vmatpush1.bf16.msra.mxu0 %v4753
    %5095 = vmatprep.subr.bf16.mxu0 %v4758
    %5096 = vmatpush1.bf16.msra.mxu0 %v4757
    %5097 = vmatprep.subr.bf16.mxu0 %v4762
    %5098 = vmatpush1.bf16.msra.mxu0 %v4761
    %5099 = vmatprep.subr.bf16.mxu0 %v4766
    %5100 = vmatpush1.bf16.msra.mxu0 %v4765
    %5101 = vmatprep.subr.bf16.mxu0 %v4770
    %5102 = vmatpush1.bf16.msra.mxu0 %v4769
    %5103 = vmatprep.subr.bf16.mxu0 %v4774
    %5104 = vmatpush1.bf16.msra.mxu0 %v4773
    %5105 = vmatprep.mubr.bf16.mxu0 %v4170
    %5106 = vmatmul.mubr.bf16.gmra.mrb[0].mxu0 %v4169
    %v5107 = vpop.f32.mrb[0].mxu0
    %v5108 = vadd.f32 %v4318, %v5107
    %v5109 = vpop.f32.mrb[0].mxu0
    %v5110 = vadd.f32 %v4322, %v5109
    %v5111 = vpop.f32.mrb[0].mxu0
    %v5112 = vadd.f32 %v4318, %v5111
    %v5113 = vpop.f32.mrb[0].mxu0
    %v5114 = vadd.f32 %v4322, %v5113
    %5115 = vmatprep.mubr.bf16.mxu0 %v4174
    %5116 = vmatmul.mubr.bf16.gmra.mrb[0].mxu0 %v4173
    %v5117 = vpop.f32.mrb[0].mxu0
    %v5118 = vadd.f32 %v4318, %v5117
    %v5119 = vpop.f32.mrb[0].mxu0
    %v5120 = vadd.f32 %v4322, %v5119
    %v5121 = vpop.f32.mrb[0].mxu0
    %v5122 = vadd.f32 %v4318, %v5121
    %v5123 = vpop.f32.mrb[0].mxu0
    %v5124 = vadd.f32 %v4322, %v5123
    %5125 = vdwg.mxu0
    %5126 = vmatprep.subr.bf16.mxu0 %v4778
    %5127 = vmatpush1.bf16.msra.mxu0 %v4777
    %5128 = vmatprep.subr.bf16.mxu0 %v4782
    %5129 = vmatpush1.bf16.msra.mxu0 %v4781
    %5130 = vmatprep.subr.bf16.mxu0 %v4786
    %5131 = vmatpush1.bf16.msra.mxu0 %v4785
    %5132 = vmatprep.subr.bf16.mxu0 %v4790
    %5133 = vmatpush1.bf16.msra.mxu0 %v4789
    %5134 = vmatprep.subr.bf16.mxu0 %v4794
    %5135 = vmatpush1.bf16.msra.mxu0 %v4793
    %5136 = vmatprep.subr.bf16.mxu0 %v4798
    %5137 = vmatpush1.bf16.msra.mxu0 %v4797
    %5138 = vmatprep.subr.bf16.mxu0 %v4802
    %5139 = vmatpush1.bf16.msra.mxu0 %v4801
    %5140 = vmatprep.subr.bf16.mxu0 %v4806
    %5141 = vmatpush1.bf16.msra.mxu0 %v4805
    %5142 = vmatprep.subr.bf16.mxu0 %v4810
    %5143 = vmatpush1.bf16.msra.mxu0 %v4809
    %5144 = vmatprep.subr.bf16.mxu0 %v4814
    %5145 = vmatpush1.bf16.msra.mxu0 %v4813
    %5146 = vmatprep.subr.bf16.mxu0 %v4818
    %5147 = vmatpush1.bf16.msra.mxu0 %v4817
    %5148 = vmatprep.subr.bf16.mxu0 %v4822
    %5149 = vmatpush1.bf16.msra.mxu0 %v4821
    %5150 = vmatprep.subr.bf16.mxu0 %v4826
    %5151 = vmatpush1.bf16.msra.mxu0 %v4825
    %5152 = vmatprep.subr.bf16.mxu0 %v4830
    %5153 = vmatpush1.bf16.msra.mxu0 %v4829
    %5154 = vmatprep.subr.bf16.mxu0 %v4834
    %5155 = vmatpush1.bf16.msra.mxu0 %v4833
    %5156 = vmatprep.subr.bf16.mxu0 %v4838
    %5157 = vmatpush1.bf16.msra.mxu0 %v4837
    %5158 = vmatprep.mubr.bf16.mxu0 %v4172
    %5159 = vmatmul.mubr.bf16.gmra.mrb[0].mxu0 %v4171
    %v5160 = vpop.f32.mrb[0].mxu0
    %v5161 = vadd.f32 %v5108, %v5160
    %v5162 = vpop.f32.mrb[0].mxu0
    %v5163 = vadd.f32 %v5110, %v5162
    %v5164 = vpop.f32.mrb[0].mxu0
    %v5165 = vadd.f32 %v5112, %v5164
    %v5166 = vpop.f32.mrb[0].mxu0
    %v5167 = vadd.f32 %v5114, %v5166
    %5168 = vmatprep.mubr.bf16.mxu0 %v4176
    %5169 = vmatmul.mubr.bf16.gmra.mrb[0].mxu0 %v4175
    %v5170 = vpop.f32.mrb[0].mxu0
    %v5171 = vadd.f32 %v5118, %v5170
    %v5172 = vpop.f32.mrb[0].mxu0
    %v5173 = vadd.f32 %v5120, %v5172
    %v5174 = vpop.f32.mrb[0].mxu0
    %v5175 = vadd.f32 %v5122, %v5174
    %v5176 = vpop.f32.mrb[0].mxu0
    %v5177 = vadd.f32 %v5124, %v5176
    %5178 = vdwg.mxu0
    %v5179 = vadd.f32 %v182, %v5055
    %v5180 = vadd.f32 %v183, %v5057
    %v5181 = vadd.f32 %v184, %v5161
    %v5182 = vadd.f32 %v185, %v5163
    %v5183 = vadd.f32 %v186, %v5059
    %v5184 = vadd.f32 %v187, %v5061
    %v5185 = vadd.f32 %v188, %v5165
    %v5186 = vadd.f32 %v189, %v5167
    %v5187 = vadd.f32 %v190, %v5065
    %v5188 = vadd.f32 %v191, %v5067
    %v5189 = vadd.f32 %v192, %v5171
    %v5190 = vadd.f32 %v193, %v5173
    %v5191 = vadd.f32 %v194, %v5069
    %v5192 = vadd.f32 %v195, %v5071
    %v5193 = vadd.f32 %v196, %v5175
    %v5194 = vadd.f32 %v197, %v5177
    %v5195 = vadd.f32 %v5179, %v5180
    %v5196 = vadd.f32 %v5195, %v5181
    %v5197 = vadd.f32 %v5196, %v5182
    %5198 = vadd.xlane.f32.xlu0 %v5197
    %v5199 = vpop.xlane.xlu0 %5198
    %v5200 = vadd.f32 %v5183, %v5184
    %v5201 = vadd.f32 %v5200, %v5185
    %v5202 = vadd.f32 %v5201, %v5186
    %5203 = vadd.xlane.f32.xlu0 %v5202
    %v5204 = vpop.xlane.xlu0 %5203
    %v5205 = vadd.f32 %v5187, %v5188
    %v5206 = vadd.f32 %v5205, %v5189
    %v5207 = vadd.f32 %v5206, %v5190
    %5208 = vadd.xlane.f32.xlu0 %v5207
    %v5209 = vpop.xlane.xlu0 %5208
    %v5210 = vadd.f32 %v5191, %v5192
    %v5211 = vadd.f32 %v5210, %v5193
    %v5212 = vadd.f32 %v5211, %v5194
    %5213 = vadd.xlane.f32.xlu0 %v5212
    %v5214 = vpop.xlane.xlu0 %5213
    %v5215 = vrcp.pop 512.0
    %v5216 = vmul.f32 %v5199, %v5215
    %v5217 = vmul.f32 %v5204, %v5215
    %v5218 = vmul.f32 %v5209, %v5215
    %v5219 = vmul.f32 %v5214, %v5215
    %v5220 = vsub.f32 %v5179, %v5216
    %v5221 = vsub.f32 %v5180, %v5216
    %v5222 = vsub.f32 %v5181, %v5216
    %v5223 = vsub.f32 %v5182, %v5216
    %v5224 = vsub.f32 %v5183, %v5217
    %v5225 = vsub.f32 %v5184, %v5217
    %v5226 = vsub.f32 %v5185, %v5217
    %v5227 = vsub.f32 %v5186, %v5217
    %v5228 = vsub.f32 %v5187, %v5218
    %v5229 = vsub.f32 %v5188, %v5218
    %v5230 = vsub.f32 %v5189, %v5218
    %v5231 = vsub.f32 %v5190, %v5218
    %v5232 = vsub.f32 %v5191, %v5219
    %v5233 = vsub.f32 %v5192, %v5219
    %v5234 = vsub.f32 %v5193, %v5219
    %v5235 = vsub.f32 %v5194, %v5219
    %v5236 = vmul.f32 %v5220, %v5220
    %v5237 = vmul.f32 %v5221, %v5221
    %v5238 = vmul.f32 %v5222, %v5222
    %v5239 = vmul.f32 %v5223, %v5223
    %v5240 = vmul.f32 %v5224, %v5224
    %v5241 = vmul.f32 %v5225, %v5225
    %v5242 = vmul.f32 %v5226, %v5226
    %v5243 = vmul.f32 %v5227, %v5227
    %v5244 = vmul.f32 %v5228, %v5228
    %v5245 = vmul.f32 %v5229, %v5229
    %v5246 = vmul.f32 %v5230, %v5230
    %v5247 = vmul.f32 %v5231, %v5231
    %v5248 = vmul.f32 %v5232, %v5232
    %v5249 = vmul.f32 %v5233, %v5233
    %v5250 = vmul.f32 %v5234, %v5234
    %v5251 = vmul.f32 %v5235, %v5235
    %v5252 = vadd.f32 %v5236, %v5237
    %v5253 = vadd.f32 %v5252, %v5238
    %v5254 = vadd.f32 %v5253, %v5239
    %5255 = vadd.xlane.f32.xlu0 %v5254
    %v5256 = vpop.xlane.xlu0 %5255
    %v5257 = vadd.f32 %v5240, %v5241
    %v5258 = vadd.f32 %v5257, %v5242
    %v5259 = vadd.f32 %v5258, %v5243
    %5260 = vadd.xlane.f32.xlu0 %v5259
    %v5261 = vpop.xlane.xlu0 %5260
    %v5262 = vadd.f32 %v5244, %v5245
    %v5263 = vadd.f32 %v5262, %v5246
    %v5264 = vadd.f32 %v5263, %v5247
    %5265 = vadd.xlane.f32.xlu0 %v5264
    %v5266 = vpop.xlane.xlu0 %5265
    %v5267 = vadd.f32 %v5248, %v5249
    %v5268 = vadd.f32 %v5267, %v5250
    %v5269 = vadd.f32 %v5268, %v5251
    %5270 = vadd.xlane.f32.xlu0 %v5269
    %v5271 = vpop.xlane.xlu0 %5270
    %v5272 = vmul.f32 %v5256, %v5215
    %v5273 = vmul.f32 %v5261, %v5215
    %v5274 = vmul.f32 %v5266, %v5215
    %v5275 = vmul.f32 %v5271, %v5215
    %v5276 = vadd.f32 %v5272, 1e-05
    %v5277 = vadd.f32 %v5273, 1e-05
    %v5278 = vadd.f32 %v5274, 1e-05
    %v5279 = vadd.f32 %v5275, 1e-05
    %v5280 = vrsqrt.pop %v5276
    %v5281 = vrsqrt.pop %v5277
    %v5282 = vrsqrt.pop %v5278
    %v5283 = vrsqrt.pop %v5279
    %v5284 = vmul.f32 %v5220, %v5280
    %v5285 = vmul.f32 %v5221, %v5280
    %v5286 = vmul.f32 %v5222, %v5280
    %v5287 = vmul.f32 %v5223, %v5280
    %v5288 = vmul.f32 %v5224, %v5281
    %v5289 = vmul.f32 %v5225, %v5281
    %v5290 = vmul.f32 %v5226, %v5281
    %v5291 = vmul.f32 %v5227, %v5281
    %v5292 = vmul.f32 %v5228, %v5282
    %v5293 = vmul.f32 %v5229, %v5282
    %v5294 = vmul.f32 %v5230, %v5282
    %v5295 = vmul.f32 %v5231, %v5282
    %v5296 = vmul.f32 %v5232, %v5283
    %v5297 = vmul.f32 %v5233, %v5283
    %v5298 = vmul.f32 %v5234, %v5283
    %v5299 = vmul.f32 %v5235, %v5283
    %v5300 = vld [vmem:[#allocation14] sm:$0xf]
    %v5302 = vlaneseq
    %v5303 = vshrl.u32 %v5302, 7
    %v5304 = vsub.s32 0, %v5303
    %v5305 = vrot.slane %v5300, %v5304
    %v5306 = vlaneseq
    %v5307 = vshrl.u32 %v5306, 7
    %v5308 = vsub.s32 1, %v5307
    %v5309 = vrot.slane %v5300, %v5308
    %v5310 = vlaneseq
    %v5311 = vshrl.u32 %v5310, 7
    %v5312 = vsub.s32 2, %v5311
    %v5313 = vrot.slane %v5300, %v5312
    %v5314 = vlaneseq
    %v5315 = vshrl.u32 %v5314, 7
    %v5316 = vsub.s32 3, %v5315
    %v5317 = vrot.slane %v5300, %v5316
    %v5322 = vmul.f32 %v5284, %v5305
    %v5323 = vmul.f32 %v5285, %v5309
    %v5324 = vmul.f32 %v5286, %v5313
    %v5325 = vmul.f32 %v5287, %v5317
    %v5326 = vmul.f32 %v5288, %v5305
    %v5327 = vmul.f32 %v5289, %v5309
    %v5328 = vmul.f32 %v5290, %v5313
    %v5329 = vmul.f32 %v5291, %v5317
    %v5330 = vmul.f32 %v5292, %v5305
    %v5331 = vmul.f32 %v5293, %v5309
    %v5332 = vmul.f32 %v5294, %v5313
    %v5333 = vmul.f32 %v5295, %v5317
    %v5334 = vmul.f32 %v5296, %v5305
    %v5335 = vmul.f32 %v5297, %v5309
    %v5336 = vmul.f32 %v5298, %v5313
    %v5337 = vmul.f32 %v5299, %v5317
    %v5338 = vld [vmem:[#allocation16] sm:$0xf]
    %v5340 = vlaneseq
    %v5341 = vshrl.u32 %v5340, 7
    %v5342 = vsub.s32 0, %v5341
    %v5343 = vrot.slane %v5338, %v5342
    %v5344 = vlaneseq
    %v5345 = vshrl.u32 %v5344, 7
    %v5346 = vsub.s32 1, %v5345
    %v5347 = vrot.slane %v5338, %v5346
    %v5348 = vlaneseq
    %v5349 = vshrl.u32 %v5348, 7
    %v5350 = vsub.s32 2, %v5349
    %v5351 = vrot.slane %v5338, %v5350
    %v5352 = vlaneseq
    %v5353 = vshrl.u32 %v5352, 7
    %v5354 = vsub.s32 3, %v5353
    %v5355 = vrot.slane %v5338, %v5354
    %v5360 = vadd.f32 %v5322, %v5343
    %v5361 = vadd.f32 %v5323, %v5347
    %v5362 = vadd.f32 %v5324, %v5351
    %v5363 = vadd.f32 %v5325, %v5355
    %v5364 = vadd.f32 %v5326, %v5343
    %v5365 = vadd.f32 %v5327, %v5347
    %v5366 = vadd.f32 %v5328, %v5351
    %v5367 = vadd.f32 %v5329, %v5355
    %v5368 = vadd.f32 %v5330, %v5343
    %v5369 = vadd.f32 %v5331, %v5347
    %v5370 = vadd.f32 %v5332, %v5351
    %v5371 = vadd.f32 %v5333, %v5355
    %v5372 = vadd.f32 %v5334, %v5343
    %v5373 = vadd.f32 %v5335, %v5347
    %v5374 = vadd.f32 %v5336, %v5351
    %v5375 = vadd.f32 %v5337, %v5355
    %5376 = vst [vmem:[#allocation17] sm:$0xff] %v5360
    %5377 = vst [vmem:[#allocation17 + $0x8] sm:$0xff] %v5361
    %5378 = vst [vmem:[#allocation17 + $0x10] sm:$0xff] %v5362
    %5379 = vst [vmem:[#allocation17 + $0x18] sm:$0xff] %v5363
    %5380 = vst [vmem:[#allocation17 + $0x20] sm:$0xff] %v5364
    %5381 = vst [vmem:[#allocation17 + $0x28] sm:$0xff] %v5365
    %5382 = vst [vmem:[#allocation17 + $0x30] sm:$0xff] %v5366
    %5383 = vst [vmem:[#allocation17 + $0x38] sm:$0xff] %v5367
    %5384 = vst [vmem:[#allocation17 + $0x40] sm:$0xff] %v5368
    %5385 = vst [vmem:[#allocation17 + $0x48] sm:$0xff] %v5369
    %5386 = vst [vmem:[#allocation17 + $0x50] sm:$0xff] %v5370
    %5387 = vst [vmem:[#allocation17 + $0x58] sm:$0xff] %v5371
    %5388 = vst [vmem:[#allocation17 + $0x60] sm:$0xff] %v5372
    %5389 = vst [vmem:[#allocation17 + $0x68] sm:$0xff] %v5373
    %5390 = vst [vmem:[#allocation17 + $0x70] sm:$0xff] %v5374
    %5391 = vst [vmem:[#allocation17 + $0x78] sm:$0xff] %v5375
    // Predicated region
    $region74: #{multi_head_attention.1} parent=1 // pred_check
      _
    $region75: #{multi_head_attention.1} parent=1 // pred_check_branch
      %5393 = sbr.rel (0) target = $region77
    $region76: #{multi_head_attention.1} parent=1 // pred_region
      %s5395 = ssub.s32 2048, 2048
      %5396 = vsyncadd [#allocation4], %s5395
      %s5397 = sshll.u32 [#allocation17], 4
      %s5398 = int_to_ptr.vmem [resolvable:$true] %s5397
      %5403 = dma.vmem_to_hbm [thread:$0]  %s5398, 2048, %s9, [#allocation4], 512, 512, 32
    $region77: #{multi_head_attention.1} parent=1 // pred_fallthru
      _
    // Predicated region
    $region78: #{multi_head_attention.1} parent=1 // pred_check
      _
    $region79: #{multi_head_attention.1} parent=1 // pred_check_branch
      %5405 = sbr.rel (0) target = $region81
    $region80: #{multi_head_attention.1} parent=1 // pred_region
      %5406 = dma.done [#allocation4], 2048
    $region81: #{multi_head_attention.1} parent=1 // pred_fallthru
      _
    %5407 = vsyncpa [#allocation3], 1
    %5408 = vsyncpa [#allocation6], 1
    %5409 = vsyncpa [#allocation9], 1
    %5410 = vsyncpa [#allocation12], 1
    %5411 = vsyncpa [#allocation15], 1
    %5412 = vsyncpa [#allocation4], 1

</llo_original>
